<compile_context>
chip_gen: v5e
topology: v5e:2x2
jax: 0.10.0
libtpu: 0.0.40
codegen_flags: <defaults>
</compile_context>

<pallas_src>
import functools

import jax
import jax.numpy as jnp
from jax.experimental import pallas as pl
from jax.experimental.pallas import tpu as pltpu


# ------------------------- Pallas kernel -------------------------

def vae_kernel(x_ref, eps_ref,
               w1_ref, b1_ref,
               wmv_ref, bmv_ref,
               w4_ref, b4_ref,
               w6_ref, b6_ref,
               out_ref, *, code_pad):
    # x arrives as bf16 (padded/repacked path) or f32 (aligned fast path); the astype is a
    # no-op in the former case and keeps MXU inputs bf16 in the latter.
    x = x_ref[...].astype(jnp.bfloat16)                   # (TM, size_p)

    # ---- encoder: fc1 + ReLU (bf16 MXU inputs, f32 accumulation) ----
    h = jnp.dot(x, w1_ref[...], preferred_element_type=jnp.float32) + b1_ref[...]
    h = jnp.maximum(h, 0.0)

    # ---- fused codeM | codeV heads: one MXU pass over the shared LHS ----
    mv = jnp.dot(h.astype(jnp.bfloat16), wmv_ref[...],
                 preferred_element_type=jnp.float32) + bmv_ref[...]
    m = mv[:, :code_pad]                                  # mu
    v = mv[:, code_pad:]                                  # logvar

    # ---- reparameterize: eps * exp(0.5*logvar) + mu (exp on EUP) ----
    code = eps_ref[...] * jnp.exp(0.5 * v) + m

    # ---- decoder: fc4 + ReLU ----
    h2 = jnp.dot(code.astype(jnp.bfloat16), w4_ref[...],
                 preferred_element_type=jnp.float32) + b4_ref[...]
    h2 = jnp.maximum(h2, 0.0)

    # ---- decoder: fc6 + sigmoid ----
    # exp(-logits) can overflow to +inf for very negative logits; 1/(1+inf) -> 0 is the
    # correct sigmoid limit, so this is benign (do not "fix" into a NaN-producing form).
    # pl.reciprocal(approx=True) has ~2^-12 rel. error; use approx=False for exact parity.
    logits = jnp.dot(h2.astype(jnp.bfloat16), w6_ref[...],
                     preferred_element_type=jnp.float32) + b6_ref[...]
    out_ref[...] = pl.reciprocal(1.0 + jnp.exp(-logits), approx=True)


# ------------------------- wrapper (padding, packing, pallas_call) -------------------------

_TM_MAX = 256   # amortizes per-grid-step overhead while keeping double-buffered tiles +
                # single-buffered weights under v5e's 16 MiB default scoped VMEM.


def _round_up(n, m):
    return ((n + m - 1) // m) * m


def _pad_to(a, shape):
    pads = [(0, t - s) for s, t in zip(a.shape, shape)]
    if all(p == (0, 0) for p in pads):
        return a
    return jnp.pad(a, pads)


def _choose_tiling(B):
    rows = _round_up(max(B, 1), 8)
    tm = min(_TM_MAX, rows)
    b_p = _round_up(B, tm)
    # v7x megacore: make sure the "parallel" batch axis has >= 2 grid steps when there is
    # enough work, so both TensorCores get tiles (costs nothing on single-TC v5e/v6e).
    if b_p // tm < 2 and tm > 8:
        tm = _round_up(tm // 2, 8)
        b_p = _round_up(B, tm)
    return tm, b_p


def _pack_params(p, size_p, hid_p, code_p):
    """Zero-pad to lane-dense shapes, fuse codeM/codeV, cast weights to bf16."""
    w1 = _pad_to(p["w1"], (size_p, hid_p))
    b1 = _pad_to(p["b1"], (1, hid_p))
    wmv = jnp.concatenate([_pad_to(p["wm"], (hid_p, code_p)),
                           _pad_to(p["wv"], (hid_p, code_p))], axis=1)
    bmv = jnp.concatenate([_pad_to(p["bm"], (1, code_p)),
                           _pad_to(p["bv"], (1, code_p))], axis=1)
    w4 = _pad_to(p["w4"], (code_p, hid_p))                # padded input rows are zero
    b4 = _pad_to(p["b4"], (1, hid_p))
    w6 = _pad_to(p["w6"], (hid_p, size_p))
    b6 = _pad_to(p["b6"], (1, size_p))
    bf = jnp.bfloat16
    return (w1.astype(bf), b1, wmv.astype(bf), bmv,
            w4.astype(bf), b4, w6.astype(bf), b6)


@jax.jit
def vae_forward(x, eps, params):
    """x: (B, size) f32, eps: (B, code_dim) f32 standard-normal noise."""
    B, size = x.shape
    code_dim = eps.shape[1]
    hidden = params["w1"].shape[1]

    size_p = _round_up(size, 128)
    hid_p = _round_up(hidden, 128)                        # 400 -> 512
    code_p = _round_up(code_dim, 128)                     # 32  -> 128
    tm, b_p = _choose_tiling(B)

    # Skip the pad (a full extra HBM pass) when the shapes are already aligned.  When we
    # must repack x anyway, fold the bf16 cast into the same copy to halve streamed bytes.
    if (B, size) != (b_p, size_p):
        x_in = _pad_to(x.astype(jnp.bfloat16), (b_p, size_p))
    else:
        x_in = x
    eps_in = _pad_to(eps.astype(jnp.float32), (b_p, code_p))   # zero eps in padded code cols

    w1, b1, wmv, bmv, w4, b4, w6, b6 = _pack_params(params, size_p, hid_p, code_p)

    # TODO(synk): for much larger image sizes (bf16 weights > ~1/4 of scoped VMEM, e.g.
    # size ~12k on v7x) the resident-weight strategy should be replaced by K-tiling fc1 and
    # N-tiling fc6 with a VMEM accumulator; not needed at these shapes.
    def weight_spec(a):
        # Full-array block, constant index -> fetched once, VMEM-resident across the whole
        # batch grid.  Single-buffered since the block never changes.
        return pl.BlockSpec(a.shape, lambda i: (0, 0), pipeline_mode=pl.Buffered(1))

    grid = (b_p // tm,)

    flops = 2 * b_p * (size_p * hid_p + hid_p * 2 * code_p + code_p * hid_p + hid_p * size_p)
    transcendentals = b_p * (code_p + 2 * size_p)
    weight_bytes = 2 * (w1.size + wmv.size + w4.size + w6.size) \
        + 4 * (b1.size + bmv.size + b4.size + b6.size)
    bytes_accessed = (x_in.size * x_in.dtype.itemsize
                      + 4 * (eps_in.size + b_p * size_p)
                      + weight_bytes)

    kernel = functools.partial(vae_kernel, code_pad=code_p)

    out_p = pl.pallas_call(
        kernel,
        out_shape=jax.ShapeDtypeStruct((b_p, size_p), jnp.float32),
        grid=grid,
        in_specs=[
            pl.BlockSpec((tm, size_p), lambda i: (i, 0)),      # x tile
            pl.BlockSpec((tm, code_p), lambda i: (i, 0)),      # eps tile
            weight_spec(w1), weight_spec(b1),
            weight_spec(wmv), weight_spec(bmv),
            weight_spec(w4), weight_spec(b4),
            weight_spec(w6), weight_spec(b6),
        ],
        out_specs=pl.BlockSpec((tm, size_p), lambda i: (i, 0)),
        compiler_params=pltpu.CompilerParams(
            dimension_semantics=("parallel",),                 # megacore split on v7x
        ),
        cost_estimate=pl.CostEstimate(flops=int(flops),
                                      transcendentals=int(transcendentals),
                                      bytes_accessed=int(bytes_accessed)),
    )(x_in, eps_in, w1, b1, wmv, bmv, w4, b4, w6, b6)

    if (B, size) != (b_p, size_p):
        out_p = out_p[:B, :size]
    return out_p


# ------------------------- parameter setup (plain JAX glue) -------------------------

def _linear_params(key, fan_in, fan_out):
    """PyTorch nn.Linear default init: U(-1/sqrt(fan_in), 1/sqrt(fan_in)).
    Weight stored as (in, out) so the kernel computes x @ W (== x @ W_pt.T)."""
    kw, kb = jax.random.split(key)
    bound = 1.0 / jnp.sqrt(jnp.float32(fan_in))
    w = jax.random.uniform(kw, (fan_in, fan_out), jnp.float32, -bound, bound)
    b = jax.random.uniform(kb, (1, fan_out), jnp.float32, -bound, bound)
    return w, b


def init_vae_params(key, size, code_dim, hidden=400):
    k1, k2, k3, k4, k5 = jax.random.split(key, 5)
    w1, b1 = _linear_params(k1, size, hidden)        # fc1
    wm, bm = _linear_params(k2, hidden, code_dim)    # codeM
    wv, bv = _linear_params(k3, hidden, code_dim)    # codeV
    w4, b4 = _linear_params(k4, code_dim, hidden)    # fc4
    w6, b6 = _linear_params(k5, hidden, size)        # fc6
    return dict(w1=w1, b1=b1, wm=wm, bm=bm, wv=wv, bv=bv,
                w4=w4, b4=b4, w6=w6, b6=b6)


# pure-JAX f32 reference for correctness check
def vae_ref(x, eps, p):
    h = jnp.maximum(x @ p["w1"] + p["b1"], 0.0)
    m = h @ p["wm"] + p["bm"]
    v = h @ p["wv"] + p["bv"]
    code = eps * jnp.exp(0.5 * v) + m
    h2 = jnp.maximum(code @ p["w4"] + p["b4"], 0.0)
    return jax.nn.sigmoid(h2 @ p["w6"] + p["b6"])


if __name__ == "__main__":
    # small shapes consistent with the module: size=(C,H,W)=(4,16,16) -> 1024, code_dim=32
    B, C, H, W = 2, 4, 16, 16
    code_dim = 32
    size = C * H * W

    key = jax.random.PRNGKey(0)
    k_x, k_eps, k_p = jax.random.split(key, 3)

    x_nchw = jax.random.normal(k_x, (B, C, H, W), jnp.float32)
    x = x_nchw.reshape(B, size)                      # flatten (C,H,W) -> size
    eps = jax.random.normal(k_eps, (B, code_dim), jnp.float32)  # randn_like(std)
    params = init_vae_params(k_p, size, code_dim)

    out = jax.block_until_ready(vae_forward(x, eps, params))
    ref = vae_ref(x, eps, params)

    assert out.shape == (B, size)
    max_err = float(jnp.max(jnp.abs(out - ref)))
    # bf16 weight/activation matmul inputs (f32 accumulation) vs pure-f32 reference
    assert max_err < 2e-2, f"mismatch vs reference: max abs err {max_err}"

    print("KERNEL_OK")
</pallas_src>

<mosaic_0001>
module attributes {stable_mosaic.version = 11 : i64} {
  func.func @vae_kernel(%arg0: i32, %arg1: memref<8x1024xbf16, #tpu.memory_space<vmem>>, %arg2: memref<8x128xf32, #tpu.memory_space<vmem>>, %arg3: memref<1024x512xbf16, #tpu.memory_space<vmem>>, %arg4: memref<1x512xf32, #tpu.memory_space<vmem>>, %arg5: memref<512x256xbf16, #tpu.memory_space<vmem>>, %arg6: memref<1x256xf32, #tpu.memory_space<vmem>>, %arg7: memref<128x512xbf16, #tpu.memory_space<vmem>>, %arg8: memref<1x512xf32, #tpu.memory_space<vmem>>, %arg9: memref<512x1024xbf16, #tpu.memory_space<vmem>>, %arg10: memref<1x1024xf32, #tpu.memory_space<vmem>>, %arg11: memref<8x1024xf32, #tpu.memory_space<vmem>>) attributes {dimension_semantics = [#tpu.dimension_semantics<parallel>], iteration_bounds = array<i64: 1>, scalar_prefetch = 0 : i64, scratch_operands = 0 : i64, tpu.core_type = #tpu.core_type<tc>, window_params = [{transform_indices = @transform_0, window_bounds = array<i64: 8, 1024>}, {transform_indices = @transform_1, window_bounds = array<i64: 8, 128>}, {pipeline_mode = #tpu.pipeline_mode<synchronous>, transform_indices = @transform_2, window_bounds = array<i64: 1024, 512>}, {pipeline_mode = #tpu.pipeline_mode<synchronous>, transform_indices = @transform_3, window_bounds = array<i64: 1, 512>}, {pipeline_mode = #tpu.pipeline_mode<synchronous>, transform_indices = @transform_4, window_bounds = array<i64: 512, 256>}, {pipeline_mode = #tpu.pipeline_mode<synchronous>, transform_indices = @transform_5, window_bounds = array<i64: 1, 256>}, {pipeline_mode = #tpu.pipeline_mode<synchronous>, transform_indices = @transform_6, window_bounds = array<i64: 128, 512>}, {pipeline_mode = #tpu.pipeline_mode<synchronous>, transform_indices = @transform_7, window_bounds = array<i64: 1, 512>}, {pipeline_mode = #tpu.pipeline_mode<synchronous>, transform_indices = @transform_8, window_bounds = array<i64: 512, 1024>}, {pipeline_mode = #tpu.pipeline_mode<synchronous>, transform_indices = @transform_9, window_bounds = array<i64: 1, 1024>}, {transform_indices = @transform_10, window_bounds = array<i64: 8, 1024>}]} {
    %c0 = arith.constant 0 : index
    %c0_0 = arith.constant 0 : index
    %0 = vector.load %arg1[%c0, %c0_0] : memref<8x1024xbf16, #tpu.memory_space<vmem>>, vector<8x1024xbf16>
    %c0_1 = arith.constant 0 : index
    %c0_2 = arith.constant 0 : index
    %1 = vector.load %arg3[%c0_1, %c0_2] : memref<1024x512xbf16, #tpu.memory_space<vmem>>, vector<1024x512xbf16>
    %cst = arith.constant dense<0.000000e+00> : vector<8x512xf32>
    %2 = tpu.matmul %0, %1, %cst {dimension_numbers = #tpu.dot_dimension_numbers<[1], [0], [0], [1], [0, 0, 1, 1], [], []>} : vector<8x1024xbf16>, vector<1024x512xbf16>, vector<8x512xf32> -> vector<8x512xf32>
    %c0_3 = arith.constant 0 : index
    %c0_4 = arith.constant 0 : index
    %3 = vector.load %arg4[%c0_3, %c0_4] : memref<1x512xf32, #tpu.memory_space<vmem>>, vector<1x512xf32>
    %4 = vector.broadcast %3 : vector<1x512xf32> to vector<8x512xf32>
    %5 = arith.addf %2, %4 : vector<8x512xf32>
    %cst_5 = arith.constant 0.000000e+00 : f32
    %6 = vector.broadcast %cst_5 : f32 to vector<8x512xf32>
    %7 = arith.maximumf %5, %6 : vector<8x512xf32>
    %8 = arith.truncf %7 : vector<8x512xf32> to vector<8x512xbf16>
    %c0_6 = arith.constant 0 : index
    %c0_7 = arith.constant 0 : index
    %9 = vector.load %arg5[%c0_6, %c0_7] : memref<512x256xbf16, #tpu.memory_space<vmem>>, vector<512x256xbf16>
    %cst_8 = arith.constant dense<0.000000e+00> : vector<8x256xf32>
    %10 = tpu.matmul %8, %9, %cst_8 {dimension_numbers = #tpu.dot_dimension_numbers<[1], [0], [0], [1], [0, 0, 1, 1], [], []>} : vector<8x512xbf16>, vector<512x256xbf16>, vector<8x256xf32> -> vector<8x256xf32>
    %c0_9 = arith.constant 0 : index
    %c0_10 = arith.constant 0 : index
    %11 = vector.load %arg6[%c0_9, %c0_10] : memref<1x256xf32, #tpu.memory_space<vmem>>, vector<1x256xf32>
    %12 = vector.broadcast %11 : vector<1x256xf32> to vector<8x256xf32>
    %13 = arith.addf %10, %12 : vector<8x256xf32>
    %14 = vector.extract_strided_slice %13 {offsets = [0, 0], sizes = [8, 128], strides = [1, 1]} : vector<8x256xf32> to vector<8x128xf32>
    %15 = vector.extract_strided_slice %13 {offsets = [0, 128], sizes = [8, 128], strides = [1, 1]} : vector<8x256xf32> to vector<8x128xf32>
    %c0_11 = arith.constant 0 : index
    %c0_12 = arith.constant 0 : index
    %16 = vector.load %arg2[%c0_11, %c0_12] : memref<8x128xf32, #tpu.memory_space<vmem>>, vector<8x128xf32>
    %cst_13 = arith.constant 5.000000e-01 : f32
    %17 = vector.broadcast %cst_13 : f32 to vector<8x128xf32>
    %18 = arith.mulf %17, %15 : vector<8x128xf32>
    %19 = math.exp %18 : vector<8x128xf32>
    %20 = arith.mulf %16, %19 : vector<8x128xf32>
    %21 = arith.addf %20, %14 : vector<8x128xf32>
    %22 = arith.truncf %21 : vector<8x128xf32> to vector<8x128xbf16>
    %c0_14 = arith.constant 0 : index
    %c0_15 = arith.constant 0 : index
    %23 = vector.load %arg7[%c0_14, %c0_15] : memref<128x512xbf16, #tpu.memory_space<vmem>>, vector<128x512xbf16>
    %cst_16 = arith.constant dense<0.000000e+00> : vector<8x512xf32>
    %24 = tpu.matmul %22, %23, %cst_16 {dimension_numbers = #tpu.dot_dimension_numbers<[1], [0], [0], [1], [0, 0, 1, 1], [], []>} : vector<8x128xbf16>, vector<128x512xbf16>, vector<8x512xf32> -> vector<8x512xf32>
    %c0_17 = arith.constant 0 : index
    %c0_18 = arith.constant 0 : index
    %25 = vector.load %arg8[%c0_17, %c0_18] : memref<1x512xf32, #tpu.memory_space<vmem>>, vector<1x512xf32>
    %26 = vector.broadcast %25 : vector<1x512xf32> to vector<8x512xf32>
    %27 = arith.addf %24, %26 : vector<8x512xf32>
    %cst_19 = arith.constant 0.000000e+00 : f32
    %28 = vector.broadcast %cst_19 : f32 to vector<8x512xf32>
    %29 = arith.maximumf %27, %28 : vector<8x512xf32>
    %30 = arith.truncf %29 : vector<8x512xf32> to vector<8x512xbf16>
    %c0_20 = arith.constant 0 : index
    %c0_21 = arith.constant 0 : index
    %31 = vector.load %arg9[%c0_20, %c0_21] : memref<512x1024xbf16, #tpu.memory_space<vmem>>, vector<512x1024xbf16>
    %cst_22 = arith.constant dense<0.000000e+00> : vector<8x1024xf32>
    %32 = tpu.matmul %30, %31, %cst_22 {dimension_numbers = #tpu.dot_dimension_numbers<[1], [0], [0], [1], [0, 0, 1, 1], [], []>} : vector<8x512xbf16>, vector<512x1024xbf16>, vector<8x1024xf32> -> vector<8x1024xf32>
    %c0_23 = arith.constant 0 : index
    %c0_24 = arith.constant 0 : index
    %33 = vector.load %arg10[%c0_23, %c0_24] : memref<1x1024xf32, #tpu.memory_space<vmem>>, vector<1x1024xf32>
    %34 = vector.broadcast %33 : vector<1x1024xf32> to vector<8x1024xf32>
    %35 = arith.addf %32, %34 : vector<8x1024xf32>
    %cst_25 = arith.constant 0.000000e+00 : f32
    %36 = vector.broadcast %cst_25 : f32 to vector<8x1024xf32>
    %37 = arith.subf %36, %35 : vector<8x1024xf32>
    %38 = math.exp %37 : vector<8x1024xf32>
    %cst_26 = arith.constant 1.000000e+00 : f32
    %39 = vector.broadcast %cst_26 : f32 to vector<8x1024xf32>
    %40 = arith.addf %39, %38 : vector<8x1024xf32>
    %41 = tpu.reciprocal %40 {approx = true} : vector<8x1024xf32> -> vector<8x1024xf32>
    %c0_27 = arith.constant 0 : index
    %c0_28 = arith.constant 0 : index
    %42 = vector.load %arg11[%c0_27, %c0_28] : memref<8x1024xf32, #tpu.memory_space<vmem>>, vector<8x1024xf32>
    tpu.vector_store %arg11[%c0_27, %c0_28], %41 {strides = array<i32>} : memref<8x1024xf32, #tpu.memory_space<vmem>>, vector<8x1024xf32>,
    return
  }
  func.func @transform_0(%arg0: i32) -> (i32, i32) {
    %c0_i32 = arith.constant 0 : i32
    %c0_i32_0 = arith.constant 0 : i32
    return %arg0, %c0_i32 : i32, i32
  }
  func.func @transform_1(%arg0: i32) -> (i32, i32) {
    %c0_i32 = arith.constant 0 : i32
    %c0_i32_0 = arith.constant 0 : i32
    return %arg0, %c0_i32 : i32, i32
  }
  func.func @transform_2(%arg0: i32) -> (i32, i32) {
    %c0_i32 = arith.constant 0 : i32
    %c0_i32_0 = arith.constant 0 : i32
    %c0_i32_1 = arith.constant 0 : i32
    return %c0_i32, %c0_i32_0 : i32, i32
  }
  func.func @transform_3(%arg0: i32) -> (i32, i32) {
    %c0_i32 = arith.constant 0 : i32
    %c0_i32_0 = arith.constant 0 : i32
    %c0_i32_1 = arith.constant 0 : i32
    return %c0_i32, %c0_i32_0 : i32, i32
  }
  func.func @transform_4(%arg0: i32) -> (i32, i32) {
    %c0_i32 = arith.constant 0 : i32
    %c0_i32_0 = arith.constant 0 : i32
    %c0_i32_1 = arith.constant 0 : i32
    return %c0_i32, %c0_i32_0 : i32, i32
  }
  func.func @transform_5(%arg0: i32) -> (i32, i32) {
    %c0_i32 = arith.constant 0 : i32
    %c0_i32_0 = arith.constant 0 : i32
    %c0_i32_1 = arith.constant 0 : i32
    return %c0_i32, %c0_i32_0 : i32, i32
  }
  func.func @transform_6(%arg0: i32) -> (i32, i32) {
    %c0_i32 = arith.constant 0 : i32
    %c0_i32_0 = arith.constant 0 : i32
    %c0_i32_1 = arith.constant 0 : i32
    return %c0_i32, %c0_i32_0 : i32, i32
  }
  func.func @transform_7(%arg0: i32) -> (i32, i32) {
    %c0_i32 = arith.constant 0 : i32
    %c0_i32_0 = arith.constant 0 : i32
    %c0_i32_1 = arith.constant 0 : i32
    return %c0_i32, %c0_i32_0 : i32, i32
  }
  func.func @transform_8(%arg0: i32) -> (i32, i32) {
    %c0_i32 = arith.constant 0 : i32
    %c0_i32_0 = arith.constant 0 : i32
    %c0_i32_1 = arith.constant 0 : i32
    return %c0_i32, %c0_i32_0 : i32, i32
  }
  func.func @transform_9(%arg0: i32) -> (i32, i32) {
    %c0_i32 = arith.constant 0 : i32
    %c0_i32_0 = arith.constant 0 : i32
    %c0_i32_1 = arith.constant 0 : i32
    return %c0_i32, %c0_i32_0 : i32, i32
  }
  func.func @transform_10(%arg0: i32) -> (i32, i32) {
    %c0_i32 = arith.constant 0 : i32
    %c0_i32_0 = arith.constant 0 : i32
    return %arg0, %c0_i32 : i32, i32
  }
}

</mosaic_0001>

<llo_original>
// kernel: vae_forward.1
$region0: #{vae_forward.1}
  #allocation0 [shape = 'u32[]', space=smem, size = 0x4, offset = 0x4, fixed_abs, tag = 'smem constant byte address 0x4 - core index']
  #allocation1 [shape = 'u32[72,128]{1,0:T(1,128)}', space=vmem, size = 0x9000, scoped, tag = 'internal scratch']
  %s0 = inlined_call_operand.vmem [shape: bf16[8,1024], index: 0, kind: input, shape index: {}]
  %s1 = inlined_call_operand.vmem [shape: f32[8,128], index: 1, kind: input, shape index: {}]
  %s2 = inlined_call_operand.vmem [shape: bf16[1024,512], index: 2, kind: input, shape index: {}]
  %s3 = inlined_call_operand.vmem [shape: f32[1,512], index: 3, kind: input, shape index: {}]
  %s4 = inlined_call_operand.vmem [shape: bf16[512,256], index: 4, kind: input, shape index: {}]
  %s5 = inlined_call_operand.vmem [shape: f32[1,256], index: 5, kind: input, shape index: {}]
  %s6 = inlined_call_operand.vmem [shape: bf16[128,512], index: 6, kind: input, shape index: {}]
  %s7 = inlined_call_operand.vmem [shape: f32[1,512], index: 7, kind: input, shape index: {}]
  %s8 = inlined_call_operand.vmem [shape: bf16[512,1024], index: 8, kind: input, shape index: {}]
  %s9 = inlined_call_operand.vmem [shape: f32[1,1024], index: 9, kind: input, shape index: {}]
  %s10 = inlined_call_operand.vmem [shape: f32[8,1024], index: 10, kind: output, shape index: {}]
  %s11 = sld [smem:[#allocation0]]
  $region50: #{vae_forward.1} parent=0
    _
  %s13 = ssub.s32 1, %s11
  %s14 = scalar_select 0, %s13, %s11
  // Predicated region
  $region2: #{vae_forward.1} parent=0 // pred_check
    _
  $region3: #{vae_forward.1} parent=0 // pred_check_branch
    %16 = sbr.rel (0) target = $region5
  $region4: #{vae_forward.1} parent=0 // pred_region
    _
  $region5: #{vae_forward.1} parent=0 // pred_fallthru
    _
  // Predicated region
  $region6: #{vae_forward.1} parent=0 // pred_check
    _
  $region7: #{vae_forward.1} parent=0 // pred_check_branch
    %18 = sbr.rel (0) target = $region9
  $region8: #{vae_forward.1} parent=0 // pred_region
    _
  $region9: #{vae_forward.1} parent=0 // pred_fallthru
    _
  // Predicated region
  $region10: #{vae_forward.1} parent=0 // pred_check
    _
  $region11: #{vae_forward.1} parent=0 // pred_check_branch
    %20 = sbr.rel (0) target = $region13
  $region12: #{vae_forward.1} parent=0 // pred_region
    _
  $region13: #{vae_forward.1} parent=0 // pred_fallthru
    _
  // Predicated region
  $region14: #{vae_forward.1} parent=0 // pred_check
    _
  $region15: #{vae_forward.1} parent=0 // pred_check_branch
    %22 = sbr.rel (0) target = $region17
  $region16: #{vae_forward.1} parent=0 // pred_region
    _
  $region17: #{vae_forward.1} parent=0 // pred_fallthru
    _
  // Predicated region
  $region18: #{vae_forward.1} parent=0 // pred_check
    _
  $region19: #{vae_forward.1} parent=0 // pred_check_branch
    %24 = sbr.rel (0) target = $region21
  $region20: #{vae_forward.1} parent=0 // pred_region
    _
  $region21: #{vae_forward.1} parent=0 // pred_fallthru
    _
  // Predicated region
  $region22: #{vae_forward.1} parent=0 // pred_check
    _
  $region23: #{vae_forward.1} parent=0 // pred_check_branch
    %26 = sbr.rel (0) target = $region25
  $region24: #{vae_forward.1} parent=0 // pred_region
    _
  $region25: #{vae_forward.1} parent=0 // pred_fallthru
    _
  // Predicated region
  $region26: #{vae_forward.1} parent=0 // pred_check
    _
  $region27: #{vae_forward.1} parent=0 // pred_check_branch
    %28 = sbr.rel (0) target = $region29
  $region28: #{vae_forward.1} parent=0 // pred_region
    _
  $region29: #{vae_forward.1} parent=0 // pred_fallthru
    _
  // Predicated region
  $region30: #{vae_forward.1} parent=0 // pred_check
    _
  $region31: #{vae_forward.1} parent=0 // pred_check_branch
    %30 = sbr.rel (0) target = $region33
  $region32: #{vae_forward.1} parent=0 // pred_region
    _
  $region33: #{vae_forward.1} parent=0 // pred_fallthru
    _
  // Predicated region
  $region34: #{vae_forward.1} parent=0 // pred_check
    _
  $region35: #{vae_forward.1} parent=0 // pred_check_branch
    %32 = sbr.rel (0) target = $region37
  $region36: #{vae_forward.1} parent=0 // pred_region
    _
  $region37: #{vae_forward.1} parent=0 // pred_fallthru
    _
  // Predicated region
  $region38: #{vae_forward.1} parent=0 // pred_check
    _
  $region39: #{vae_forward.1} parent=0 // pred_check_branch
    %34 = sbr.rel (0) target = $region41
  $region40: #{vae_forward.1} parent=0 // pred_region
    _
  $region41: #{vae_forward.1} parent=0 // pred_fallthru
    _
  %v35 = vld [vmem:[%s0] sm:$0xff]
  %v36 = vld [vmem:[%s0 + $0x8] sm:$0xff]
  %v37 = vld [vmem:[%s0 + $0x10] sm:$0xff]
  %v38 = vld [vmem:[%s0 + $0x18] sm:$0xff]
  %v39 = vld [vmem:[%s2] sm:$0xff]
  %v40 = vld [vmem:[%s2 + $0x8] sm:$0xff]
  %v41 = vld [vmem:[%s2 + $0x10] sm:$0xff]
  %v42 = vld [vmem:[%s2 + $0x18] sm:$0xff]
  %v43 = vld [vmem:[%s2 + $0x20] sm:$0xff]
  %v44 = vld [vmem:[%s2 + $0x28] sm:$0xff]
  %v45 = vld [vmem:[%s2 + $0x30] sm:$0xff]
  %v46 = vld [vmem:[%s2 + $0x38] sm:$0xff]
  %v47 = vld [vmem:[%s2 + $0x40] sm:$0xff]
  %v48 = vld [vmem:[%s2 + $0x48] sm:$0xff]
  %v49 = vld [vmem:[%s2 + $0x50] sm:$0xff]
  %v50 = vld [vmem:[%s2 + $0x58] sm:$0xff]
  %v51 = vld [vmem:[%s2 + $0x60] sm:$0xff]
  %v52 = vld [vmem:[%s2 + $0x68] sm:$0xff]
  %v53 = vld [vmem:[%s2 + $0x70] sm:$0xff]
  %v54 = vld [vmem:[%s2 + $0x78] sm:$0xff]
  %v55 = vld [vmem:[%s2 + $0x80] sm:$0xff]
  %v56 = vld [vmem:[%s2 + $0x88] sm:$0xff]
  %v57 = vld [vmem:[%s2 + $0x90] sm:$0xff]
  %v58 = vld [vmem:[%s2 + $0x98] sm:$0xff]
  %v59 = vld [vmem:[%s2 + $0xa0] sm:$0xff]
  %v60 = vld [vmem:[%s2 + $0xa8] sm:$0xff]
  %v61 = vld [vmem:[%s2 + $0xb0] sm:$0xff]
  %v62 = vld [vmem:[%s2 + $0xb8] sm:$0xff]
  %v63 = vld [vmem:[%s2 + $0xc0] sm:$0xff]
  %v64 = vld [vmem:[%s2 + $0xc8] sm:$0xff]
  %v65 = vld [vmem:[%s2 + $0xd0] sm:$0xff]
  %v66 = vld [vmem:[%s2 + $0xd8] sm:$0xff]
  %v67 = vld [vmem:[%s2 + $0xe0] sm:$0xff]
  %v68 = vld [vmem:[%s2 + $0xe8] sm:$0xff]
  %v69 = vld [vmem:[%s2 + $0xf0] sm:$0xff]
  %v70 = vld [vmem:[%s2 + $0xf8] sm:$0xff]
  %v71 = vld [vmem:[%s2 + $0x100] sm:$0xff]
  %v72 = vld [vmem:[%s2 + $0x108] sm:$0xff]
  %v73 = vld [vmem:[%s2 + $0x110] sm:$0xff]
  %v74 = vld [vmem:[%s2 + $0x118] sm:$0xff]
  %v75 = vld [vmem:[%s2 + $0x120] sm:$0xff]
  %v76 = vld [vmem:[%s2 + $0x128] sm:$0xff]
  %v77 = vld [vmem:[%s2 + $0x130] sm:$0xff]
  %v78 = vld [vmem:[%s2 + $0x138] sm:$0xff]
  %v79 = vld [vmem:[%s2 + $0x140] sm:$0xff]
  %v80 = vld [vmem:[%s2 + $0x148] sm:$0xff]
  %v81 = vld [vmem:[%s2 + $0x150] sm:$0xff]
  %v82 = vld [vmem:[%s2 + $0x158] sm:$0xff]
  %v83 = vld [vmem:[%s2 + $0x160] sm:$0xff]
  %v84 = vld [vmem:[%s2 + $0x168] sm:$0xff]
  %v85 = vld [vmem:[%s2 + $0x170] sm:$0xff]
  %v86 = vld [vmem:[%s2 + $0x178] sm:$0xff]
  %v87 = vld [vmem:[%s2 + $0x180] sm:$0xff]
  %v88 = vld [vmem:[%s2 + $0x188] sm:$0xff]
  %v89 = vld [vmem:[%s2 + $0x190] sm:$0xff]
  %v90 = vld [vmem:[%s2 + $0x198] sm:$0xff]
  %v91 = vld [vmem:[%s2 + $0x1a0] sm:$0xff]
  %v92 = vld [vmem:[%s2 + $0x1a8] sm:$0xff]
  %v93 = vld [vmem:[%s2 + $0x1b0] sm:$0xff]
  %v94 = vld [vmem:[%s2 + $0x1b8] sm:$0xff]
  %v95 = vld [vmem:[%s2 + $0x1c0] sm:$0xff]
  %v96 = vld [vmem:[%s2 + $0x1c8] sm:$0xff]
  %v97 = vld [vmem:[%s2 + $0x1d0] sm:$0xff]
  %v98 = vld [vmem:[%s2 + $0x1d8] sm:$0xff]
  %v99 = vld [vmem:[%s2 + $0x1e0] sm:$0xff]
  %v100 = vld [vmem:[%s2 + $0x1e8] sm:$0xff]
  %v101 = vld [vmem:[%s2 + $0x1f0] sm:$0xff]
  %v102 = vld [vmem:[%s2 + $0x1f8] sm:$0xff]
  %v103 = vld [vmem:[%s2 + $0x200] sm:$0xff]
  %v104 = vld [vmem:[%s2 + $0x208] sm:$0xff]
  %v105 = vld [vmem:[%s2 + $0x210] sm:$0xff]
  %v106 = vld [vmem:[%s2 + $0x218] sm:$0xff]
  %v107 = vld [vmem:[%s2 + $0x220] sm:$0xff]
  %v108 = vld [vmem:[%s2 + $0x228] sm:$0xff]
  %v109 = vld [vmem:[%s2 + $0x230] sm:$0xff]
  %v110 = vld [vmem:[%s2 + $0x238] sm:$0xff]
  %v111 = vld [vmem:[%s2 + $0x240] sm:$0xff]
  %v112 = vld [vmem:[%s2 + $0x248] sm:$0xff]
  %v113 = vld [vmem:[%s2 + $0x250] sm:$0xff]
  %v114 = vld [vmem:[%s2 + $0x258] sm:$0xff]
  %v115 = vld [vmem:[%s2 + $0x260] sm:$0xff]
  %v116 = vld [vmem:[%s2 + $0x268] sm:$0xff]
  %v117 = vld [vmem:[%s2 + $0x270] sm:$0xff]
  %v118 = vld [vmem:[%s2 + $0x278] sm:$0xff]
  %v119 = vld [vmem:[%s2 + $0x280] sm:$0xff]
  %v120 = vld [vmem:[%s2 + $0x288] sm:$0xff]
  %v121 = vld [vmem:[%s2 + $0x290] sm:$0xff]
  %v122 = vld [vmem:[%s2 + $0x298] sm:$0xff]
  %v123 = vld [vmem:[%s2 + $0x2a0] sm:$0xff]
  %v124 = vld [vmem:[%s2 + $0x2a8] sm:$0xff]
  %v125 = vld [vmem:[%s2 + $0x2b0] sm:$0xff]
  %v126 = vld [vmem:[%s2 + $0x2b8] sm:$0xff]
  %v127 = vld [vmem:[%s2 + $0x2c0] sm:$0xff]
  %v128 = vld [vmem:[%s2 + $0x2c8] sm:$0xff]
  %v129 = vld [vmem:[%s2 + $0x2d0] sm:$0xff]
  %v130 = vld [vmem:[%s2 + $0x2d8] sm:$0xff]
  %v131 = vld [vmem:[%s2 + $0x2e0] sm:$0xff]
  %v132 = vld [vmem:[%s2 + $0x2e8] sm:$0xff]
  %v133 = vld [vmem:[%s2 + $0x2f0] sm:$0xff]
  %v134 = vld [vmem:[%s2 + $0x2f8] sm:$0xff]
  %v135 = vld [vmem:[%s2 + $0x300] sm:$0xff]
  %v136 = vld [vmem:[%s2 + $0x308] sm:$0xff]
  %v137 = vld [vmem:[%s2 + $0x310] sm:$0xff]
  %v138 = vld [vmem:[%s2 + $0x318] sm:$0xff]
  %v139 = vld [vmem:[%s2 + $0x320] sm:$0xff]
  %v140 = vld [vmem:[%s2 + $0x328] sm:$0xff]
  %v141 = vld [vmem:[%s2 + $0x330] sm:$0xff]
  %v142 = vld [vmem:[%s2 + $0x338] sm:$0xff]
  %v143 = vld [vmem:[%s2 + $0x340] sm:$0xff]
  %v144 = vld [vmem:[%s2 + $0x348] sm:$0xff]
  %v145 = vld [vmem:[%s2 + $0x350] sm:$0xff]
  %v146 = vld [vmem:[%s2 + $0x358] sm:$0xff]
  %v147 = vld [vmem:[%s2 + $0x360] sm:$0xff]
  %v148 = vld [vmem:[%s2 + $0x368] sm:$0xff]
  %v149 = vld [vmem:[%s2 + $0x370] sm:$0xff]
  %v150 = vld [vmem:[%s2 + $0x378] sm:$0xff]
  %v151 = vld [vmem:[%s2 + $0x380] sm:$0xff]
  %v152 = vld [vmem:[%s2 + $0x388] sm:$0xff]
  %v153 = vld [vmem:[%s2 + $0x390] sm:$0xff]
  %v154 = vld [vmem:[%s2 + $0x398] sm:$0xff]
  %v155 = vld [vmem:[%s2 + $0x3a0] sm:$0xff]
  %v156 = vld [vmem:[%s2 + $0x3a8] sm:$0xff]
  %v157 = vld [vmem:[%s2 + $0x3b0] sm:$0xff]
  %v158 = vld [vmem:[%s2 + $0x3b8] sm:$0xff]
  %v159 = vld [vmem:[%s2 + $0x3c0] sm:$0xff]
  %v160 = vld [vmem:[%s2 + $0x3c8] sm:$0xff]
  %v161 = vld [vmem:[%s2 + $0x3d0] sm:$0xff]
  %v162 = vld [vmem:[%s2 + $0x3d8] sm:$0xff]
  %v163 = vld [vmem:[%s2 + $0x3e0] sm:$0xff]
  %v164 = vld [vmem:[%s2 + $0x3e8] sm:$0xff]
  %v165 = vld [vmem:[%s2 + $0x3f0] sm:$0xff]
  %v166 = vld [vmem:[%s2 + $0x3f8] sm:$0xff]
  %v167 = vld [vmem:[%s2 + $0x400] sm:$0xff]
  %v168 = vld [vmem:[%s2 + $0x408] sm:$0xff]
  %v169 = vld [vmem:[%s2 + $0x410] sm:$0xff]
  %v170 = vld [vmem:[%s2 + $0x418] sm:$0xff]
  %v171 = vld [vmem:[%s2 + $0x420] sm:$0xff]
  %v172 = vld [vmem:[%s2 + $0x428] sm:$0xff]
  %v173 = vld [vmem:[%s2 + $0x430] sm:$0xff]
  %v174 = vld [vmem:[%s2 + $0x438] sm:$0xff]
  %v175 = vld [vmem:[%s2 + $0x440] sm:$0xff]
  %v176 = vld [vmem:[%s2 + $0x448] sm:$0xff]
  %v177 = vld [vmem:[%s2 + $0x450] sm:$0xff]
  %v178 = vld [vmem:[%s2 + $0x458] sm:$0xff]
  %v179 = vld [vmem:[%s2 + $0x460] sm:$0xff]
  %v180 = vld [vmem:[%s2 + $0x468] sm:$0xff]
  %v181 = vld [vmem:[%s2 + $0x470] sm:$0xff]
  %v182 = vld [vmem:[%s2 + $0x478] sm:$0xff]
  %v183 = vld [vmem:[%s2 + $0x480] sm:$0xff]
  %v184 = vld [vmem:[%s2 + $0x488] sm:$0xff]
  %v185 = vld [vmem:[%s2 + $0x490] sm:$0xff]
  %v186 = vld [vmem:[%s2 + $0x498] sm:$0xff]
  %v187 = vld [vmem:[%s2 + $0x4a0] sm:$0xff]
  %v188 = vld [vmem:[%s2 + $0x4a8] sm:$0xff]
  %v189 = vld [vmem:[%s2 + $0x4b0] sm:$0xff]
  %v190 = vld [vmem:[%s2 + $0x4b8] sm:$0xff]
  %v191 = vld [vmem:[%s2 + $0x4c0] sm:$0xff]
  %v192 = vld [vmem:[%s2 + $0x4c8] sm:$0xff]
  %v193 = vld [vmem:[%s2 + $0x4d0] sm:$0xff]
  %v194 = vld [vmem:[%s2 + $0x4d8] sm:$0xff]
  %v195 = vld [vmem:[%s2 + $0x4e0] sm:$0xff]
  %v196 = vld [vmem:[%s2 + $0x4e8] sm:$0xff]
  %v197 = vld [vmem:[%s2 + $0x4f0] sm:$0xff]
  %v198 = vld [vmem:[%s2 + $0x4f8] sm:$0xff]
  %v199 = vld [vmem:[%s2 + $0x500] sm:$0xff]
  %v200 = vld [vmem:[%s2 + $0x508] sm:$0xff]
  %v201 = vld [vmem:[%s2 + $0x510] sm:$0xff]
  %v202 = vld [vmem:[%s2 + $0x518] sm:$0xff]
  %v203 = vld [vmem:[%s2 + $0x520] sm:$0xff]
  %v204 = vld [vmem:[%s2 + $0x528] sm:$0xff]
  %v205 = vld [vmem:[%s2 + $0x530] sm:$0xff]
  %v206 = vld [vmem:[%s2 + $0x538] sm:$0xff]
  %v207 = vld [vmem:[%s2 + $0x540] sm:$0xff]
  %v208 = vld [vmem:[%s2 + $0x548] sm:$0xff]
  %v209 = vld [vmem:[%s2 + $0x550] sm:$0xff]
  %v210 = vld [vmem:[%s2 + $0x558] sm:$0xff]
  %v211 = vld [vmem:[%s2 + $0x560] sm:$0xff]
  %v212 = vld [vmem:[%s2 + $0x568] sm:$0xff]
  %v213 = vld [vmem:[%s2 + $0x570] sm:$0xff]
  %v214 = vld [vmem:[%s2 + $0x578] sm:$0xff]
  %v215 = vld [vmem:[%s2 + $0x580] sm:$0xff]
  %v216 = vld [vmem:[%s2 + $0x588] sm:$0xff]
  %v217 = vld [vmem:[%s2 + $0x590] sm:$0xff]
  %v218 = vld [vmem:[%s2 + $0x598] sm:$0xff]
  %v219 = vld [vmem:[%s2 + $0x5a0] sm:$0xff]
  %v220 = vld [vmem:[%s2 + $0x5a8] sm:$0xff]
  %v221 = vld [vmem:[%s2 + $0x5b0] sm:$0xff]
  %v222 = vld [vmem:[%s2 + $0x5b8] sm:$0xff]
  %v223 = vld [vmem:[%s2 + $0x5c0] sm:$0xff]
  %v224 = vld [vmem:[%s2 + $0x5c8] sm:$0xff]
  %v225 = vld [vmem:[%s2 + $0x5d0] sm:$0xff]
  %v226 = vld [vmem:[%s2 + $0x5d8] sm:$0xff]
  %v227 = vld [vmem:[%s2 + $0x5e0] sm:$0xff]
  %v228 = vld [vmem:[%s2 + $0x5e8] sm:$0xff]
  %v229 = vld [vmem:[%s2 + $0x5f0] sm:$0xff]
  %v230 = vld [vmem:[%s2 + $0x5f8] sm:$0xff]
  %v231 = vld [vmem:[%s2 + $0x600] sm:$0xff]
  %v232 = vld [vmem:[%s2 + $0x608] sm:$0xff]
  %v233 = vld [vmem:[%s2 + $0x610] sm:$0xff]
  %v234 = vld [vmem:[%s2 + $0x618] sm:$0xff]
  %v235 = vld [vmem:[%s2 + $0x620] sm:$0xff]
  %v236 = vld [vmem:[%s2 + $0x628] sm:$0xff]
  %v237 = vld [vmem:[%s2 + $0x630] sm:$0xff]
  %v238 = vld [vmem:[%s2 + $0x638] sm:$0xff]
  %v239 = vld [vmem:[%s2 + $0x640] sm:$0xff]
  %v240 = vld [vmem:[%s2 + $0x648] sm:$0xff]
  %v241 = vld [vmem:[%s2 + $0x650] sm:$0xff]
  %v242 = vld [vmem:[%s2 + $0x658] sm:$0xff]
  %v243 = vld [vmem:[%s2 + $0x660] sm:$0xff]
  %v244 = vld [vmem:[%s2 + $0x668] sm:$0xff]
  %v245 = vld [vmem:[%s2 + $0x670] sm:$0xff]
  %v246 = vld [vmem:[%s2 + $0x678] sm:$0xff]
  %v247 = vld [vmem:[%s2 + $0x680] sm:$0xff]
  %v248 = vld [vmem:[%s2 + $0x688] sm:$0xff]
  %v249 = vld [vmem:[%s2 + $0x690] sm:$0xff]
  %v250 = vld [vmem:[%s2 + $0x698] sm:$0xff]
  %v251 = vld [vmem:[%s2 + $0x6a0] sm:$0xff]
  %v252 = vld [vmem:[%s2 + $0x6a8] sm:$0xff]
  %v253 = vld [vmem:[%s2 + $0x6b0] sm:$0xff]
  %v254 = vld [vmem:[%s2 + $0x6b8] sm:$0xff]
  %v255 = vld [vmem:[%s2 + $0x6c0] sm:$0xff]
  %v256 = vld [vmem:[%s2 + $0x6c8] sm:$0xff]
  %v257 = vld [vmem:[%s2 + $0x6d0] sm:$0xff]
  %v258 = vld [vmem:[%s2 + $0x6d8] sm:$0xff]
  %v259 = vld [vmem:[%s2 + $0x6e0] sm:$0xff]
  %v260 = vld [vmem:[%s2 + $0x6e8] sm:$0xff]
  %v261 = vld [vmem:[%s2 + $0x6f0] sm:$0xff]
  %v262 = vld [vmem:[%s2 + $0x6f8] sm:$0xff]
  %v263 = vld [vmem:[%s2 + $0x700] sm:$0xff]
  %v264 = vld [vmem:[%s2 + $0x708] sm:$0xff]
  %v265 = vld [vmem:[%s2 + $0x710] sm:$0xff]
  %v266 = vld [vmem:[%s2 + $0x718] sm:$0xff]
  %v267 = vld [vmem:[%s2 + $0x720] sm:$0xff]
  %v268 = vld [vmem:[%s2 + $0x728] sm:$0xff]
  %v269 = vld [vmem:[%s2 + $0x730] sm:$0xff]
  %v270 = vld [vmem:[%s2 + $0x738] sm:$0xff]
  %v271 = vld [vmem:[%s2 + $0x740] sm:$0xff]
  %v272 = vld [vmem:[%s2 + $0x748] sm:$0xff]
  %v273 = vld [vmem:[%s2 + $0x750] sm:$0xff]
  %v274 = vld [vmem:[%s2 + $0x758] sm:$0xff]
  %v275 = vld [vmem:[%s2 + $0x760] sm:$0xff]
  %v276 = vld [vmem:[%s2 + $0x768] sm:$0xff]
  %v277 = vld [vmem:[%s2 + $0x770] sm:$0xff]
  %v278 = vld [vmem:[%s2 + $0x778] sm:$0xff]
  %v279 = vld [vmem:[%s2 + $0x780] sm:$0xff]
  %v280 = vld [vmem:[%s2 + $0x788] sm:$0xff]
  %v281 = vld [vmem:[%s2 + $0x790] sm:$0xff]
  %v282 = vld [vmem:[%s2 + $0x798] sm:$0xff]
  %v283 = vld [vmem:[%s2 + $0x7a0] sm:$0xff]
  %v284 = vld [vmem:[%s2 + $0x7a8] sm:$0xff]
  %v285 = vld [vmem:[%s2 + $0x7b0] sm:$0xff]
  %v286 = vld [vmem:[%s2 + $0x7b8] sm:$0xff]
  %v287 = vld [vmem:[%s2 + $0x7c0] sm:$0xff]
  %v288 = vld [vmem:[%s2 + $0x7c8] sm:$0xff]
  %v289 = vld [vmem:[%s2 + $0x7d0] sm:$0xff]
  %v290 = vld [vmem:[%s2 + $0x7d8] sm:$0xff]
  %v291 = vld [vmem:[%s2 + $0x7e0] sm:$0xff]
  %v292 = vld [vmem:[%s2 + $0x7e8] sm:$0xff]
  %v293 = vld [vmem:[%s2 + $0x7f0] sm:$0xff]
  %v294 = vld [vmem:[%s2 + $0x7f8] sm:$0xff]
  %v295 = vld [vmem:[%s3] sm:$0xf]
  %v297 = vperm.slane %v295, 0
  %v298 = vperm.slane %v295, 1
  %v299 = vperm.slane %v295, 2
  %v300 = vperm.slane %v295, 3
  %v309 = vunpack.c.l.b16 %v35
  %v310 = vunpack.c.h.b16 %v35
  %v311 = vunpack.c.l.b16 %v36
  %v312 = vunpack.c.h.b16 %v36
  %v313 = vunpack.c.l.b16 %v37
  %v314 = vunpack.c.h.b16 %v37
  %v315 = vunpack.c.l.b16 %v38
  %v316 = vunpack.c.h.b16 %v38
  %v317 = vpack.c.b16 %v309, %v309
  %v318 = vpack.c.b16 %v310, %v310
  %v319 = vpack.c.b16 %v311, %v311
  %v320 = vpack.c.b16 %v312, %v312
  %v321 = vpack.c.b16 %v313, %v313
  %v322 = vpack.c.b16 %v314, %v314
  %v323 = vpack.c.b16 %v315, %v315
  %v324 = vpack.c.b16 %v316, %v316
  %v589 = vunpack.c.l.b16 %v39
  %v590 = vunpack.c.h.b16 %v39
  %v591 = vunpack.c.l.b16 %v40
  %v592 = vunpack.c.h.b16 %v40
  %v593 = vunpack.c.l.b16 %v41
  %v594 = vunpack.c.h.b16 %v41
  %v595 = vunpack.c.l.b16 %v42
  %v596 = vunpack.c.h.b16 %v42
  %v597 = vunpack.c.l.b16 %v43
  %v598 = vunpack.c.h.b16 %v43
  %v599 = vunpack.c.l.b16 %v44
  %v600 = vunpack.c.h.b16 %v44
  %v601 = vunpack.c.l.b16 %v45
  %v602 = vunpack.c.h.b16 %v45
  %v603 = vunpack.c.l.b16 %v46
  %v604 = vunpack.c.h.b16 %v46
  %v605 = vunpack.c.l.b16 %v47
  %v606 = vunpack.c.h.b16 %v47
  %v607 = vunpack.c.l.b16 %v48
  %v608 = vunpack.c.h.b16 %v48
  %v609 = vunpack.c.l.b16 %v49
  %v610 = vunpack.c.h.b16 %v49
  %v611 = vunpack.c.l.b16 %v50
  %v612 = vunpack.c.h.b16 %v50
  %v613 = vunpack.c.l.b16 %v51
  %v614 = vunpack.c.h.b16 %v51
  %v615 = vunpack.c.l.b16 %v52
  %v616 = vunpack.c.h.b16 %v52
  %v617 = vunpack.c.l.b16 %v53
  %v618 = vunpack.c.h.b16 %v53
  %v619 = vunpack.c.l.b16 %v54
  %v620 = vunpack.c.h.b16 %v54
  %v621 = vunpack.c.l.b16 %v55
  %v622 = vunpack.c.h.b16 %v55
  %v623 = vunpack.c.l.b16 %v56
  %v624 = vunpack.c.h.b16 %v56
  %v625 = vunpack.c.l.b16 %v57
  %v626 = vunpack.c.h.b16 %v57
  %v627 = vunpack.c.l.b16 %v58
  %v628 = vunpack.c.h.b16 %v58
  %v629 = vunpack.c.l.b16 %v59
  %v630 = vunpack.c.h.b16 %v59
  %v631 = vunpack.c.l.b16 %v60
  %v632 = vunpack.c.h.b16 %v60
  %v633 = vunpack.c.l.b16 %v61
  %v634 = vunpack.c.h.b16 %v61
  %v635 = vunpack.c.l.b16 %v62
  %v636 = vunpack.c.h.b16 %v62
  %v637 = vunpack.c.l.b16 %v63
  %v638 = vunpack.c.h.b16 %v63
  %v639 = vunpack.c.l.b16 %v64
  %v640 = vunpack.c.h.b16 %v64
  %v641 = vunpack.c.l.b16 %v65
  %v642 = vunpack.c.h.b16 %v65
  %v643 = vunpack.c.l.b16 %v66
  %v644 = vunpack.c.h.b16 %v66
  %v645 = vunpack.c.l.b16 %v67
  %v646 = vunpack.c.h.b16 %v67
  %v647 = vunpack.c.l.b16 %v68
  %v648 = vunpack.c.h.b16 %v68
  %v649 = vunpack.c.l.b16 %v69
  %v650 = vunpack.c.h.b16 %v69
  %v651 = vunpack.c.l.b16 %v70
  %v652 = vunpack.c.h.b16 %v70
  %v653 = vunpack.c.l.b16 %v71
  %v654 = vunpack.c.h.b16 %v71
  %v655 = vunpack.c.l.b16 %v72
  %v656 = vunpack.c.h.b16 %v72
  %v657 = vunpack.c.l.b16 %v73
  %v658 = vunpack.c.h.b16 %v73
  %v659 = vunpack.c.l.b16 %v74
  %v660 = vunpack.c.h.b16 %v74
  %v661 = vunpack.c.l.b16 %v75
  %v662 = vunpack.c.h.b16 %v75
  %v663 = vunpack.c.l.b16 %v76
  %v664 = vunpack.c.h.b16 %v76
  %v665 = vunpack.c.l.b16 %v77
  %v666 = vunpack.c.h.b16 %v77
  %v667 = vunpack.c.l.b16 %v78
  %v668 = vunpack.c.h.b16 %v78
  %v669 = vunpack.c.l.b16 %v79
  %v670 = vunpack.c.h.b16 %v79
  %v671 = vunpack.c.l.b16 %v80
  %v672 = vunpack.c.h.b16 %v80
  %v673 = vunpack.c.l.b16 %v81
  %v674 = vunpack.c.h.b16 %v81
  %v675 = vunpack.c.l.b16 %v82
  %v676 = vunpack.c.h.b16 %v82
  %v677 = vunpack.c.l.b16 %v83
  %v678 = vunpack.c.h.b16 %v83
  %v679 = vunpack.c.l.b16 %v84
  %v680 = vunpack.c.h.b16 %v84
  %v681 = vunpack.c.l.b16 %v85
  %v682 = vunpack.c.h.b16 %v85
  %v683 = vunpack.c.l.b16 %v86
  %v684 = vunpack.c.h.b16 %v86
  %v685 = vunpack.c.l.b16 %v87
  %v686 = vunpack.c.h.b16 %v87
  %v687 = vunpack.c.l.b16 %v88
  %v688 = vunpack.c.h.b16 %v88
  %v689 = vunpack.c.l.b16 %v89
  %v690 = vunpack.c.h.b16 %v89
  %v691 = vunpack.c.l.b16 %v90
  %v692 = vunpack.c.h.b16 %v90
  %v693 = vunpack.c.l.b16 %v91
  %v694 = vunpack.c.h.b16 %v91
  %v695 = vunpack.c.l.b16 %v92
  %v696 = vunpack.c.h.b16 %v92
  %v697 = vunpack.c.l.b16 %v93
  %v698 = vunpack.c.h.b16 %v93
  %v699 = vunpack.c.l.b16 %v94
  %v700 = vunpack.c.h.b16 %v94
  %v701 = vunpack.c.l.b16 %v95
  %v702 = vunpack.c.h.b16 %v95
  %v703 = vunpack.c.l.b16 %v96
  %v704 = vunpack.c.h.b16 %v96
  %v705 = vunpack.c.l.b16 %v97
  %v706 = vunpack.c.h.b16 %v97
  %v707 = vunpack.c.l.b16 %v98
  %v708 = vunpack.c.h.b16 %v98
  %v709 = vunpack.c.l.b16 %v99
  %v710 = vunpack.c.h.b16 %v99
  %v711 = vunpack.c.l.b16 %v100
  %v712 = vunpack.c.h.b16 %v100
  %v713 = vunpack.c.l.b16 %v101
  %v714 = vunpack.c.h.b16 %v101
  %v715 = vunpack.c.l.b16 %v102
  %v716 = vunpack.c.h.b16 %v102
  %v717 = vunpack.c.l.b16 %v103
  %v718 = vunpack.c.h.b16 %v103
  %v719 = vunpack.c.l.b16 %v104
  %v720 = vunpack.c.h.b16 %v104
  %v721 = vunpack.c.l.b16 %v105
  %v722 = vunpack.c.h.b16 %v105
  %v723 = vunpack.c.l.b16 %v106
  %v724 = vunpack.c.h.b16 %v106
  %v725 = vunpack.c.l.b16 %v107
  %v726 = vunpack.c.h.b16 %v107
  %v727 = vunpack.c.l.b16 %v108
  %v728 = vunpack.c.h.b16 %v108
  %v729 = vunpack.c.l.b16 %v109
  %v730 = vunpack.c.h.b16 %v109
  %v731 = vunpack.c.l.b16 %v110
  %v732 = vunpack.c.h.b16 %v110
  %v733 = vunpack.c.l.b16 %v111
  %v734 = vunpack.c.h.b16 %v111
  %v735 = vunpack.c.l.b16 %v112
  %v736 = vunpack.c.h.b16 %v112
  %v737 = vunpack.c.l.b16 %v113
  %v738 = vunpack.c.h.b16 %v113
  %v739 = vunpack.c.l.b16 %v114
  %v740 = vunpack.c.h.b16 %v114
  %v741 = vunpack.c.l.b16 %v115
  %v742 = vunpack.c.h.b16 %v115
  %v743 = vunpack.c.l.b16 %v116
  %v744 = vunpack.c.h.b16 %v116
  %v745 = vunpack.c.l.b16 %v117
  %v746 = vunpack.c.h.b16 %v117
  %v747 = vunpack.c.l.b16 %v118
  %v748 = vunpack.c.h.b16 %v118
  %v749 = vunpack.c.l.b16 %v119
  %v750 = vunpack.c.h.b16 %v119
  %v751 = vunpack.c.l.b16 %v120
  %v752 = vunpack.c.h.b16 %v120
  %v753 = vunpack.c.l.b16 %v121
  %v754 = vunpack.c.h.b16 %v121
  %v755 = vunpack.c.l.b16 %v122
  %v756 = vunpack.c.h.b16 %v122
  %v757 = vunpack.c.l.b16 %v123
  %v758 = vunpack.c.h.b16 %v123
  %v759 = vunpack.c.l.b16 %v124
  %v760 = vunpack.c.h.b16 %v124
  %v761 = vunpack.c.l.b16 %v125
  %v762 = vunpack.c.h.b16 %v125
  %v763 = vunpack.c.l.b16 %v126
  %v764 = vunpack.c.h.b16 %v126
  %v765 = vunpack.c.l.b16 %v127
  %v766 = vunpack.c.h.b16 %v127
  %v767 = vunpack.c.l.b16 %v128
  %v768 = vunpack.c.h.b16 %v128
  %v769 = vunpack.c.l.b16 %v129
  %v770 = vunpack.c.h.b16 %v129
  %v771 = vunpack.c.l.b16 %v130
  %v772 = vunpack.c.h.b16 %v130
  %v773 = vunpack.c.l.b16 %v131
  %v774 = vunpack.c.h.b16 %v131
  %v775 = vunpack.c.l.b16 %v132
  %v776 = vunpack.c.h.b16 %v132
  %v777 = vunpack.c.l.b16 %v133
  %v778 = vunpack.c.h.b16 %v133
  %v779 = vunpack.c.l.b16 %v134
  %v780 = vunpack.c.h.b16 %v134
  %v781 = vunpack.c.l.b16 %v135
  %v782 = vunpack.c.h.b16 %v135
  %v783 = vunpack.c.l.b16 %v136
  %v784 = vunpack.c.h.b16 %v136
  %v785 = vunpack.c.l.b16 %v137
  %v786 = vunpack.c.h.b16 %v137
  %v787 = vunpack.c.l.b16 %v138
  %v788 = vunpack.c.h.b16 %v138
  %v789 = vunpack.c.l.b16 %v139
  %v790 = vunpack.c.h.b16 %v139
  %v791 = vunpack.c.l.b16 %v140
  %v792 = vunpack.c.h.b16 %v140
  %v793 = vunpack.c.l.b16 %v141
  %v794 = vunpack.c.h.b16 %v141
  %v795 = vunpack.c.l.b16 %v142
  %v796 = vunpack.c.h.b16 %v142
  %v797 = vunpack.c.l.b16 %v143
  %v798 = vunpack.c.h.b16 %v143
  %v799 = vunpack.c.l.b16 %v144
  %v800 = vunpack.c.h.b16 %v144
  %v801 = vunpack.c.l.b16 %v145
  %v802 = vunpack.c.h.b16 %v145
  %v803 = vunpack.c.l.b16 %v146
  %v804 = vunpack.c.h.b16 %v146
  %v805 = vunpack.c.l.b16 %v147
  %v806 = vunpack.c.h.b16 %v147
  %v807 = vunpack.c.l.b16 %v148
  %v808 = vunpack.c.h.b16 %v148
  %v809 = vunpack.c.l.b16 %v149
  %v810 = vunpack.c.h.b16 %v149
  %v811 = vunpack.c.l.b16 %v150
  %v812 = vunpack.c.h.b16 %v150
  %v813 = vunpack.c.l.b16 %v151
  %v814 = vunpack.c.h.b16 %v151
  %v815 = vunpack.c.l.b16 %v152
  %v816 = vunpack.c.h.b16 %v152
  %v817 = vunpack.c.l.b16 %v153
  %v818 = vunpack.c.h.b16 %v153
  %v819 = vunpack.c.l.b16 %v154
  %v820 = vunpack.c.h.b16 %v154
  %v821 = vunpack.c.l.b16 %v155
  %v822 = vunpack.c.h.b16 %v155
  %v823 = vunpack.c.l.b16 %v156
  %v824 = vunpack.c.h.b16 %v156
  %v825 = vunpack.c.l.b16 %v157
  %v826 = vunpack.c.h.b16 %v157
  %v827 = vunpack.c.l.b16 %v158
  %v828 = vunpack.c.h.b16 %v158
  %v829 = vunpack.c.l.b16 %v159
  %v830 = vunpack.c.h.b16 %v159
  %v831 = vunpack.c.l.b16 %v160
  %v832 = vunpack.c.h.b16 %v160
  %v833 = vunpack.c.l.b16 %v161
  %v834 = vunpack.c.h.b16 %v161
  %v835 = vunpack.c.l.b16 %v162
  %v836 = vunpack.c.h.b16 %v162
  %v837 = vunpack.c.l.b16 %v163
  %v838 = vunpack.c.h.b16 %v163
  %v839 = vunpack.c.l.b16 %v164
  %v840 = vunpack.c.h.b16 %v164
  %v841 = vunpack.c.l.b16 %v165
  %v842 = vunpack.c.h.b16 %v165
  %v843 = vunpack.c.l.b16 %v166
  %v844 = vunpack.c.h.b16 %v166
  %v845 = vunpack.c.l.b16 %v167
  %v846 = vunpack.c.h.b16 %v167
  %v847 = vunpack.c.l.b16 %v168
  %v848 = vunpack.c.h.b16 %v168
  %v849 = vunpack.c.l.b16 %v169
  %v850 = vunpack.c.h.b16 %v169
  %v851 = vunpack.c.l.b16 %v170
  %v852 = vunpack.c.h.b16 %v170
  %v853 = vunpack.c.l.b16 %v171
  %v854 = vunpack.c.h.b16 %v171
  %v855 = vunpack.c.l.b16 %v172
  %v856 = vunpack.c.h.b16 %v172
  %v857 = vunpack.c.l.b16 %v173
  %v858 = vunpack.c.h.b16 %v173
  %v859 = vunpack.c.l.b16 %v174
  %v860 = vunpack.c.h.b16 %v174
  %v861 = vunpack.c.l.b16 %v175
  %v862 = vunpack.c.h.b16 %v175
  %v863 = vunpack.c.l.b16 %v176
  %v864 = vunpack.c.h.b16 %v176
  %v865 = vunpack.c.l.b16 %v177
  %v866 = vunpack.c.h.b16 %v177
  %v867 = vunpack.c.l.b16 %v178
  %v868 = vunpack.c.h.b16 %v178
  %v869 = vunpack.c.l.b16 %v179
  %v870 = vunpack.c.h.b16 %v179
  %v871 = vunpack.c.l.b16 %v180
  %v872 = vunpack.c.h.b16 %v180
  %v873 = vunpack.c.l.b16 %v181
  %v874 = vunpack.c.h.b16 %v181
  %v875 = vunpack.c.l.b16 %v182
  %v876 = vunpack.c.h.b16 %v182
  %v877 = vunpack.c.l.b16 %v183
  %v878 = vunpack.c.h.b16 %v183
  %v879 = vunpack.c.l.b16 %v184
  %v880 = vunpack.c.h.b16 %v184
  %v881 = vunpack.c.l.b16 %v185
  %v882 = vunpack.c.h.b16 %v185
  %v883 = vunpack.c.l.b16 %v186
  %v884 = vunpack.c.h.b16 %v186
  %v885 = vunpack.c.l.b16 %v187
  %v886 = vunpack.c.h.b16 %v187
  %v887 = vunpack.c.l.b16 %v188
  %v888 = vunpack.c.h.b16 %v188
  %v889 = vunpack.c.l.b16 %v189
  %v890 = vunpack.c.h.b16 %v189
  %v891 = vunpack.c.l.b16 %v190
  %v892 = vunpack.c.h.b16 %v190
  %v893 = vunpack.c.l.b16 %v191
  %v894 = vunpack.c.h.b16 %v191
  %v895 = vunpack.c.l.b16 %v192
  %v896 = vunpack.c.h.b16 %v192
  %v897 = vunpack.c.l.b16 %v193
  %v898 = vunpack.c.h.b16 %v193
  %v899 = vunpack.c.l.b16 %v194
  %v900 = vunpack.c.h.b16 %v194
  %v901 = vunpack.c.l.b16 %v195
  %v902 = vunpack.c.h.b16 %v195
  %v903 = vunpack.c.l.b16 %v196
  %v904 = vunpack.c.h.b16 %v196
  %v905 = vunpack.c.l.b16 %v197
  %v906 = vunpack.c.h.b16 %v197
  %v907 = vunpack.c.l.b16 %v198
  %v908 = vunpack.c.h.b16 %v198
  %v909 = vunpack.c.l.b16 %v199
  %v910 = vunpack.c.h.b16 %v199
  %v911 = vunpack.c.l.b16 %v200
  %v912 = vunpack.c.h.b16 %v200
  %v913 = vunpack.c.l.b16 %v201
  %v914 = vunpack.c.h.b16 %v201
  %v915 = vunpack.c.l.b16 %v202
  %v916 = vunpack.c.h.b16 %v202
  %v917 = vunpack.c.l.b16 %v203
  %v918 = vunpack.c.h.b16 %v203
  %v919 = vunpack.c.l.b16 %v204
  %v920 = vunpack.c.h.b16 %v204
  %v921 = vunpack.c.l.b16 %v205
  %v922 = vunpack.c.h.b16 %v205
  %v923 = vunpack.c.l.b16 %v206
  %v924 = vunpack.c.h.b16 %v206
  %v925 = vunpack.c.l.b16 %v207
  %v926 = vunpack.c.h.b16 %v207
  %v927 = vunpack.c.l.b16 %v208
  %v928 = vunpack.c.h.b16 %v208
  %v929 = vunpack.c.l.b16 %v209
  %v930 = vunpack.c.h.b16 %v209
  %v931 = vunpack.c.l.b16 %v210
  %v932 = vunpack.c.h.b16 %v210
  %v933 = vunpack.c.l.b16 %v211
  %v934 = vunpack.c.h.b16 %v211
  %v935 = vunpack.c.l.b16 %v212
  %v936 = vunpack.c.h.b16 %v212
  %v937 = vunpack.c.l.b16 %v213
  %v938 = vunpack.c.h.b16 %v213
  %v939 = vunpack.c.l.b16 %v214
  %v940 = vunpack.c.h.b16 %v214
  %v941 = vunpack.c.l.b16 %v215
  %v942 = vunpack.c.h.b16 %v215
  %v943 = vunpack.c.l.b16 %v216
  %v944 = vunpack.c.h.b16 %v216
  %v945 = vunpack.c.l.b16 %v217
  %v946 = vunpack.c.h.b16 %v217
  %v947 = vunpack.c.l.b16 %v218
  %v948 = vunpack.c.h.b16 %v218
  %v949 = vunpack.c.l.b16 %v219
  %v950 = vunpack.c.h.b16 %v219
  %v951 = vunpack.c.l.b16 %v220
  %v952 = vunpack.c.h.b16 %v220
  %v953 = vunpack.c.l.b16 %v221
  %v954 = vunpack.c.h.b16 %v221
  %v955 = vunpack.c.l.b16 %v222
  %v956 = vunpack.c.h.b16 %v222
  %v957 = vunpack.c.l.b16 %v223
  %v958 = vunpack.c.h.b16 %v223
  %v959 = vunpack.c.l.b16 %v224
  %v960 = vunpack.c.h.b16 %v224
  %v961 = vunpack.c.l.b16 %v225
  %v962 = vunpack.c.h.b16 %v225
  %v963 = vunpack.c.l.b16 %v226
  %v964 = vunpack.c.h.b16 %v226
  %v965 = vunpack.c.l.b16 %v227
  %v966 = vunpack.c.h.b16 %v227
  %v967 = vunpack.c.l.b16 %v228
  %v968 = vunpack.c.h.b16 %v228
  %v969 = vunpack.c.l.b16 %v229
  %v970 = vunpack.c.h.b16 %v229
  %v971 = vunpack.c.l.b16 %v230
  %v972 = vunpack.c.h.b16 %v230
  %v973 = vunpack.c.l.b16 %v231
  %v974 = vunpack.c.h.b16 %v231
  %v975 = vunpack.c.l.b16 %v232
  %v976 = vunpack.c.h.b16 %v232
  %v977 = vunpack.c.l.b16 %v233
  %v978 = vunpack.c.h.b16 %v233
  %v979 = vunpack.c.l.b16 %v234
  %v980 = vunpack.c.h.b16 %v234
  %v981 = vunpack.c.l.b16 %v235
  %v982 = vunpack.c.h.b16 %v235
  %v983 = vunpack.c.l.b16 %v236
  %v984 = vunpack.c.h.b16 %v236
  %v985 = vunpack.c.l.b16 %v237
  %v986 = vunpack.c.h.b16 %v237
  %v987 = vunpack.c.l.b16 %v238
  %v988 = vunpack.c.h.b16 %v238
  %v989 = vunpack.c.l.b16 %v239
  %v990 = vunpack.c.h.b16 %v239
  %v991 = vunpack.c.l.b16 %v240
  %v992 = vunpack.c.h.b16 %v240
  %v993 = vunpack.c.l.b16 %v241
  %v994 = vunpack.c.h.b16 %v241
  %v995 = vunpack.c.l.b16 %v242
  %v996 = vunpack.c.h.b16 %v242
  %v997 = vunpack.c.l.b16 %v243
  %v998 = vunpack.c.h.b16 %v243
  %v999 = vunpack.c.l.b16 %v244
  %v1000 = vunpack.c.h.b16 %v244
  %v1001 = vunpack.c.l.b16 %v245
  %v1002 = vunpack.c.h.b16 %v245
  %v1003 = vunpack.c.l.b16 %v246
  %v1004 = vunpack.c.h.b16 %v246
  %v1005 = vunpack.c.l.b16 %v247
  %v1006 = vunpack.c.h.b16 %v247
  %v1007 = vunpack.c.l.b16 %v248
  %v1008 = vunpack.c.h.b16 %v248
  %v1009 = vunpack.c.l.b16 %v249
  %v1010 = vunpack.c.h.b16 %v249
  %v1011 = vunpack.c.l.b16 %v250
  %v1012 = vunpack.c.h.b16 %v250
  %v1013 = vunpack.c.l.b16 %v251
  %v1014 = vunpack.c.h.b16 %v251
  %v1015 = vunpack.c.l.b16 %v252
  %v1016 = vunpack.c.h.b16 %v252
  %v1017 = vunpack.c.l.b16 %v253
  %v1018 = vunpack.c.h.b16 %v253
  %v1019 = vunpack.c.l.b16 %v254
  %v1020 = vunpack.c.h.b16 %v254
  %v1021 = vunpack.c.l.b16 %v255
  %v1022 = vunpack.c.h.b16 %v255
  %v1023 = vunpack.c.l.b16 %v256
  %v1024 = vunpack.c.h.b16 %v256
  %v1025 = vunpack.c.l.b16 %v257
  %v1026 = vunpack.c.h.b16 %v257
  %v1027 = vunpack.c.l.b16 %v258
  %v1028 = vunpack.c.h.b16 %v258
  %v1029 = vunpack.c.l.b16 %v259
  %v1030 = vunpack.c.h.b16 %v259
  %v1031 = vunpack.c.l.b16 %v260
  %v1032 = vunpack.c.h.b16 %v260
  %v1033 = vunpack.c.l.b16 %v261
  %v1034 = vunpack.c.h.b16 %v261
  %v1035 = vunpack.c.l.b16 %v262
  %v1036 = vunpack.c.h.b16 %v262
  %v1037 = vunpack.c.l.b16 %v263
  %v1038 = vunpack.c.h.b16 %v263
  %v1039 = vunpack.c.l.b16 %v264
  %v1040 = vunpack.c.h.b16 %v264
  %v1041 = vunpack.c.l.b16 %v265
  %v1042 = vunpack.c.h.b16 %v265
  %v1043 = vunpack.c.l.b16 %v266
  %v1044 = vunpack.c.h.b16 %v266
  %v1045 = vunpack.c.l.b16 %v267
  %v1046 = vunpack.c.h.b16 %v267
  %v1047 = vunpack.c.l.b16 %v268
  %v1048 = vunpack.c.h.b16 %v268
  %v1049 = vunpack.c.l.b16 %v269
  %v1050 = vunpack.c.h.b16 %v269
  %v1051 = vunpack.c.l.b16 %v270
  %v1052 = vunpack.c.h.b16 %v270
  %v1053 = vunpack.c.l.b16 %v271
  %v1054 = vunpack.c.h.b16 %v271
  %v1055 = vunpack.c.l.b16 %v272
  %v1056 = vunpack.c.h.b16 %v272
  %v1057 = vunpack.c.l.b16 %v273
  %v1058 = vunpack.c.h.b16 %v273
  %v1059 = vunpack.c.l.b16 %v274
  %v1060 = vunpack.c.h.b16 %v274
  %v1061 = vunpack.c.l.b16 %v275
  %v1062 = vunpack.c.h.b16 %v275
  %v1063 = vunpack.c.l.b16 %v276
  %v1064 = vunpack.c.h.b16 %v276
  %v1065 = vunpack.c.l.b16 %v277
  %v1066 = vunpack.c.h.b16 %v277
  %v1067 = vunpack.c.l.b16 %v278
  %v1068 = vunpack.c.h.b16 %v278
  %v1069 = vunpack.c.l.b16 %v279
  %v1070 = vunpack.c.h.b16 %v279
  %v1071 = vunpack.c.l.b16 %v280
  %v1072 = vunpack.c.h.b16 %v280
  %v1073 = vunpack.c.l.b16 %v281
  %v1074 = vunpack.c.h.b16 %v281
  %v1075 = vunpack.c.l.b16 %v282
  %v1076 = vunpack.c.h.b16 %v282
  %v1077 = vunpack.c.l.b16 %v283
  %v1078 = vunpack.c.h.b16 %v283
  %v1079 = vunpack.c.l.b16 %v284
  %v1080 = vunpack.c.h.b16 %v284
  %v1081 = vunpack.c.l.b16 %v285
  %v1082 = vunpack.c.h.b16 %v285
  %v1083 = vunpack.c.l.b16 %v286
  %v1084 = vunpack.c.h.b16 %v286
  %v1085 = vunpack.c.l.b16 %v287
  %v1086 = vunpack.c.h.b16 %v287
  %v1087 = vunpack.c.l.b16 %v288
  %v1088 = vunpack.c.h.b16 %v288
  %v1089 = vunpack.c.l.b16 %v289
  %v1090 = vunpack.c.h.b16 %v289
  %v1091 = vunpack.c.l.b16 %v290
  %v1092 = vunpack.c.h.b16 %v290
  %v1093 = vunpack.c.l.b16 %v291
  %v1094 = vunpack.c.h.b16 %v291
  %v1095 = vunpack.c.l.b16 %v292
  %v1096 = vunpack.c.h.b16 %v292
  %v1097 = vunpack.c.l.b16 %v293
  %v1098 = vunpack.c.h.b16 %v293
  %v1099 = vunpack.c.l.b16 %v294
  %v1100 = vunpack.c.h.b16 %v294
  %v1101 = vpack.c.b16 %v593, %v589
  %v1102 = vpack.c.b16 %v594, %v590
  %v1103 = vpack.c.b16 %v595, %v591
  %v1104 = vpack.c.b16 %v596, %v592
  %v1105 = vpack.c.b16 %v601, %v597
  %v1106 = vpack.c.b16 %v602, %v598
  %v1107 = vpack.c.b16 %v603, %v599
  %v1108 = vpack.c.b16 %v604, %v600
  %v1109 = vpack.c.b16 %v609, %v605
  %v1110 = vpack.c.b16 %v610, %v606
  %v1111 = vpack.c.b16 %v611, %v607
  %v1112 = vpack.c.b16 %v612, %v608
  %v1113 = vpack.c.b16 %v617, %v613
  %v1114 = vpack.c.b16 %v618, %v614
  %v1115 = vpack.c.b16 %v619, %v615
  %v1116 = vpack.c.b16 %v620, %v616
  %v1117 = vpack.c.b16 %v625, %v621
  %v1118 = vpack.c.b16 %v626, %v622
  %v1119 = vpack.c.b16 %v627, %v623
  %v1120 = vpack.c.b16 %v628, %v624
  %v1121 = vpack.c.b16 %v633, %v629
  %v1122 = vpack.c.b16 %v634, %v630
  %v1123 = vpack.c.b16 %v635, %v631
  %v1124 = vpack.c.b16 %v636, %v632
  %v1125 = vpack.c.b16 %v641, %v637
  %v1126 = vpack.c.b16 %v642, %v638
  %v1127 = vpack.c.b16 %v643, %v639
  %v1128 = vpack.c.b16 %v644, %v640
  %v1129 = vpack.c.b16 %v649, %v645
  %v1130 = vpack.c.b16 %v650, %v646
  %v1131 = vpack.c.b16 %v651, %v647
  %v1132 = vpack.c.b16 %v652, %v648
  %v1133 = vpack.c.b16 %v657, %v653
  %v1134 = vpack.c.b16 %v658, %v654
  %v1135 = vpack.c.b16 %v659, %v655
  %v1136 = vpack.c.b16 %v660, %v656
  %v1137 = vpack.c.b16 %v665, %v661
  %v1138 = vpack.c.b16 %v666, %v662
  %v1139 = vpack.c.b16 %v667, %v663
  %v1140 = vpack.c.b16 %v668, %v664
  %v1141 = vpack.c.b16 %v673, %v669
  %v1142 = vpack.c.b16 %v674, %v670
  %v1143 = vpack.c.b16 %v675, %v671
  %v1144 = vpack.c.b16 %v676, %v672
  %v1145 = vpack.c.b16 %v681, %v677
  %v1146 = vpack.c.b16 %v682, %v678
  %v1147 = vpack.c.b16 %v683, %v679
  %v1148 = vpack.c.b16 %v684, %v680
  %v1149 = vpack.c.b16 %v689, %v685
  %v1150 = vpack.c.b16 %v690, %v686
  %v1151 = vpack.c.b16 %v691, %v687
  %v1152 = vpack.c.b16 %v692, %v688
  %v1153 = vpack.c.b16 %v697, %v693
  %v1154 = vpack.c.b16 %v698, %v694
  %v1155 = vpack.c.b16 %v699, %v695
  %v1156 = vpack.c.b16 %v700, %v696
  %v1157 = vpack.c.b16 %v705, %v701
  %v1158 = vpack.c.b16 %v706, %v702
  %v1159 = vpack.c.b16 %v707, %v703
  %v1160 = vpack.c.b16 %v708, %v704
  %v1161 = vpack.c.b16 %v713, %v709
  %v1162 = vpack.c.b16 %v714, %v710
  %v1163 = vpack.c.b16 %v715, %v711
  %v1164 = vpack.c.b16 %v716, %v712
  %v1165 = vpack.c.b16 %v721, %v717
  %v1166 = vpack.c.b16 %v722, %v718
  %v1167 = vpack.c.b16 %v723, %v719
  %v1168 = vpack.c.b16 %v724, %v720
  %v1169 = vpack.c.b16 %v729, %v725
  %v1170 = vpack.c.b16 %v730, %v726
  %v1171 = vpack.c.b16 %v731, %v727
  %v1172 = vpack.c.b16 %v732, %v728
  %v1173 = vpack.c.b16 %v737, %v733
  %v1174 = vpack.c.b16 %v738, %v734
  %v1175 = vpack.c.b16 %v739, %v735
  %v1176 = vpack.c.b16 %v740, %v736
  %v1177 = vpack.c.b16 %v745, %v741
  %v1178 = vpack.c.b16 %v746, %v742
  %v1179 = vpack.c.b16 %v747, %v743
  %v1180 = vpack.c.b16 %v748, %v744
  %v1181 = vpack.c.b16 %v753, %v749
  %v1182 = vpack.c.b16 %v754, %v750
  %v1183 = vpack.c.b16 %v755, %v751
  %v1184 = vpack.c.b16 %v756, %v752
  %v1185 = vpack.c.b16 %v761, %v757
  %v1186 = vpack.c.b16 %v762, %v758
  %v1187 = vpack.c.b16 %v763, %v759
  %v1188 = vpack.c.b16 %v764, %v760
  %v1189 = vpack.c.b16 %v769, %v765
  %v1190 = vpack.c.b16 %v770, %v766
  %v1191 = vpack.c.b16 %v771, %v767
  %v1192 = vpack.c.b16 %v772, %v768
  %v1193 = vpack.c.b16 %v777, %v773
  %v1194 = vpack.c.b16 %v778, %v774
  %v1195 = vpack.c.b16 %v779, %v775
  %v1196 = vpack.c.b16 %v780, %v776
  %v1197 = vpack.c.b16 %v785, %v781
  %v1198 = vpack.c.b16 %v786, %v782
  %v1199 = vpack.c.b16 %v787, %v783
  %v1200 = vpack.c.b16 %v788, %v784
  %v1201 = vpack.c.b16 %v793, %v789
  %v1202 = vpack.c.b16 %v794, %v790
  %v1203 = vpack.c.b16 %v795, %v791
  %v1204 = vpack.c.b16 %v796, %v792
  %v1205 = vpack.c.b16 %v801, %v797
  %v1206 = vpack.c.b16 %v802, %v798
  %v1207 = vpack.c.b16 %v803, %v799
  %v1208 = vpack.c.b16 %v804, %v800
  %v1209 = vpack.c.b16 %v809, %v805
  %v1210 = vpack.c.b16 %v810, %v806
  %v1211 = vpack.c.b16 %v811, %v807
  %v1212 = vpack.c.b16 %v812, %v808
  %v1213 = vpack.c.b16 %v817, %v813
  %v1214 = vpack.c.b16 %v818, %v814
  %v1215 = vpack.c.b16 %v819, %v815
  %v1216 = vpack.c.b16 %v820, %v816
  %v1217 = vpack.c.b16 %v825, %v821
  %v1218 = vpack.c.b16 %v826, %v822
  %v1219 = vpack.c.b16 %v827, %v823
  %v1220 = vpack.c.b16 %v828, %v824
  %v1221 = vpack.c.b16 %v833, %v829
  %v1222 = vpack.c.b16 %v834, %v830
  %v1223 = vpack.c.b16 %v835, %v831
  %v1224 = vpack.c.b16 %v836, %v832
  %v1225 = vpack.c.b16 %v841, %v837
  %v1226 = vpack.c.b16 %v842, %v838
  %v1227 = vpack.c.b16 %v843, %v839
  %v1228 = vpack.c.b16 %v844, %v840
  %v1229 = vpack.c.b16 %v849, %v845
  %v1230 = vpack.c.b16 %v850, %v846
  %v1231 = vpack.c.b16 %v851, %v847
  %v1232 = vpack.c.b16 %v852, %v848
  %v1233 = vpack.c.b16 %v857, %v853
  %v1234 = vpack.c.b16 %v858, %v854
  %v1235 = vpack.c.b16 %v859, %v855
  %v1236 = vpack.c.b16 %v860, %v856
  %v1237 = vpack.c.b16 %v865, %v861
  %v1238 = vpack.c.b16 %v866, %v862
  %v1239 = vpack.c.b16 %v867, %v863
  %v1240 = vpack.c.b16 %v868, %v864
  %v1241 = vpack.c.b16 %v873, %v869
  %v1242 = vpack.c.b16 %v874, %v870
  %v1243 = vpack.c.b16 %v875, %v871
  %v1244 = vpack.c.b16 %v876, %v872
  %v1245 = vpack.c.b16 %v881, %v877
  %v1246 = vpack.c.b16 %v882, %v878
  %v1247 = vpack.c.b16 %v883, %v879
  %v1248 = vpack.c.b16 %v884, %v880
  %v1249 = vpack.c.b16 %v889, %v885
  %v1250 = vpack.c.b16 %v890, %v886
  %v1251 = vpack.c.b16 %v891, %v887
  %v1252 = vpack.c.b16 %v892, %v888
  %v1253 = vpack.c.b16 %v897, %v893
  %v1254 = vpack.c.b16 %v898, %v894
  %v1255 = vpack.c.b16 %v899, %v895
  %v1256 = vpack.c.b16 %v900, %v896
  %v1257 = vpack.c.b16 %v905, %v901
  %v1258 = vpack.c.b16 %v906, %v902
  %v1259 = vpack.c.b16 %v907, %v903
  %v1260 = vpack.c.b16 %v908, %v904
  %v1261 = vpack.c.b16 %v913, %v909
  %v1262 = vpack.c.b16 %v914, %v910
  %v1263 = vpack.c.b16 %v915, %v911
  %v1264 = vpack.c.b16 %v916, %v912
  %v1265 = vpack.c.b16 %v921, %v917
  %v1266 = vpack.c.b16 %v922, %v918
  %v1267 = vpack.c.b16 %v923, %v919
  %v1268 = vpack.c.b16 %v924, %v920
  %v1269 = vpack.c.b16 %v929, %v925
  %v1270 = vpack.c.b16 %v930, %v926
  %v1271 = vpack.c.b16 %v931, %v927
  %v1272 = vpack.c.b16 %v932, %v928
  %v1273 = vpack.c.b16 %v937, %v933
  %v1274 = vpack.c.b16 %v938, %v934
  %v1275 = vpack.c.b16 %v939, %v935
  %v1276 = vpack.c.b16 %v940, %v936
  %v1277 = vpack.c.b16 %v945, %v941
  %v1278 = vpack.c.b16 %v946, %v942
  %v1279 = vpack.c.b16 %v947, %v943
  %v1280 = vpack.c.b16 %v948, %v944
  %v1281 = vpack.c.b16 %v953, %v949
  %v1282 = vpack.c.b16 %v954, %v950
  %v1283 = vpack.c.b16 %v955, %v951
  %v1284 = vpack.c.b16 %v956, %v952
  %v1285 = vpack.c.b16 %v961, %v957
  %v1286 = vpack.c.b16 %v962, %v958
  %v1287 = vpack.c.b16 %v963, %v959
  %v1288 = vpack.c.b16 %v964, %v960
  %v1289 = vpack.c.b16 %v969, %v965
  %v1290 = vpack.c.b16 %v970, %v966
  %v1291 = vpack.c.b16 %v971, %v967
  %v1292 = vpack.c.b16 %v972, %v968
  %v1293 = vpack.c.b16 %v977, %v973
  %v1294 = vpack.c.b16 %v978, %v974
  %v1295 = vpack.c.b16 %v979, %v975
  %v1296 = vpack.c.b16 %v980, %v976
  %v1297 = vpack.c.b16 %v985, %v981
  %v1298 = vpack.c.b16 %v986, %v982
  %v1299 = vpack.c.b16 %v987, %v983
  %v1300 = vpack.c.b16 %v988, %v984
  %v1301 = vpack.c.b16 %v993, %v989
  %v1302 = vpack.c.b16 %v994, %v990
  %v1303 = vpack.c.b16 %v995, %v991
  %v1304 = vpack.c.b16 %v996, %v992
  %v1305 = vpack.c.b16 %v1001, %v997
  %v1306 = vpack.c.b16 %v1002, %v998
  %v1307 = vpack.c.b16 %v1003, %v999
  %v1308 = vpack.c.b16 %v1004, %v1000
  %v1309 = vpack.c.b16 %v1009, %v1005
  %v1310 = vpack.c.b16 %v1010, %v1006
  %v1311 = vpack.c.b16 %v1011, %v1007
  %v1312 = vpack.c.b16 %v1012, %v1008
  %v1313 = vpack.c.b16 %v1017, %v1013
  %v1314 = vpack.c.b16 %v1018, %v1014
  %v1315 = vpack.c.b16 %v1019, %v1015
  %v1316 = vpack.c.b16 %v1020, %v1016
  %v1317 = vpack.c.b16 %v1025, %v1021
  %v1318 = vpack.c.b16 %v1026, %v1022
  %v1319 = vpack.c.b16 %v1027, %v1023
  %v1320 = vpack.c.b16 %v1028, %v1024
  %v1321 = vpack.c.b16 %v1033, %v1029
  %v1322 = vpack.c.b16 %v1034, %v1030
  %v1323 = vpack.c.b16 %v1035, %v1031
  %v1324 = vpack.c.b16 %v1036, %v1032
  %v1325 = vpack.c.b16 %v1041, %v1037
  %v1326 = vpack.c.b16 %v1042, %v1038
  %v1327 = vpack.c.b16 %v1043, %v1039
  %v1328 = vpack.c.b16 %v1044, %v1040
  %v1329 = vpack.c.b16 %v1049, %v1045
  %v1330 = vpack.c.b16 %v1050, %v1046
  %v1331 = vpack.c.b16 %v1051, %v1047
  %v1332 = vpack.c.b16 %v1052, %v1048
  %v1333 = vpack.c.b16 %v1057, %v1053
  %v1334 = vpack.c.b16 %v1058, %v1054
  %v1335 = vpack.c.b16 %v1059, %v1055
  %v1336 = vpack.c.b16 %v1060, %v1056
  %v1337 = vpack.c.b16 %v1065, %v1061
  %v1338 = vpack.c.b16 %v1066, %v1062
  %v1339 = vpack.c.b16 %v1067, %v1063
  %v1340 = vpack.c.b16 %v1068, %v1064
  %v1341 = vpack.c.b16 %v1073, %v1069
  %v1342 = vpack.c.b16 %v1074, %v1070
  %v1343 = vpack.c.b16 %v1075, %v1071
  %v1344 = vpack.c.b16 %v1076, %v1072
  %v1345 = vpack.c.b16 %v1081, %v1077
  %v1346 = vpack.c.b16 %v1082, %v1078
  %v1347 = vpack.c.b16 %v1083, %v1079
  %v1348 = vpack.c.b16 %v1084, %v1080
  %v1349 = vpack.c.b16 %v1089, %v1085
  %v1350 = vpack.c.b16 %v1090, %v1086
  %v1351 = vpack.c.b16 %v1091, %v1087
  %v1352 = vpack.c.b16 %v1092, %v1088
  %v1353 = vpack.c.b16 %v1097, %v1093
  %v1354 = vpack.c.b16 %v1098, %v1094
  %v1355 = vpack.c.b16 %v1099, %v1095
  %v1356 = vpack.c.b16 %v1100, %v1096
  %1613 = vmatpush.bf16.msra.mxu0 %v1129
  %1614 = vmatpush.bf16.msra.mxu0 %v1125
  %1615 = vmatpush.bf16.msra.mxu0 %v1121
  %1616 = vmatpush.bf16.msra.mxu0 %v1117
  %1617 = vmatpush.bf16.msra.mxu0 %v1113
  %1618 = vmatpush.bf16.msra.mxu0 %v1109
  %1619 = vmatpush.bf16.msra.mxu0 %v1105
  %1620 = vmatpush.bf16.msra.mxu0 %v1101
  %1621 = vmatmul.bf16.gmra.mxu0 %v317
  %v1622 = vpop.f32.mrf.mxu0
  %v1623 = vadd.f32 %v297, %v1622
  %v1624 = vpop.f32.mrf.mxu0
  %1625 = vdwg.mxu0
  %1626 = vmatpush.bf16.msra.mxu0 %v1161
  %1627 = vmatpush.bf16.msra.mxu0 %v1157
  %1628 = vmatpush.bf16.msra.mxu0 %v1153
  %1629 = vmatpush.bf16.msra.mxu0 %v1149
  %1630 = vmatpush.bf16.msra.mxu0 %v1145
  %1631 = vmatpush.bf16.msra.mxu0 %v1141
  %1632 = vmatpush.bf16.msra.mxu0 %v1137
  %1633 = vmatpush.bf16.msra.mxu0 %v1133
  %1634 = vmatmul.bf16.gmra.mxu0 %v318
  %v1635 = vpop.f32.mrf.mxu0
  %v1636 = vadd.f32 %v1623, %v1635
  %v1637 = vpop.f32.mrf.mxu0
  %1638 = vdwg.mxu0
  %1639 = vmatpush.bf16.msra.mxu0 %v1193
  %1640 = vmatpush.bf16.msra.mxu0 %v1189
  %1641 = vmatpush.bf16.msra.mxu0 %v1185
  %1642 = vmatpush.bf16.msra.mxu0 %v1181
  %1643 = vmatpush.bf16.msra.mxu0 %v1177
  %1644 = vmatpush.bf16.msra.mxu0 %v1173
  %1645 = vmatpush.bf16.msra.mxu0 %v1169
  %1646 = vmatpush.bf16.msra.mxu0 %v1165
  %1647 = vmatmul.bf16.gmra.mxu0 %v319
  %v1648 = vpop.f32.mrf.mxu0
  %v1649 = vadd.f32 %v1636, %v1648
  %v1650 = vpop.f32.mrf.mxu0
  %1651 = vdwg.mxu0
  %1652 = vmatpush.bf16.msra.mxu0 %v1225
  %1653 = vmatpush.bf16.msra.mxu0 %v1221
  %1654 = vmatpush.bf16.msra.mxu0 %v1217
  %1655 = vmatpush.bf16.msra.mxu0 %v1213
  %1656 = vmatpush.bf16.msra.mxu0 %v1209
  %1657 = vmatpush.bf16.msra.mxu0 %v1205
  %1658 = vmatpush.bf16.msra.mxu0 %v1201
  %1659 = vmatpush.bf16.msra.mxu0 %v1197
  %1660 = vmatmul.bf16.gmra.mxu0 %v320
  %v1661 = vpop.f32.mrf.mxu0
  %v1662 = vadd.f32 %v1649, %v1661
  %v1663 = vpop.f32.mrf.mxu0
  %1664 = vdwg.mxu0
  %1665 = vmatpush.bf16.msra.mxu0 %v1257
  %1666 = vmatpush.bf16.msra.mxu0 %v1253
  %1667 = vmatpush.bf16.msra.mxu0 %v1249
  %1668 = vmatpush.bf16.msra.mxu0 %v1245
  %1669 = vmatpush.bf16.msra.mxu0 %v1241
  %1670 = vmatpush.bf16.msra.mxu0 %v1237
  %1671 = vmatpush.bf16.msra.mxu0 %v1233
  %1672 = vmatpush.bf16.msra.mxu0 %v1229
  %1673 = vmatmul.bf16.gmra.mxu0 %v321
  %v1674 = vpop.f32.mrf.mxu0
  %v1675 = vadd.f32 %v1662, %v1674
  %v1676 = vpop.f32.mrf.mxu0
  %1677 = vdwg.mxu0
  %1678 = vmatpush.bf16.msra.mxu0 %v1289
  %1679 = vmatpush.bf16.msra.mxu0 %v1285
  %1680 = vmatpush.bf16.msra.mxu0 %v1281
  %1681 = vmatpush.bf16.msra.mxu0 %v1277
  %1682 = vmatpush.bf16.msra.mxu0 %v1273
  %1683 = vmatpush.bf16.msra.mxu0 %v1269
  %1684 = vmatpush.bf16.msra.mxu0 %v1265
  %1685 = vmatpush.bf16.msra.mxu0 %v1261
  %1686 = vmatmul.bf16.gmra.mxu0 %v322
  %v1687 = vpop.f32.mrf.mxu0
  %v1688 = vadd.f32 %v1675, %v1687
  %v1689 = vpop.f32.mrf.mxu0
  %1690 = vdwg.mxu0
  %1691 = vmatpush.bf16.msra.mxu0 %v1321
  %1692 = vmatpush.bf16.msra.mxu0 %v1317
  %1693 = vmatpush.bf16.msra.mxu0 %v1313
  %1694 = vmatpush.bf16.msra.mxu0 %v1309
  %1695 = vmatpush.bf16.msra.mxu0 %v1305
  %1696 = vmatpush.bf16.msra.mxu0 %v1301
  %1697 = vmatpush.bf16.msra.mxu0 %v1297
  %1698 = vmatpush.bf16.msra.mxu0 %v1293
  %1699 = vmatmul.bf16.gmra.mxu0 %v323
  %v1700 = vpop.f32.mrf.mxu0
  %v1701 = vadd.f32 %v1688, %v1700
  %v1702 = vpop.f32.mrf.mxu0
  %1703 = vdwg.mxu0
  %1704 = vmatpush.bf16.msra.mxu0 %v1353
  %1705 = vmatpush.bf16.msra.mxu0 %v1349
  %1706 = vmatpush.bf16.msra.mxu0 %v1345
  %1707 = vmatpush.bf16.msra.mxu0 %v1341
  %1708 = vmatpush.bf16.msra.mxu0 %v1337
  %1709 = vmatpush.bf16.msra.mxu0 %v1333
  %1710 = vmatpush.bf16.msra.mxu0 %v1329
  %1711 = vmatpush.bf16.msra.mxu0 %v1325
  %1712 = vmatmul.bf16.gmra.mxu0 %v324
  %v1713 = vpop.f32.mrf.mxu0
  %v1714 = vadd.f32 %v1701, %v1713
  %v1715 = vpop.f32.mrf.mxu0
  %1716 = vdwg.mxu0
  %1717 = vmatpush.bf16.msra.mxu0 %v1130
  %1718 = vmatpush.bf16.msra.mxu0 %v1126
  %1719 = vmatpush.bf16.msra.mxu0 %v1122
  %1720 = vmatpush.bf16.msra.mxu0 %v1118
  %1721 = vmatpush.bf16.msra.mxu0 %v1114
  %1722 = vmatpush.bf16.msra.mxu0 %v1110
  %1723 = vmatpush.bf16.msra.mxu0 %v1106
  %1724 = vmatpush.bf16.msra.mxu0 %v1102
  %1725 = vmatmul.bf16.gmra.mxu0 %v317
  %v1726 = vpop.f32.mrf.mxu0
  %v1727 = vadd.f32 %v298, %v1726
  %v1728 = vpop.f32.mrf.mxu0
  %1729 = vdwg.mxu0
  %1730 = vmatpush.bf16.msra.mxu0 %v1162
  %1731 = vmatpush.bf16.msra.mxu0 %v1158
  %1732 = vmatpush.bf16.msra.mxu0 %v1154
  %1733 = vmatpush.bf16.msra.mxu0 %v1150
  %1734 = vmatpush.bf16.msra.mxu0 %v1146
  %1735 = vmatpush.bf16.msra.mxu0 %v1142
  %1736 = vmatpush.bf16.msra.mxu0 %v1138
  %1737 = vmatpush.bf16.msra.mxu0 %v1134
  %1738 = vmatmul.bf16.gmra.mxu0 %v318
  %v1739 = vpop.f32.mrf.mxu0
  %v1740 = vadd.f32 %v1727, %v1739
  %v1741 = vpop.f32.mrf.mxu0
  %1742 = vdwg.mxu0
  %1743 = vmatpush.bf16.msra.mxu0 %v1194
  %1744 = vmatpush.bf16.msra.mxu0 %v1190
  %1745 = vmatpush.bf16.msra.mxu0 %v1186
  %1746 = vmatpush.bf16.msra.mxu0 %v1182
  %1747 = vmatpush.bf16.msra.mxu0 %v1178
  %1748 = vmatpush.bf16.msra.mxu0 %v1174
  %1749 = vmatpush.bf16.msra.mxu0 %v1170
  %1750 = vmatpush.bf16.msra.mxu0 %v1166
  %1751 = vmatmul.bf16.gmra.mxu0 %v319
  %v1752 = vpop.f32.mrf.mxu0
  %v1753 = vadd.f32 %v1740, %v1752
  %v1754 = vpop.f32.mrf.mxu0
  %1755 = vdwg.mxu0
  %1756 = vmatpush.bf16.msra.mxu0 %v1226
  %1757 = vmatpush.bf16.msra.mxu0 %v1222
  %1758 = vmatpush.bf16.msra.mxu0 %v1218
  %1759 = vmatpush.bf16.msra.mxu0 %v1214
  %1760 = vmatpush.bf16.msra.mxu0 %v1210
  %1761 = vmatpush.bf16.msra.mxu0 %v1206
  %1762 = vmatpush.bf16.msra.mxu0 %v1202
  %1763 = vmatpush.bf16.msra.mxu0 %v1198
  %1764 = vmatmul.bf16.gmra.mxu0 %v320
  %v1765 = vpop.f32.mrf.mxu0
  %v1766 = vadd.f32 %v1753, %v1765
  %v1767 = vpop.f32.mrf.mxu0
  %1768 = vdwg.mxu0
  %1769 = vmatpush.bf16.msra.mxu0 %v1258
  %1770 = vmatpush.bf16.msra.mxu0 %v1254
  %1771 = vmatpush.bf16.msra.mxu0 %v1250
  %1772 = vmatpush.bf16.msra.mxu0 %v1246
  %1773 = vmatpush.bf16.msra.mxu0 %v1242
  %1774 = vmatpush.bf16.msra.mxu0 %v1238
  %1775 = vmatpush.bf16.msra.mxu0 %v1234
  %1776 = vmatpush.bf16.msra.mxu0 %v1230
  %1777 = vmatmul.bf16.gmra.mxu0 %v321
  %v1778 = vpop.f32.mrf.mxu0
  %v1779 = vadd.f32 %v1766, %v1778
  %v1780 = vpop.f32.mrf.mxu0
  %1781 = vdwg.mxu0
  %1782 = vmatpush.bf16.msra.mxu0 %v1290
  %1783 = vmatpush.bf16.msra.mxu0 %v1286
  %1784 = vmatpush.bf16.msra.mxu0 %v1282
  %1785 = vmatpush.bf16.msra.mxu0 %v1278
  %1786 = vmatpush.bf16.msra.mxu0 %v1274
  %1787 = vmatpush.bf16.msra.mxu0 %v1270
  %1788 = vmatpush.bf16.msra.mxu0 %v1266
  %1789 = vmatpush.bf16.msra.mxu0 %v1262
  %1790 = vmatmul.bf16.gmra.mxu0 %v322
  %v1791 = vpop.f32.mrf.mxu0
  %v1792 = vadd.f32 %v1779, %v1791
  %v1793 = vpop.f32.mrf.mxu0
  %1794 = vdwg.mxu0
  %1795 = vmatpush.bf16.msra.mxu0 %v1322
  %1796 = vmatpush.bf16.msra.mxu0 %v1318
  %1797 = vmatpush.bf16.msra.mxu0 %v1314
  %1798 = vmatpush.bf16.msra.mxu0 %v1310
  %1799 = vmatpush.bf16.msra.mxu0 %v1306
  %1800 = vmatpush.bf16.msra.mxu0 %v1302
  %1801 = vmatpush.bf16.msra.mxu0 %v1298
  %1802 = vmatpush.bf16.msra.mxu0 %v1294
  %1803 = vmatmul.bf16.gmra.mxu0 %v323
  %v1804 = vpop.f32.mrf.mxu0
  %v1805 = vadd.f32 %v1792, %v1804
  %v1806 = vpop.f32.mrf.mxu0
  %1807 = vdwg.mxu0
  %1808 = vmatpush.bf16.msra.mxu0 %v1354
  %1809 = vmatpush.bf16.msra.mxu0 %v1350
  %1810 = vmatpush.bf16.msra.mxu0 %v1346
  %1811 = vmatpush.bf16.msra.mxu0 %v1342
  %1812 = vmatpush.bf16.msra.mxu0 %v1338
  %1813 = vmatpush.bf16.msra.mxu0 %v1334
  %1814 = vmatpush.bf16.msra.mxu0 %v1330
  %1815 = vmatpush.bf16.msra.mxu0 %v1326
  %1816 = vmatmul.bf16.gmra.mxu0 %v324
  %v1817 = vpop.f32.mrf.mxu0
  %v1818 = vadd.f32 %v1805, %v1817
  %v1819 = vpop.f32.mrf.mxu0
  %1820 = vdwg.mxu0
  %1821 = vmatpush.bf16.msra.mxu0 %v1131
  %1822 = vmatpush.bf16.msra.mxu0 %v1127
  %1823 = vmatpush.bf16.msra.mxu0 %v1123
  %1824 = vmatpush.bf16.msra.mxu0 %v1119
  %1825 = vmatpush.bf16.msra.mxu0 %v1115
  %1826 = vmatpush.bf16.msra.mxu0 %v1111
  %1827 = vmatpush.bf16.msra.mxu0 %v1107
  %1828 = vmatpush.bf16.msra.mxu0 %v1103
  %1829 = vmatmul.bf16.gmra.mxu0 %v317
  %v1830 = vpop.f32.mrf.mxu0
  %v1831 = vadd.f32 %v299, %v1830
  %v1832 = vpop.f32.mrf.mxu0
  %1833 = vdwg.mxu0
  %1834 = vmatpush.bf16.msra.mxu0 %v1163
  %1835 = vmatpush.bf16.msra.mxu0 %v1159
  %1836 = vmatpush.bf16.msra.mxu0 %v1155
  %1837 = vmatpush.bf16.msra.mxu0 %v1151
  %1838 = vmatpush.bf16.msra.mxu0 %v1147
  %1839 = vmatpush.bf16.msra.mxu0 %v1143
  %1840 = vmatpush.bf16.msra.mxu0 %v1139
  %1841 = vmatpush.bf16.msra.mxu0 %v1135
  %1842 = vmatmul.bf16.gmra.mxu0 %v318
  %v1843 = vpop.f32.mrf.mxu0
  %v1844 = vadd.f32 %v1831, %v1843
  %v1845 = vpop.f32.mrf.mxu0
  %1846 = vdwg.mxu0
  %1847 = vmatpush.bf16.msra.mxu0 %v1195
  %1848 = vmatpush.bf16.msra.mxu0 %v1191
  %1849 = vmatpush.bf16.msra.mxu0 %v1187
  %1850 = vmatpush.bf16.msra.mxu0 %v1183
  %1851 = vmatpush.bf16.msra.mxu0 %v1179
  %1852 = vmatpush.bf16.msra.mxu0 %v1175
  %1853 = vmatpush.bf16.msra.mxu0 %v1171
  %1854 = vmatpush.bf16.msra.mxu0 %v1167
  %1855 = vmatmul.bf16.gmra.mxu0 %v319
  %v1856 = vpop.f32.mrf.mxu0
  %v1857 = vadd.f32 %v1844, %v1856
  %v1858 = vpop.f32.mrf.mxu0
  %1859 = vdwg.mxu0
  %1860 = vmatpush.bf16.msra.mxu0 %v1227
  %1861 = vmatpush.bf16.msra.mxu0 %v1223
  %1862 = vmatpush.bf16.msra.mxu0 %v1219
  %1863 = vmatpush.bf16.msra.mxu0 %v1215
  %1864 = vmatpush.bf16.msra.mxu0 %v1211
  %1865 = vmatpush.bf16.msra.mxu0 %v1207
  %1866 = vmatpush.bf16.msra.mxu0 %v1203
  %1867 = vmatpush.bf16.msra.mxu0 %v1199
  %1868 = vmatmul.bf16.gmra.mxu0 %v320
  %v1869 = vpop.f32.mrf.mxu0
  %v1870 = vadd.f32 %v1857, %v1869
  %v1871 = vpop.f32.mrf.mxu0
  %1872 = vdwg.mxu0
  %1873 = vmatpush.bf16.msra.mxu0 %v1259
  %1874 = vmatpush.bf16.msra.mxu0 %v1255
  %1875 = vmatpush.bf16.msra.mxu0 %v1251
  %1876 = vmatpush.bf16.msra.mxu0 %v1247
  %1877 = vmatpush.bf16.msra.mxu0 %v1243
  %1878 = vmatpush.bf16.msra.mxu0 %v1239
  %1879 = vmatpush.bf16.msra.mxu0 %v1235
  %1880 = vmatpush.bf16.msra.mxu0 %v1231
  %1881 = vmatmul.bf16.gmra.mxu0 %v321
  %v1882 = vpop.f32.mrf.mxu0
  %v1883 = vadd.f32 %v1870, %v1882
  %v1884 = vpop.f32.mrf.mxu0
  %1885 = vdwg.mxu0
  %1886 = vmatpush.bf16.msra.mxu0 %v1291
  %1887 = vmatpush.bf16.msra.mxu0 %v1287
  %1888 = vmatpush.bf16.msra.mxu0 %v1283
  %1889 = vmatpush.bf16.msra.mxu0 %v1279
  %1890 = vmatpush.bf16.msra.mxu0 %v1275
  %1891 = vmatpush.bf16.msra.mxu0 %v1271
  %1892 = vmatpush.bf16.msra.mxu0 %v1267
  %1893 = vmatpush.bf16.msra.mxu0 %v1263
  %1894 = vmatmul.bf16.gmra.mxu0 %v322
  %v1895 = vpop.f32.mrf.mxu0
  %v1896 = vadd.f32 %v1883, %v1895
  %v1897 = vpop.f32.mrf.mxu0
  %1898 = vdwg.mxu0
  %1899 = vmatpush.bf16.msra.mxu0 %v1323
  %1900 = vmatpush.bf16.msra.mxu0 %v1319
  %1901 = vmatpush.bf16.msra.mxu0 %v1315
  %1902 = vmatpush.bf16.msra.mxu0 %v1311
  %1903 = vmatpush.bf16.msra.mxu0 %v1307
  %1904 = vmatpush.bf16.msra.mxu0 %v1303
  %1905 = vmatpush.bf16.msra.mxu0 %v1299
  %1906 = vmatpush.bf16.msra.mxu0 %v1295
  %1907 = vmatmul.bf16.gmra.mxu0 %v323
  %v1908 = vpop.f32.mrf.mxu0
  %v1909 = vadd.f32 %v1896, %v1908
  %v1910 = vpop.f32.mrf.mxu0
  %1911 = vdwg.mxu0
  %1912 = vmatpush.bf16.msra.mxu0 %v1355
  %1913 = vmatpush.bf16.msra.mxu0 %v1351
  %1914 = vmatpush.bf16.msra.mxu0 %v1347
  %1915 = vmatpush.bf16.msra.mxu0 %v1343
  %1916 = vmatpush.bf16.msra.mxu0 %v1339
  %1917 = vmatpush.bf16.msra.mxu0 %v1335
  %1918 = vmatpush.bf16.msra.mxu0 %v1331
  %1919 = vmatpush.bf16.msra.mxu0 %v1327
  %1920 = vmatmul.bf16.gmra.mxu0 %v324
  %v1921 = vpop.f32.mrf.mxu0
  %v1922 = vadd.f32 %v1909, %v1921
  %v1923 = vpop.f32.mrf.mxu0
  %1924 = vdwg.mxu0
  %1925 = vmatpush.bf16.msra.mxu0 %v1132
  %1926 = vmatpush.bf16.msra.mxu0 %v1128
  %1927 = vmatpush.bf16.msra.mxu0 %v1124
  %1928 = vmatpush.bf16.msra.mxu0 %v1120
  %1929 = vmatpush.bf16.msra.mxu0 %v1116
  %1930 = vmatpush.bf16.msra.mxu0 %v1112
  %1931 = vmatpush.bf16.msra.mxu0 %v1108
  %1932 = vmatpush.bf16.msra.mxu0 %v1104
  %1933 = vmatmul.bf16.gmra.mxu0 %v317
  %v1934 = vpop.f32.mrf.mxu0
  %v1935 = vadd.f32 %v300, %v1934
  %v1936 = vpop.f32.mrf.mxu0
  %1937 = vdwg.mxu0
  %1938 = vmatpush.bf16.msra.mxu0 %v1164
  %1939 = vmatpush.bf16.msra.mxu0 %v1160
  %1940 = vmatpush.bf16.msra.mxu0 %v1156
  %1941 = vmatpush.bf16.msra.mxu0 %v1152
  %1942 = vmatpush.bf16.msra.mxu0 %v1148
  %1943 = vmatpush.bf16.msra.mxu0 %v1144
  %1944 = vmatpush.bf16.msra.mxu0 %v1140
  %1945 = vmatpush.bf16.msra.mxu0 %v1136
  %1946 = vmatmul.bf16.gmra.mxu0 %v318
  %v1947 = vpop.f32.mrf.mxu0
  %v1948 = vadd.f32 %v1935, %v1947
  %v1949 = vpop.f32.mrf.mxu0
  %1950 = vdwg.mxu0
  %1951 = vmatpush.bf16.msra.mxu0 %v1196
  %1952 = vmatpush.bf16.msra.mxu0 %v1192
  %1953 = vmatpush.bf16.msra.mxu0 %v1188
  %1954 = vmatpush.bf16.msra.mxu0 %v1184
  %1955 = vmatpush.bf16.msra.mxu0 %v1180
  %1956 = vmatpush.bf16.msra.mxu0 %v1176
  %1957 = vmatpush.bf16.msra.mxu0 %v1172
  %1958 = vmatpush.bf16.msra.mxu0 %v1168
  %1959 = vmatmul.bf16.gmra.mxu0 %v319
  %v1960 = vpop.f32.mrf.mxu0
  %v1961 = vadd.f32 %v1948, %v1960
  %v1962 = vpop.f32.mrf.mxu0
  %1963 = vdwg.mxu0
  %1964 = vmatpush.bf16.msra.mxu0 %v1228
  %1965 = vmatpush.bf16.msra.mxu0 %v1224
  %1966 = vmatpush.bf16.msra.mxu0 %v1220
  %1967 = vmatpush.bf16.msra.mxu0 %v1216
  %1968 = vmatpush.bf16.msra.mxu0 %v1212
  %1969 = vmatpush.bf16.msra.mxu0 %v1208
  %1970 = vmatpush.bf16.msra.mxu0 %v1204
  %1971 = vmatpush.bf16.msra.mxu0 %v1200
  %1972 = vmatmul.bf16.gmra.mxu0 %v320
  %v1973 = vpop.f32.mrf.mxu0
  %v1974 = vadd.f32 %v1961, %v1973
  %v1975 = vpop.f32.mrf.mxu0
  %1976 = vdwg.mxu0
  %1977 = vmatpush.bf16.msra.mxu0 %v1260
  %1978 = vmatpush.bf16.msra.mxu0 %v1256
  %1979 = vmatpush.bf16.msra.mxu0 %v1252
  %1980 = vmatpush.bf16.msra.mxu0 %v1248
  %1981 = vmatpush.bf16.msra.mxu0 %v1244
  %1982 = vmatpush.bf16.msra.mxu0 %v1240
  %1983 = vmatpush.bf16.msra.mxu0 %v1236
  %1984 = vmatpush.bf16.msra.mxu0 %v1232
  %1985 = vmatmul.bf16.gmra.mxu0 %v321
  %v1986 = vpop.f32.mrf.mxu0
  %v1987 = vadd.f32 %v1974, %v1986
  %v1988 = vpop.f32.mrf.mxu0
  %1989 = vdwg.mxu0
  %1990 = vmatpush.bf16.msra.mxu0 %v1292
  %1991 = vmatpush.bf16.msra.mxu0 %v1288
  %1992 = vmatpush.bf16.msra.mxu0 %v1284
  %1993 = vmatpush.bf16.msra.mxu0 %v1280
  %1994 = vmatpush.bf16.msra.mxu0 %v1276
  %1995 = vmatpush.bf16.msra.mxu0 %v1272
  %1996 = vmatpush.bf16.msra.mxu0 %v1268
  %1997 = vmatpush.bf16.msra.mxu0 %v1264
  %1998 = vmatmul.bf16.gmra.mxu0 %v322
  %v1999 = vpop.f32.mrf.mxu0
  %v2000 = vadd.f32 %v1987, %v1999
  %v2001 = vpop.f32.mrf.mxu0
  %2002 = vdwg.mxu0
  %2003 = vmatpush.bf16.msra.mxu0 %v1324
  %2004 = vmatpush.bf16.msra.mxu0 %v1320
  %2005 = vmatpush.bf16.msra.mxu0 %v1316
  %2006 = vmatpush.bf16.msra.mxu0 %v1312
  %2007 = vmatpush.bf16.msra.mxu0 %v1308
  %2008 = vmatpush.bf16.msra.mxu0 %v1304
  %2009 = vmatpush.bf16.msra.mxu0 %v1300
  %2010 = vmatpush.bf16.msra.mxu0 %v1296
  %2011 = vmatmul.bf16.gmra.mxu0 %v323
  %v2012 = vpop.f32.mrf.mxu0
  %v2013 = vadd.f32 %v2000, %v2012
  %v2014 = vpop.f32.mrf.mxu0
  %2015 = vdwg.mxu0
  %2016 = vmatpush.bf16.msra.mxu0 %v1356
  %2017 = vmatpush.bf16.msra.mxu0 %v1352
  %2018 = vmatpush.bf16.msra.mxu0 %v1348
  %2019 = vmatpush.bf16.msra.mxu0 %v1344
  %2020 = vmatpush.bf16.msra.mxu0 %v1340
  %2021 = vmatpush.bf16.msra.mxu0 %v1336
  %2022 = vmatpush.bf16.msra.mxu0 %v1332
  %2023 = vmatpush.bf16.msra.mxu0 %v1328
  %2024 = vmatmul.bf16.gmra.mxu0 %v324
  %v2025 = vpop.f32.mrf.mxu0
  %v2026 = vadd.f32 %v2013, %v2025
  %v2027 = vpop.f32.mrf.mxu0
  %2028 = vdwg.mxu0
  %v2029 = vmax.f32 %v1714, 0.0
  %v2030 = vmax.f32 %v1818, 0.0
  %v2031 = vmax.f32 %v1922, 0.0
  %v2032 = vmax.f32 %v2026, 0.0
  %v2033 = vpack.c.bf16 %v2029, %v2029
  %v2034 = vpack.c.bf16 %v2030, %v2030
  %v2035 = vpack.c.bf16 %v2031, %v2031
  %v2036 = vpack.c.bf16 %v2032, %v2032
  %v2037 = vld [vmem:[%s4] sm:$0xff]
  %v2038 = vld [vmem:[%s4 + $0x8] sm:$0xff]
  %v2039 = vld [vmem:[%s4 + $0x10] sm:$0xff]
  %v2040 = vld [vmem:[%s4 + $0x18] sm:$0xff]
  %v2041 = vld [vmem:[%s4 + $0x20] sm:$0xff]
  %v2042 = vld [vmem:[%s4 + $0x28] sm:$0xff]
  %v2043 = vld [vmem:[%s4 + $0x30] sm:$0xff]
  %v2044 = vld [vmem:[%s4 + $0x38] sm:$0xff]
  %v2045 = vld [vmem:[%s4 + $0x40] sm:$0xff]
  %v2046 = vld [vmem:[%s4 + $0x48] sm:$0xff]
  %v2047 = vld [vmem:[%s4 + $0x50] sm:$0xff]
  %v2048 = vld [vmem:[%s4 + $0x58] sm:$0xff]
  %v2049 = vld [vmem:[%s4 + $0x60] sm:$0xff]
  %v2050 = vld [vmem:[%s4 + $0x68] sm:$0xff]
  %v2051 = vld [vmem:[%s4 + $0x70] sm:$0xff]
  %v2052 = vld [vmem:[%s4 + $0x78] sm:$0xff]
  %v2053 = vld [vmem:[%s4 + $0x80] sm:$0xff]
  %v2054 = vld [vmem:[%s4 + $0x88] sm:$0xff]
  %v2055 = vld [vmem:[%s4 + $0x90] sm:$0xff]
  %v2056 = vld [vmem:[%s4 + $0x98] sm:$0xff]
  %v2057 = vld [vmem:[%s4 + $0xa0] sm:$0xff]
  %v2058 = vld [vmem:[%s4 + $0xa8] sm:$0xff]
  %v2059 = vld [vmem:[%s4 + $0xb0] sm:$0xff]
  %v2060 = vld [vmem:[%s4 + $0xb8] sm:$0xff]
  %v2061 = vld [vmem:[%s4 + $0xc0] sm:$0xff]
  %v2062 = vld [vmem:[%s4 + $0xc8] sm:$0xff]
  %v2063 = vld [vmem:[%s4 + $0xd0] sm:$0xff]
  %v2064 = vld [vmem:[%s4 + $0xd8] sm:$0xff]
  %v2065 = vld [vmem:[%s4 + $0xe0] sm:$0xff]
  %v2066 = vld [vmem:[%s4 + $0xe8] sm:$0xff]
  %v2067 = vld [vmem:[%s4 + $0xf0] sm:$0xff]
  %v2068 = vld [vmem:[%s4 + $0xf8] sm:$0xff]
  %v2069 = vld [vmem:[%s4 + $0x100] sm:$0xff]
  %v2070 = vld [vmem:[%s4 + $0x108] sm:$0xff]
  %v2071 = vld [vmem:[%s4 + $0x110] sm:$0xff]
  %v2072 = vld [vmem:[%s4 + $0x118] sm:$0xff]
  %v2073 = vld [vmem:[%s4 + $0x120] sm:$0xff]
  %v2074 = vld [vmem:[%s4 + $0x128] sm:$0xff]
  %v2075 = vld [vmem:[%s4 + $0x130] sm:$0xff]
  %v2076 = vld [vmem:[%s4 + $0x138] sm:$0xff]
  %v2077 = vld [vmem:[%s4 + $0x140] sm:$0xff]
  %v2078 = vld [vmem:[%s4 + $0x148] sm:$0xff]
  %v2079 = vld [vmem:[%s4 + $0x150] sm:$0xff]
  %v2080 = vld [vmem:[%s4 + $0x158] sm:$0xff]
  %v2081 = vld [vmem:[%s4 + $0x160] sm:$0xff]
  %v2082 = vld [vmem:[%s4 + $0x168] sm:$0xff]
  %v2083 = vld [vmem:[%s4 + $0x170] sm:$0xff]
  %v2084 = vld [vmem:[%s4 + $0x178] sm:$0xff]
  %v2085 = vld [vmem:[%s4 + $0x180] sm:$0xff]
  %v2086 = vld [vmem:[%s4 + $0x188] sm:$0xff]
  %v2087 = vld [vmem:[%s4 + $0x190] sm:$0xff]
  %v2088 = vld [vmem:[%s4 + $0x198] sm:$0xff]
  %v2089 = vld [vmem:[%s4 + $0x1a0] sm:$0xff]
  %v2090 = vld [vmem:[%s4 + $0x1a8] sm:$0xff]
  %v2091 = vld [vmem:[%s4 + $0x1b0] sm:$0xff]
  %v2092 = vld [vmem:[%s4 + $0x1b8] sm:$0xff]
  %v2093 = vld [vmem:[%s4 + $0x1c0] sm:$0xff]
  %v2094 = vld [vmem:[%s4 + $0x1c8] sm:$0xff]
  %v2095 = vld [vmem:[%s4 + $0x1d0] sm:$0xff]
  %v2096 = vld [vmem:[%s4 + $0x1d8] sm:$0xff]
  %v2097 = vld [vmem:[%s4 + $0x1e0] sm:$0xff]
  %v2098 = vld [vmem:[%s4 + $0x1e8] sm:$0xff]
  %v2099 = vld [vmem:[%s4 + $0x1f0] sm:$0xff]
  %v2100 = vld [vmem:[%s4 + $0x1f8] sm:$0xff]
  %v2101 = vld [vmem:[%s5] sm:$0x3]
  %v2103 = vperm.slane %v2101, 0
  %v2104 = vperm.slane %v2101, 1
  %v2171 = vunpack.c.l.b16 %v2037
  %v2172 = vunpack.c.h.b16 %v2037
  %v2173 = vunpack.c.l.b16 %v2038
  %v2174 = vunpack.c.h.b16 %v2038
  %v2175 = vunpack.c.l.b16 %v2039
  %v2176 = vunpack.c.h.b16 %v2039
  %v2177 = vunpack.c.l.b16 %v2040
  %v2178 = vunpack.c.h.b16 %v2040
  %v2179 = vunpack.c.l.b16 %v2041
  %v2180 = vunpack.c.h.b16 %v2041
  %v2181 = vunpack.c.l.b16 %v2042
  %v2182 = vunpack.c.h.b16 %v2042
  %v2183 = vunpack.c.l.b16 %v2043
  %v2184 = vunpack.c.h.b16 %v2043
  %v2185 = vunpack.c.l.b16 %v2044
  %v2186 = vunpack.c.h.b16 %v2044
  %v2187 = vunpack.c.l.b16 %v2045
  %v2188 = vunpack.c.h.b16 %v2045
  %v2189 = vunpack.c.l.b16 %v2046
  %v2190 = vunpack.c.h.b16 %v2046
  %v2191 = vunpack.c.l.b16 %v2047
  %v2192 = vunpack.c.h.b16 %v2047
  %v2193 = vunpack.c.l.b16 %v2048
  %v2194 = vunpack.c.h.b16 %v2048
  %v2195 = vunpack.c.l.b16 %v2049
  %v2196 = vunpack.c.h.b16 %v2049
  %v2197 = vunpack.c.l.b16 %v2050
  %v2198 = vunpack.c.h.b16 %v2050
  %v2199 = vunpack.c.l.b16 %v2051
  %v2200 = vunpack.c.h.b16 %v2051
  %v2201 = vunpack.c.l.b16 %v2052
  %v2202 = vunpack.c.h.b16 %v2052
  %v2203 = vunpack.c.l.b16 %v2053
  %v2204 = vunpack.c.h.b16 %v2053
  %v2205 = vunpack.c.l.b16 %v2054
  %v2206 = vunpack.c.h.b16 %v2054
  %v2207 = vunpack.c.l.b16 %v2055
  %v2208 = vunpack.c.h.b16 %v2055
  %v2209 = vunpack.c.l.b16 %v2056
  %v2210 = vunpack.c.h.b16 %v2056
  %v2211 = vunpack.c.l.b16 %v2057
  %v2212 = vunpack.c.h.b16 %v2057
  %v2213 = vunpack.c.l.b16 %v2058
  %v2214 = vunpack.c.h.b16 %v2058
  %v2215 = vunpack.c.l.b16 %v2059
  %v2216 = vunpack.c.h.b16 %v2059
  %v2217 = vunpack.c.l.b16 %v2060
  %v2218 = vunpack.c.h.b16 %v2060
  %v2219 = vunpack.c.l.b16 %v2061
  %v2220 = vunpack.c.h.b16 %v2061
  %v2221 = vunpack.c.l.b16 %v2062
  %v2222 = vunpack.c.h.b16 %v2062
  %v2223 = vunpack.c.l.b16 %v2063
  %v2224 = vunpack.c.h.b16 %v2063
  %v2225 = vunpack.c.l.b16 %v2064
  %v2226 = vunpack.c.h.b16 %v2064
  %v2227 = vunpack.c.l.b16 %v2065
  %v2228 = vunpack.c.h.b16 %v2065
  %v2229 = vunpack.c.l.b16 %v2066
  %v2230 = vunpack.c.h.b16 %v2066
  %v2231 = vunpack.c.l.b16 %v2067
  %v2232 = vunpack.c.h.b16 %v2067
  %v2233 = vunpack.c.l.b16 %v2068
  %v2234 = vunpack.c.h.b16 %v2068
  %v2235 = vunpack.c.l.b16 %v2069
  %v2236 = vunpack.c.h.b16 %v2069
  %v2237 = vunpack.c.l.b16 %v2070
  %v2238 = vunpack.c.h.b16 %v2070
  %v2239 = vunpack.c.l.b16 %v2071
  %v2240 = vunpack.c.h.b16 %v2071
  %v2241 = vunpack.c.l.b16 %v2072
  %v2242 = vunpack.c.h.b16 %v2072
  %v2243 = vunpack.c.l.b16 %v2073
  %v2244 = vunpack.c.h.b16 %v2073
  %v2245 = vunpack.c.l.b16 %v2074
  %v2246 = vunpack.c.h.b16 %v2074
  %v2247 = vunpack.c.l.b16 %v2075
  %v2248 = vunpack.c.h.b16 %v2075
  %v2249 = vunpack.c.l.b16 %v2076
  %v2250 = vunpack.c.h.b16 %v2076
  %v2251 = vunpack.c.l.b16 %v2077
  %v2252 = vunpack.c.h.b16 %v2077
  %v2253 = vunpack.c.l.b16 %v2078
  %v2254 = vunpack.c.h.b16 %v2078
  %v2255 = vunpack.c.l.b16 %v2079
  %v2256 = vunpack.c.h.b16 %v2079
  %v2257 = vunpack.c.l.b16 %v2080
  %v2258 = vunpack.c.h.b16 %v2080
  %v2259 = vunpack.c.l.b16 %v2081
  %v2260 = vunpack.c.h.b16 %v2081
  %v2261 = vunpack.c.l.b16 %v2082
  %v2262 = vunpack.c.h.b16 %v2082
  %v2263 = vunpack.c.l.b16 %v2083
  %v2264 = vunpack.c.h.b16 %v2083
  %v2265 = vunpack.c.l.b16 %v2084
  %v2266 = vunpack.c.h.b16 %v2084
  %v2267 = vunpack.c.l.b16 %v2085
  %v2268 = vunpack.c.h.b16 %v2085
  %v2269 = vunpack.c.l.b16 %v2086
  %v2270 = vunpack.c.h.b16 %v2086
  %v2271 = vunpack.c.l.b16 %v2087
  %v2272 = vunpack.c.h.b16 %v2087
  %v2273 = vunpack.c.l.b16 %v2088
  %v2274 = vunpack.c.h.b16 %v2088
  %v2275 = vunpack.c.l.b16 %v2089
  %v2276 = vunpack.c.h.b16 %v2089
  %v2277 = vunpack.c.l.b16 %v2090
  %v2278 = vunpack.c.h.b16 %v2090
  %v2279 = vunpack.c.l.b16 %v2091
  %v2280 = vunpack.c.h.b16 %v2091
  %v2281 = vunpack.c.l.b16 %v2092
  %v2282 = vunpack.c.h.b16 %v2092
  %v2283 = vunpack.c.l.b16 %v2093
  %v2284 = vunpack.c.h.b16 %v2093
  %v2285 = vunpack.c.l.b16 %v2094
  %v2286 = vunpack.c.h.b16 %v2094
  %v2287 = vunpack.c.l.b16 %v2095
  %v2288 = vunpack.c.h.b16 %v2095
  %v2289 = vunpack.c.l.b16 %v2096
  %v2290 = vunpack.c.h.b16 %v2096
  %v2291 = vunpack.c.l.b16 %v2097
  %v2292 = vunpack.c.h.b16 %v2097
  %v2293 = vunpack.c.l.b16 %v2098
  %v2294 = vunpack.c.h.b16 %v2098
  %v2295 = vunpack.c.l.b16 %v2099
  %v2296 = vunpack.c.h.b16 %v2099
  %v2297 = vunpack.c.l.b16 %v2100
  %v2298 = vunpack.c.h.b16 %v2100
  %v2299 = vpack.c.b16 %v2173, %v2171
  %v2300 = vpack.c.b16 %v2174, %v2172
  %v2301 = vpack.c.b16 %v2177, %v2175
  %v2302 = vpack.c.b16 %v2178, %v2176
  %v2303 = vpack.c.b16 %v2181, %v2179
  %v2304 = vpack.c.b16 %v2182, %v2180
  %v2305 = vpack.c.b16 %v2185, %v2183
  %v2306 = vpack.c.b16 %v2186, %v2184
  %v2307 = vpack.c.b16 %v2189, %v2187
  %v2308 = vpack.c.b16 %v2190, %v2188
  %v2309 = vpack.c.b16 %v2193, %v2191
  %v2310 = vpack.c.b16 %v2194, %v2192
  %v2311 = vpack.c.b16 %v2197, %v2195
  %v2312 = vpack.c.b16 %v2198, %v2196
  %v2313 = vpack.c.b16 %v2201, %v2199
  %v2314 = vpack.c.b16 %v2202, %v2200
  %v2315 = vpack.c.b16 %v2205, %v2203
  %v2316 = vpack.c.b16 %v2206, %v2204
  %v2317 = vpack.c.b16 %v2209, %v2207
  %v2318 = vpack.c.b16 %v2210, %v2208
  %v2319 = vpack.c.b16 %v2213, %v2211
  %v2320 = vpack.c.b16 %v2214, %v2212
  %v2321 = vpack.c.b16 %v2217, %v2215
  %v2322 = vpack.c.b16 %v2218, %v2216
  %v2323 = vpack.c.b16 %v2221, %v2219
  %v2324 = vpack.c.b16 %v2222, %v2220
  %v2325 = vpack.c.b16 %v2225, %v2223
  %v2326 = vpack.c.b16 %v2226, %v2224
  %v2327 = vpack.c.b16 %v2229, %v2227
  %v2328 = vpack.c.b16 %v2230, %v2228
  %v2329 = vpack.c.b16 %v2233, %v2231
  %v2330 = vpack.c.b16 %v2234, %v2232
  %v2331 = vpack.c.b16 %v2237, %v2235
  %v2332 = vpack.c.b16 %v2238, %v2236
  %v2333 = vpack.c.b16 %v2241, %v2239
  %v2334 = vpack.c.b16 %v2242, %v2240
  %v2335 = vpack.c.b16 %v2245, %v2243
  %v2336 = vpack.c.b16 %v2246, %v2244
  %v2337 = vpack.c.b16 %v2249, %v2247
  %v2338 = vpack.c.b16 %v2250, %v2248
  %v2339 = vpack.c.b16 %v2253, %v2251
  %v2340 = vpack.c.b16 %v2254, %v2252
  %v2341 = vpack.c.b16 %v2257, %v2255
  %v2342 = vpack.c.b16 %v2258, %v2256
  %v2343 = vpack.c.b16 %v2261, %v2259
  %v2344 = vpack.c.b16 %v2262, %v2260
  %v2345 = vpack.c.b16 %v2265, %v2263
  %v2346 = vpack.c.b16 %v2266, %v2264
  %v2347 = vpack.c.b16 %v2269, %v2267
  %v2348 = vpack.c.b16 %v2270, %v2268
  %v2349 = vpack.c.b16 %v2273, %v2271
  %v2350 = vpack.c.b16 %v2274, %v2272
  %v2351 = vpack.c.b16 %v2277, %v2275
  %v2352 = vpack.c.b16 %v2278, %v2276
  %v2353 = vpack.c.b16 %v2281, %v2279
  %v2354 = vpack.c.b16 %v2282, %v2280
  %v2355 = vpack.c.b16 %v2285, %v2283
  %v2356 = vpack.c.b16 %v2286, %v2284
  %v2357 = vpack.c.b16 %v2289, %v2287
  %v2358 = vpack.c.b16 %v2290, %v2288
  %v2359 = vpack.c.b16 %v2293, %v2291
  %v2360 = vpack.c.b16 %v2294, %v2292
  %v2361 = vpack.c.b16 %v2297, %v2295
  %v2362 = vpack.c.b16 %v2298, %v2296
  %2427 = vmatpush.bf16.msra.mxu0 %v2313
  %2428 = vmatpush.bf16.msra.mxu0 %v2311
  %2429 = vmatpush.bf16.msra.mxu0 %v2309
  %2430 = vmatpush.bf16.msra.mxu0 %v2307
  %2431 = vmatpush.bf16.msra.mxu0 %v2305
  %2432 = vmatpush.bf16.msra.mxu0 %v2303
  %2433 = vmatpush.bf16.msra.mxu0 %v2301
  %2434 = vmatpush.bf16.msra.mxu0 %v2299
  %2435 = vmatmul.bf16.gmra.mxu0 %v2033
  %v2436 = vpop.f32.mrf.mxu0
  %v2437 = vadd.f32 %v2103, %v2436
  %v2438 = vpop.f32.mrf.mxu0
  %2439 = vdwg.mxu0
  %2440 = vmatpush.bf16.msra.mxu0 %v2329
  %2441 = vmatpush.bf16.msra.mxu0 %v2327
  %2442 = vmatpush.bf16.msra.mxu0 %v2325
  %2443 = vmatpush.bf16.msra.mxu0 %v2323
  %2444 = vmatpush.bf16.msra.mxu0 %v2321
  %2445 = vmatpush.bf16.msra.mxu0 %v2319
  %2446 = vmatpush.bf16.msra.mxu0 %v2317
  %2447 = vmatpush.bf16.msra.mxu0 %v2315
  %2448 = vmatmul.bf16.gmra.mxu0 %v2034
  %v2449 = vpop.f32.mrf.mxu0
  %v2450 = vadd.f32 %v2437, %v2449
  %v2451 = vpop.f32.mrf.mxu0
  %2452 = vdwg.mxu0
  %2453 = vmatpush.bf16.msra.mxu0 %v2345
  %2454 = vmatpush.bf16.msra.mxu0 %v2343
  %2455 = vmatpush.bf16.msra.mxu0 %v2341
  %2456 = vmatpush.bf16.msra.mxu0 %v2339
  %2457 = vmatpush.bf16.msra.mxu0 %v2337
  %2458 = vmatpush.bf16.msra.mxu0 %v2335
  %2459 = vmatpush.bf16.msra.mxu0 %v2333
  %2460 = vmatpush.bf16.msra.mxu0 %v2331
  %2461 = vmatmul.bf16.gmra.mxu0 %v2035
  %v2462 = vpop.f32.mrf.mxu0
  %v2463 = vadd.f32 %v2450, %v2462
  %v2464 = vpop.f32.mrf.mxu0
  %2465 = vdwg.mxu0
  %2466 = vmatpush.bf16.msra.mxu0 %v2361
  %2467 = vmatpush.bf16.msra.mxu0 %v2359
  %2468 = vmatpush.bf16.msra.mxu0 %v2357
  %2469 = vmatpush.bf16.msra.mxu0 %v2355
  %2470 = vmatpush.bf16.msra.mxu0 %v2353
  %2471 = vmatpush.bf16.msra.mxu0 %v2351
  %2472 = vmatpush.bf16.msra.mxu0 %v2349
  %2473 = vmatpush.bf16.msra.mxu0 %v2347
  %2474 = vmatmul.bf16.gmra.mxu0 %v2036
  %v2475 = vpop.f32.mrf.mxu0
  %v2476 = vadd.f32 %v2463, %v2475
  %v2477 = vpop.f32.mrf.mxu0
  %2478 = vdwg.mxu0
  %2479 = vmatpush.bf16.msra.mxu0 %v2314
  %2480 = vmatpush.bf16.msra.mxu0 %v2312
  %2481 = vmatpush.bf16.msra.mxu0 %v2310
  %2482 = vmatpush.bf16.msra.mxu0 %v2308
  %2483 = vmatpush.bf16.msra.mxu0 %v2306
  %2484 = vmatpush.bf16.msra.mxu0 %v2304
  %2485 = vmatpush.bf16.msra.mxu0 %v2302
  %2486 = vmatpush.bf16.msra.mxu0 %v2300
  %2487 = vmatmul.bf16.gmra.mxu0 %v2033
  %v2488 = vpop.f32.mrf.mxu0
  %v2489 = vadd.f32 %v2104, %v2488
  %v2490 = vpop.f32.mrf.mxu0
  %2491 = vdwg.mxu0
  %2492 = vmatpush.bf16.msra.mxu0 %v2330
  %2493 = vmatpush.bf16.msra.mxu0 %v2328
  %2494 = vmatpush.bf16.msra.mxu0 %v2326
  %2495 = vmatpush.bf16.msra.mxu0 %v2324
  %2496 = vmatpush.bf16.msra.mxu0 %v2322
  %2497 = vmatpush.bf16.msra.mxu0 %v2320
  %2498 = vmatpush.bf16.msra.mxu0 %v2318
  %2499 = vmatpush.bf16.msra.mxu0 %v2316
  %2500 = vmatmul.bf16.gmra.mxu0 %v2034
  %v2501 = vpop.f32.mrf.mxu0
  %v2502 = vadd.f32 %v2489, %v2501
  %v2503 = vpop.f32.mrf.mxu0
  %2504 = vdwg.mxu0
  %2505 = vmatpush.bf16.msra.mxu0 %v2346
  %2506 = vmatpush.bf16.msra.mxu0 %v2344
  %2507 = vmatpush.bf16.msra.mxu0 %v2342
  %2508 = vmatpush.bf16.msra.mxu0 %v2340
  %2509 = vmatpush.bf16.msra.mxu0 %v2338
  %2510 = vmatpush.bf16.msra.mxu0 %v2336
  %2511 = vmatpush.bf16.msra.mxu0 %v2334
  %2512 = vmatpush.bf16.msra.mxu0 %v2332
  %2513 = vmatmul.bf16.gmra.mxu0 %v2035
  %v2514 = vpop.f32.mrf.mxu0
  %v2515 = vadd.f32 %v2502, %v2514
  %v2516 = vpop.f32.mrf.mxu0
  %2517 = vdwg.mxu0
  %2518 = vmatpush.bf16.msra.mxu0 %v2362
  %2519 = vmatpush.bf16.msra.mxu0 %v2360
  %2520 = vmatpush.bf16.msra.mxu0 %v2358
  %2521 = vmatpush.bf16.msra.mxu0 %v2356
  %2522 = vmatpush.bf16.msra.mxu0 %v2354
  %2523 = vmatpush.bf16.msra.mxu0 %v2352
  %2524 = vmatpush.bf16.msra.mxu0 %v2350
  %2525 = vmatpush.bf16.msra.mxu0 %v2348
  %2526 = vmatmul.bf16.gmra.mxu0 %v2036
  %v2527 = vpop.f32.mrf.mxu0
  %v2528 = vadd.f32 %v2515, %v2527
  %v2529 = vpop.f32.mrf.mxu0
  %2530 = vdwg.mxu0
  %v2531 = vld [vmem:[%s1] sm:$0xff]
  %v2532 = vmul.f32 %v2528, 0.5
  %v2533 = vmul.f32 %v2532, 1.442695
  %v2534 = vpow.pop %v2533
  %v2535 = vmul.f32 %v2531, %v2534
  %v2536 = vadd.f32 %v2535, %v2476
  %v2537 = vpack.c.bf16 %v2536, %v2536
  %v2538 = vld [vmem:[%s6] sm:$0xff]
  %v2539 = vld [vmem:[%s6 + $0x8] sm:$0xff]
  %v2540 = vld [vmem:[%s6 + $0x10] sm:$0xff]
  %v2541 = vld [vmem:[%s6 + $0x18] sm:$0xff]
  %v2542 = vld [vmem:[%s6 + $0x20] sm:$0xff]
  %v2543 = vld [vmem:[%s6 + $0x28] sm:$0xff]
  %v2544 = vld [vmem:[%s6 + $0x30] sm:$0xff]
  %v2545 = vld [vmem:[%s6 + $0x38] sm:$0xff]
  %v2546 = vld [vmem:[%s6 + $0x40] sm:$0xff]
  %v2547 = vld [vmem:[%s6 + $0x48] sm:$0xff]
  %v2548 = vld [vmem:[%s6 + $0x50] sm:$0xff]
  %v2549 = vld [vmem:[%s6 + $0x58] sm:$0xff]
  %v2550 = vld [vmem:[%s6 + $0x60] sm:$0xff]
  %v2551 = vld [vmem:[%s6 + $0x68] sm:$0xff]
  %v2552 = vld [vmem:[%s6 + $0x70] sm:$0xff]
  %v2553 = vld [vmem:[%s6 + $0x78] sm:$0xff]
  %v2554 = vld [vmem:[%s6 + $0x80] sm:$0xff]
  %v2555 = vld [vmem:[%s6 + $0x88] sm:$0xff]
  %v2556 = vld [vmem:[%s6 + $0x90] sm:$0xff]
  %v2557 = vld [vmem:[%s6 + $0x98] sm:$0xff]
  %v2558 = vld [vmem:[%s6 + $0xa0] sm:$0xff]
  %v2559 = vld [vmem:[%s6 + $0xa8] sm:$0xff]
  %v2560 = vld [vmem:[%s6 + $0xb0] sm:$0xff]
  %v2561 = vld [vmem:[%s6 + $0xb8] sm:$0xff]
  %v2562 = vld [vmem:[%s6 + $0xc0] sm:$0xff]
  %v2563 = vld [vmem:[%s6 + $0xc8] sm:$0xff]
  %v2564 = vld [vmem:[%s6 + $0xd0] sm:$0xff]
  %v2565 = vld [vmem:[%s6 + $0xd8] sm:$0xff]
  %v2566 = vld [vmem:[%s6 + $0xe0] sm:$0xff]
  %v2567 = vld [vmem:[%s6 + $0xe8] sm:$0xff]
  %v2568 = vld [vmem:[%s6 + $0xf0] sm:$0xff]
  %v2569 = vld [vmem:[%s6 + $0xf8] sm:$0xff]
  %v2570 = vld [vmem:[%s7] sm:$0xf]
  %v2572 = vperm.slane %v2570, 0
  %v2573 = vperm.slane %v2570, 1
  %v2574 = vperm.slane %v2570, 2
  %v2575 = vperm.slane %v2570, 3
  %v2612 = vunpack.c.l.b16 %v2538
  %v2613 = vunpack.c.h.b16 %v2538
  %v2614 = vunpack.c.l.b16 %v2539
  %v2615 = vunpack.c.h.b16 %v2539
  %v2616 = vunpack.c.l.b16 %v2540
  %v2617 = vunpack.c.h.b16 %v2540
  %v2618 = vunpack.c.l.b16 %v2541
  %v2619 = vunpack.c.h.b16 %v2541
  %v2620 = vunpack.c.l.b16 %v2542
  %v2621 = vunpack.c.h.b16 %v2542
  %v2622 = vunpack.c.l.b16 %v2543
  %v2623 = vunpack.c.h.b16 %v2543
  %v2624 = vunpack.c.l.b16 %v2544
  %v2625 = vunpack.c.h.b16 %v2544
  %v2626 = vunpack.c.l.b16 %v2545
  %v2627 = vunpack.c.h.b16 %v2545
  %v2628 = vunpack.c.l.b16 %v2546
  %v2629 = vunpack.c.h.b16 %v2546
  %v2630 = vunpack.c.l.b16 %v2547
  %v2631 = vunpack.c.h.b16 %v2547
  %v2632 = vunpack.c.l.b16 %v2548
  %v2633 = vunpack.c.h.b16 %v2548
  %v2634 = vunpack.c.l.b16 %v2549
  %v2635 = vunpack.c.h.b16 %v2549
  %v2636 = vunpack.c.l.b16 %v2550
  %v2637 = vunpack.c.h.b16 %v2550
  %v2638 = vunpack.c.l.b16 %v2551
  %v2639 = vunpack.c.h.b16 %v2551
  %v2640 = vunpack.c.l.b16 %v2552
  %v2641 = vunpack.c.h.b16 %v2552
  %v2642 = vunpack.c.l.b16 %v2553
  %v2643 = vunpack.c.h.b16 %v2553
  %v2644 = vunpack.c.l.b16 %v2554
  %v2645 = vunpack.c.h.b16 %v2554
  %v2646 = vunpack.c.l.b16 %v2555
  %v2647 = vunpack.c.h.b16 %v2555
  %v2648 = vunpack.c.l.b16 %v2556
  %v2649 = vunpack.c.h.b16 %v2556
  %v2650 = vunpack.c.l.b16 %v2557
  %v2651 = vunpack.c.h.b16 %v2557
  %v2652 = vunpack.c.l.b16 %v2558
  %v2653 = vunpack.c.h.b16 %v2558
  %v2654 = vunpack.c.l.b16 %v2559
  %v2655 = vunpack.c.h.b16 %v2559
  %v2656 = vunpack.c.l.b16 %v2560
  %v2657 = vunpack.c.h.b16 %v2560
  %v2658 = vunpack.c.l.b16 %v2561
  %v2659 = vunpack.c.h.b16 %v2561
  %v2660 = vunpack.c.l.b16 %v2562
  %v2661 = vunpack.c.h.b16 %v2562
  %v2662 = vunpack.c.l.b16 %v2563
  %v2663 = vunpack.c.h.b16 %v2563
  %v2664 = vunpack.c.l.b16 %v2564
  %v2665 = vunpack.c.h.b16 %v2564
  %v2666 = vunpack.c.l.b16 %v2565
  %v2667 = vunpack.c.h.b16 %v2565
  %v2668 = vunpack.c.l.b16 %v2566
  %v2669 = vunpack.c.h.b16 %v2566
  %v2670 = vunpack.c.l.b16 %v2567
  %v2671 = vunpack.c.h.b16 %v2567
  %v2672 = vunpack.c.l.b16 %v2568
  %v2673 = vunpack.c.h.b16 %v2568
  %v2674 = vunpack.c.l.b16 %v2569
  %v2675 = vunpack.c.h.b16 %v2569
  %v2676 = vpack.c.b16 %v2616, %v2612
  %v2677 = vpack.c.b16 %v2617, %v2613
  %v2678 = vpack.c.b16 %v2618, %v2614
  %v2679 = vpack.c.b16 %v2619, %v2615
  %v2680 = vpack.c.b16 %v2624, %v2620
  %v2681 = vpack.c.b16 %v2625, %v2621
  %v2682 = vpack.c.b16 %v2626, %v2622
  %v2683 = vpack.c.b16 %v2627, %v2623
  %v2684 = vpack.c.b16 %v2632, %v2628
  %v2685 = vpack.c.b16 %v2633, %v2629
  %v2686 = vpack.c.b16 %v2634, %v2630
  %v2687 = vpack.c.b16 %v2635, %v2631
  %v2688 = vpack.c.b16 %v2640, %v2636
  %v2689 = vpack.c.b16 %v2641, %v2637
  %v2690 = vpack.c.b16 %v2642, %v2638
  %v2691 = vpack.c.b16 %v2643, %v2639
  %v2692 = vpack.c.b16 %v2648, %v2644
  %v2693 = vpack.c.b16 %v2649, %v2645
  %v2694 = vpack.c.b16 %v2650, %v2646
  %v2695 = vpack.c.b16 %v2651, %v2647
  %v2696 = vpack.c.b16 %v2656, %v2652
  %v2697 = vpack.c.b16 %v2657, %v2653
  %v2698 = vpack.c.b16 %v2658, %v2654
  %v2699 = vpack.c.b16 %v2659, %v2655
  %v2700 = vpack.c.b16 %v2664, %v2660
  %v2701 = vpack.c.b16 %v2665, %v2661
  %v2702 = vpack.c.b16 %v2666, %v2662
  %v2703 = vpack.c.b16 %v2667, %v2663
  %v2704 = vpack.c.b16 %v2672, %v2668
  %v2705 = vpack.c.b16 %v2673, %v2669
  %v2706 = vpack.c.b16 %v2674, %v2670
  %v2707 = vpack.c.b16 %v2675, %v2671
  %2740 = vmatpush.bf16.msra.mxu0 %v2704
  %2741 = vmatpush.bf16.msra.mxu0 %v2700
  %2742 = vmatpush.bf16.msra.mxu0 %v2696
  %2743 = vmatpush.bf16.msra.mxu0 %v2692
  %2744 = vmatpush.bf16.msra.mxu0 %v2688
  %2745 = vmatpush.bf16.msra.mxu0 %v2684
  %2746 = vmatpush.bf16.msra.mxu0 %v2680
  %2747 = vmatpush.bf16.msra.mxu0 %v2676
  %2748 = vmatmul.bf16.gmra.mxu0 %v2537
  %v2749 = vpop.f32.mrf.mxu0
  %v2750 = vadd.f32 %v2572, %v2749
  %v2751 = vpop.f32.mrf.mxu0
  %2752 = vdwg.mxu0
  %2753 = vmatpush.bf16.msra.mxu0 %v2705
  %2754 = vmatpush.bf16.msra.mxu0 %v2701
  %2755 = vmatpush.bf16.msra.mxu0 %v2697
  %2756 = vmatpush.bf16.msra.mxu0 %v2693
  %2757 = vmatpush.bf16.msra.mxu0 %v2689
  %2758 = vmatpush.bf16.msra.mxu0 %v2685
  %2759 = vmatpush.bf16.msra.mxu0 %v2681
  %2760 = vmatpush.bf16.msra.mxu0 %v2677
  %2761 = vmatmul.bf16.gmra.mxu0 %v2537
  %v2762 = vpop.f32.mrf.mxu0
  %v2763 = vadd.f32 %v2573, %v2762
  %v2764 = vpop.f32.mrf.mxu0
  %2765 = vdwg.mxu0
  %2766 = vmatpush.bf16.msra.mxu0 %v2706
  %2767 = vmatpush.bf16.msra.mxu0 %v2702
  %2768 = vmatpush.bf16.msra.mxu0 %v2698
  %2769 = vmatpush.bf16.msra.mxu0 %v2694
  %2770 = vmatpush.bf16.msra.mxu0 %v2690
  %2771 = vmatpush.bf16.msra.mxu0 %v2686
  %2772 = vmatpush.bf16.msra.mxu0 %v2682
  %2773 = vmatpush.bf16.msra.mxu0 %v2678
  %2774 = vmatmul.bf16.gmra.mxu0 %v2537
  %v2775 = vpop.f32.mrf.mxu0
  %v2776 = vadd.f32 %v2574, %v2775
  %v2777 = vpop.f32.mrf.mxu0
  %2778 = vdwg.mxu0
  %2779 = vmatpush.bf16.msra.mxu0 %v2707
  %2780 = vmatpush.bf16.msra.mxu0 %v2703
  %2781 = vmatpush.bf16.msra.mxu0 %v2699
  %2782 = vmatpush.bf16.msra.mxu0 %v2695
  %2783 = vmatpush.bf16.msra.mxu0 %v2691
  %2784 = vmatpush.bf16.msra.mxu0 %v2687
  %2785 = vmatpush.bf16.msra.mxu0 %v2683
  %2786 = vmatpush.bf16.msra.mxu0 %v2679
  %2787 = vmatmul.bf16.gmra.mxu0 %v2537
  %v2788 = vpop.f32.mrf.mxu0
  %v2789 = vadd.f32 %v2575, %v2788
  %v2790 = vpop.f32.mrf.mxu0
  %2791 = vdwg.mxu0
  %v2792 = vmax.f32 %v2750, 0.0
  %v2793 = vmax.f32 %v2763, 0.0
  %v2794 = vmax.f32 %v2776, 0.0
  %v2795 = vmax.f32 %v2789, 0.0
  %v2796 = vpack.c.bf16 %v2792, %v2792
  %v2797 = vpack.c.bf16 %v2793, %v2793
  %v2798 = vpack.c.bf16 %v2794, %v2794
  %v2799 = vpack.c.bf16 %v2795, %v2795
  %v2800 = vld [vmem:[%s8] sm:$0xff]
  %v2801 = vld [vmem:[%s8 + $0x8] sm:$0xff]
  %v2802 = vld [vmem:[%s8 + $0x10] sm:$0xff]
  %v2803 = vld [vmem:[%s8 + $0x18] sm:$0xff]
  %v2804 = vld [vmem:[%s8 + $0x20] sm:$0xff]
  %v2805 = vld [vmem:[%s8 + $0x28] sm:$0xff]
  %v2806 = vld [vmem:[%s8 + $0x30] sm:$0xff]
  %v2807 = vld [vmem:[%s8 + $0x38] sm:$0xff]
  %v2808 = vld [vmem:[%s8 + $0x40] sm:$0xff]
  %v2809 = vld [vmem:[%s8 + $0x48] sm:$0xff]
  %v2810 = vld [vmem:[%s8 + $0x50] sm:$0xff]
  %v2811 = vld [vmem:[%s8 + $0x58] sm:$0xff]
  %v2812 = vld [vmem:[%s8 + $0x60] sm:$0xff]
  %v2813 = vld [vmem:[%s8 + $0x68] sm:$0xff]
  %v2814 = vld [vmem:[%s8 + $0x70] sm:$0xff]
  %v2815 = vld [vmem:[%s8 + $0x78] sm:$0xff]
  %v2816 = vld [vmem:[%s8 + $0x80] sm:$0xff]
  %v2817 = vld [vmem:[%s8 + $0x88] sm:$0xff]
  %v2818 = vld [vmem:[%s8 + $0x90] sm:$0xff]
  %v2819 = vld [vmem:[%s8 + $0x98] sm:$0xff]
  %v2820 = vld [vmem:[%s8 + $0xa0] sm:$0xff]
  %v2821 = vld [vmem:[%s8 + $0xa8] sm:$0xff]
  %v2822 = vld [vmem:[%s8 + $0xb0] sm:$0xff]
  %v2823 = vld [vmem:[%s8 + $0xb8] sm:$0xff]
  %v2824 = vld [vmem:[%s8 + $0xc0] sm:$0xff]
  %v2825 = vld [vmem:[%s8 + $0xc8] sm:$0xff]
  %v2826 = vld [vmem:[%s8 + $0xd0] sm:$0xff]
  %v2827 = vld [vmem:[%s8 + $0xd8] sm:$0xff]
  %v2828 = vld [vmem:[%s8 + $0xe0] sm:$0xff]
  %v2829 = vld [vmem:[%s8 + $0xe8] sm:$0xff]
  %v2830 = vld [vmem:[%s8 + $0xf0] sm:$0xff]
  %v2831 = vld [vmem:[%s8 + $0xf8] sm:$0xff]
  %v2832 = vld [vmem:[%s8 + $0x100] sm:$0xff]
  %v2833 = vld [vmem:[%s8 + $0x108] sm:$0xff]
  %v2834 = vld [vmem:[%s8 + $0x110] sm:$0xff]
  %v2835 = vld [vmem:[%s8 + $0x118] sm:$0xff]
  %v2836 = vld [vmem:[%s8 + $0x120] sm:$0xff]
  %v2837 = vld [vmem:[%s8 + $0x128] sm:$0xff]
  %v2838 = vld [vmem:[%s8 + $0x130] sm:$0xff]
  %v2839 = vld [vmem:[%s8 + $0x138] sm:$0xff]
  %v2840 = vld [vmem:[%s8 + $0x140] sm:$0xff]
  %v2841 = vld [vmem:[%s8 + $0x148] sm:$0xff]
  %v2842 = vld [vmem:[%s8 + $0x150] sm:$0xff]
  %v2843 = vld [vmem:[%s8 + $0x158] sm:$0xff]
  %v2844 = vld [vmem:[%s8 + $0x160] sm:$0xff]
  %v2845 = vld [vmem:[%s8 + $0x168] sm:$0xff]
  %v2846 = vld [vmem:[%s8 + $0x170] sm:$0xff]
  %v2847 = vld [vmem:[%s8 + $0x178] sm:$0xff]
  %v2848 = vld [vmem:[%s8 + $0x180] sm:$0xff]
  %v2849 = vld [vmem:[%s8 + $0x188] sm:$0xff]
  %v2850 = vld [vmem:[%s8 + $0x190] sm:$0xff]
  %v2851 = vld [vmem:[%s8 + $0x198] sm:$0xff]
  %v2852 = vld [vmem:[%s8 + $0x1a0] sm:$0xff]
  %v2853 = vld [vmem:[%s8 + $0x1a8] sm:$0xff]
  %v2854 = vld [vmem:[%s8 + $0x1b0] sm:$0xff]
  %v2855 = vld [vmem:[%s8 + $0x1b8] sm:$0xff]
  %v2856 = vld [vmem:[%s8 + $0x1c0] sm:$0xff]
  %v2857 = vld [vmem:[%s8 + $0x1c8] sm:$0xff]
  %v2858 = vld [vmem:[%s8 + $0x1d0] sm:$0xff]
  %v2859 = vld [vmem:[%s8 + $0x1d8] sm:$0xff]
  %v2860 = vld [vmem:[%s8 + $0x1e0] sm:$0xff]
  %v2861 = vld [vmem:[%s8 + $0x1e8] sm:$0xff]
  %v2862 = vld [vmem:[%s8 + $0x1f0] sm:$0xff]
  %v2863 = vld [vmem:[%s8 + $0x1f8] sm:$0xff]
  %v2864 = vld [vmem:[%s8 + $0x200] sm:$0xff]
  %v2865 = vld [vmem:[%s8 + $0x208] sm:$0xff]
  %v2866 = vld [vmem:[%s8 + $0x210] sm:$0xff]
  %v2867 = vld [vmem:[%s8 + $0x218] sm:$0xff]
  %v2868 = vld [vmem:[%s8 + $0x220] sm:$0xff]
  %v2869 = vld [vmem:[%s8 + $0x228] sm:$0xff]
  %v2870 = vld [vmem:[%s8 + $0x230] sm:$0xff]
  %v2871 = vld [vmem:[%s8 + $0x238] sm:$0xff]
  %v2872 = vld [vmem:[%s8 + $0x240] sm:$0xff]
  %v2873 = vld [vmem:[%s8 + $0x248] sm:$0xff]
  %v2874 = vld [vmem:[%s8 + $0x250] sm:$0xff]
  %v2875 = vld [vmem:[%s8 + $0x258] sm:$0xff]
  %v2876 = vld [vmem:[%s8 + $0x260] sm:$0xff]
  %v2877 = vld [vmem:[%s8 + $0x268] sm:$0xff]
  %v2878 = vld [vmem:[%s8 + $0x270] sm:$0xff]
  %v2879 = vld [vmem:[%s8 + $0x278] sm:$0xff]
  %v2880 = vld [vmem:[%s8 + $0x280] sm:$0xff]
  %v2881 = vld [vmem:[%s8 + $0x288] sm:$0xff]
  %v2882 = vld [vmem:[%s8 + $0x290] sm:$0xff]
  %v2883 = vld [vmem:[%s8 + $0x298] sm:$0xff]
  %v2884 = vld [vmem:[%s8 + $0x2a0] sm:$0xff]
  %v2885 = vld [vmem:[%s8 + $0x2a8] sm:$0xff]
  %v2886 = vld [vmem:[%s8 + $0x2b0] sm:$0xff]
  %v2887 = vld [vmem:[%s8 + $0x2b8] sm:$0xff]
  %v2888 = vld [vmem:[%s8 + $0x2c0] sm:$0xff]
  %v2889 = vld [vmem:[%s8 + $0x2c8] sm:$0xff]
  %v2890 = vld [vmem:[%s8 + $0x2d0] sm:$0xff]
  %v2891 = vld [vmem:[%s8 + $0x2d8] sm:$0xff]
  %v2892 = vld [vmem:[%s8 + $0x2e0] sm:$0xff]
  %v2893 = vld [vmem:[%s8 + $0x2e8] sm:$0xff]
  %v2894 = vld [vmem:[%s8 + $0x2f0] sm:$0xff]
  %v2895 = vld [vmem:[%s8 + $0x2f8] sm:$0xff]
  %v2896 = vld [vmem:[%s8 + $0x300] sm:$0xff]
  %v2897 = vld [vmem:[%s8 + $0x308] sm:$0xff]
  %v2898 = vld [vmem:[%s8 + $0x310] sm:$0xff]
  %v2899 = vld [vmem:[%s8 + $0x318] sm:$0xff]
  %v2900 = vld [vmem:[%s8 + $0x320] sm:$0xff]
  %v2901 = vld [vmem:[%s8 + $0x328] sm:$0xff]
  %v2902 = vld [vmem:[%s8 + $0x330] sm:$0xff]
  %v2903 = vld [vmem:[%s8 + $0x338] sm:$0xff]
  %v2904 = vld [vmem:[%s8 + $0x340] sm:$0xff]
  %v2905 = vld [vmem:[%s8 + $0x348] sm:$0xff]
  %v2906 = vld [vmem:[%s8 + $0x350] sm:$0xff]
  %v2907 = vld [vmem:[%s8 + $0x358] sm:$0xff]
  %v2908 = vld [vmem:[%s8 + $0x360] sm:$0xff]
  %v2909 = vld [vmem:[%s8 + $0x368] sm:$0xff]
  %v2910 = vld [vmem:[%s8 + $0x370] sm:$0xff]
  %v2911 = vld [vmem:[%s8 + $0x378] sm:$0xff]
  %v2912 = vld [vmem:[%s8 + $0x380] sm:$0xff]
  %v2913 = vld [vmem:[%s8 + $0x388] sm:$0xff]
  %v2914 = vld [vmem:[%s8 + $0x390] sm:$0xff]
  %v2915 = vld [vmem:[%s8 + $0x398] sm:$0xff]
  %v2916 = vld [vmem:[%s8 + $0x3a0] sm:$0xff]
  %v2917 = vld [vmem:[%s8 + $0x3a8] sm:$0xff]
  %v2918 = vld [vmem:[%s8 + $0x3b0] sm:$0xff]
  %v2919 = vld [vmem:[%s8 + $0x3b8] sm:$0xff]
  %v2920 = vld [vmem:[%s8 + $0x3c0] sm:$0xff]
  %v2921 = vld [vmem:[%s8 + $0x3c8] sm:$0xff]
  %v2922 = vld [vmem:[%s8 + $0x3d0] sm:$0xff]
  %v2923 = vld [vmem:[%s8 + $0x3d8] sm:$0xff]
  %v2924 = vld [vmem:[%s8 + $0x3e0] sm:$0xff]
  %v2925 = vld [vmem:[%s8 + $0x3e8] sm:$0xff]
  %v2926 = vld [vmem:[%s8 + $0x3f0] sm:$0xff]
  %v2927 = vld [vmem:[%s8 + $0x3f8] sm:$0xff]
  %v2928 = vld [vmem:[%s8 + $0x400] sm:$0xff]
  %v2929 = vld [vmem:[%s8 + $0x408] sm:$0xff]
  %v2930 = vld [vmem:[%s8 + $0x410] sm:$0xff]
  %v2931 = vld [vmem:[%s8 + $0x418] sm:$0xff]
  %v2932 = vld [vmem:[%s8 + $0x420] sm:$0xff]
  %v2933 = vld [vmem:[%s8 + $0x428] sm:$0xff]
  %v2934 = vld [vmem:[%s8 + $0x430] sm:$0xff]
  %v2935 = vld [vmem:[%s8 + $0x438] sm:$0xff]
  %v2936 = vld [vmem:[%s8 + $0x440] sm:$0xff]
  %v2937 = vld [vmem:[%s8 + $0x448] sm:$0xff]
  %v2938 = vld [vmem:[%s8 + $0x450] sm:$0xff]
  %v2939 = vld [vmem:[%s8 + $0x458] sm:$0xff]
  %v2940 = vld [vmem:[%s8 + $0x460] sm:$0xff]
  %v2941 = vld [vmem:[%s8 + $0x468] sm:$0xff]
  %v2942 = vld [vmem:[%s8 + $0x470] sm:$0xff]
  %v2943 = vld [vmem:[%s8 + $0x478] sm:$0xff]
  %v2944 = vld [vmem:[%s8 + $0x480] sm:$0xff]
  %v2945 = vld [vmem:[%s8 + $0x488] sm:$0xff]
  %v2946 = vld [vmem:[%s8 + $0x490] sm:$0xff]
  %v2947 = vld [vmem:[%s8 + $0x498] sm:$0xff]
  %v2948 = vld [vmem:[%s8 + $0x4a0] sm:$0xff]
  %v2949 = vld [vmem:[%s8 + $0x4a8] sm:$0xff]
  %v2950 = vld [vmem:[%s8 + $0x4b0] sm:$0xff]
  %v2951 = vld [vmem:[%s8 + $0x4b8] sm:$0xff]
  %v2952 = vld [vmem:[%s8 + $0x4c0] sm:$0xff]
  %v2953 = vld [vmem:[%s8 + $0x4c8] sm:$0xff]
  %v2954 = vld [vmem:[%s8 + $0x4d0] sm:$0xff]
  %v2955 = vld [vmem:[%s8 + $0x4d8] sm:$0xff]
  %v2956 = vld [vmem:[%s8 + $0x4e0] sm:$0xff]
  %v2957 = vld [vmem:[%s8 + $0x4e8] sm:$0xff]
  %v2958 = vld [vmem:[%s8 + $0x4f0] sm:$0xff]
  %v2959 = vld [vmem:[%s8 + $0x4f8] sm:$0xff]
  %v2960 = vld [vmem:[%s8 + $0x500] sm:$0xff]
  %v2961 = vld [vmem:[%s8 + $0x508] sm:$0xff]
  %v2962 = vld [vmem:[%s8 + $0x510] sm:$0xff]
  %v2963 = vld [vmem:[%s8 + $0x518] sm:$0xff]
  %v2964 = vld [vmem:[%s8 + $0x520] sm:$0xff]
  %v2965 = vld [vmem:[%s8 + $0x528] sm:$0xff]
  %v2966 = vld [vmem:[%s8 + $0x530] sm:$0xff]
  %v2967 = vld [vmem:[%s8 + $0x538] sm:$0xff]
  %v2968 = vld [vmem:[%s8 + $0x540] sm:$0xff]
  %v2969 = vld [vmem:[%s8 + $0x548] sm:$0xff]
  %v2970 = vld [vmem:[%s8 + $0x550] sm:$0xff]
  %v2971 = vld [vmem:[%s8 + $0x558] sm:$0xff]
  %v2972 = vld [vmem:[%s8 + $0x560] sm:$0xff]
  %v2973 = vld [vmem:[%s8 + $0x568] sm:$0xff]
  %v2974 = vld [vmem:[%s8 + $0x570] sm:$0xff]
  %v2975 = vld [vmem:[%s8 + $0x578] sm:$0xff]
  %v2976 = vld [vmem:[%s8 + $0x580] sm:$0xff]
  %v2977 = vld [vmem:[%s8 + $0x588] sm:$0xff]
  %v2978 = vld [vmem:[%s8 + $0x590] sm:$0xff]
  %v2979 = vld [vmem:[%s8 + $0x598] sm:$0xff]
  %v2980 = vld [vmem:[%s8 + $0x5a0] sm:$0xff]
  %v2981 = vld [vmem:[%s8 + $0x5a8] sm:$0xff]
  %v2982 = vld [vmem:[%s8 + $0x5b0] sm:$0xff]
  %v2983 = vld [vmem:[%s8 + $0x5b8] sm:$0xff]
  %v2984 = vld [vmem:[%s8 + $0x5c0] sm:$0xff]
  %v2985 = vld [vmem:[%s8 + $0x5c8] sm:$0xff]
  %v2986 = vld [vmem:[%s8 + $0x5d0] sm:$0xff]
  %v2987 = vld [vmem:[%s8 + $0x5d8] sm:$0xff]
  %v2988 = vld [vmem:[%s8 + $0x5e0] sm:$0xff]
  %v2989 = vld [vmem:[%s8 + $0x5e8] sm:$0xff]
  %v2990 = vld [vmem:[%s8 + $0x5f0] sm:$0xff]
  %v2991 = vld [vmem:[%s8 + $0x5f8] sm:$0xff]
  %v2992 = vld [vmem:[%s8 + $0x600] sm:$0xff]
  %v2993 = vld [vmem:[%s8 + $0x608] sm:$0xff]
  %v2994 = vld [vmem:[%s8 + $0x610] sm:$0xff]
  %v2995 = vld [vmem:[%s8 + $0x618] sm:$0xff]
  %v2996 = vld [vmem:[%s8 + $0x620] sm:$0xff]
  %v2997 = vld [vmem:[%s8 + $0x628] sm:$0xff]
  %v2998 = vld [vmem:[%s8 + $0x630] sm:$0xff]
  %v2999 = vld [vmem:[%s8 + $0x638] sm:$0xff]
  %v3000 = vld [vmem:[%s8 + $0x640] sm:$0xff]
  %v3001 = vld [vmem:[%s8 + $0x648] sm:$0xff]
  %v3002 = vld [vmem:[%s8 + $0x650] sm:$0xff]
  %v3003 = vld [vmem:[%s8 + $0x658] sm:$0xff]
  %v3004 = vld [vmem:[%s8 + $0x660] sm:$0xff]
  %v3005 = vld [vmem:[%s8 + $0x668] sm:$0xff]
  %v3006 = vld [vmem:[%s8 + $0x670] sm:$0xff]
  %v3007 = vld [vmem:[%s8 + $0x678] sm:$0xff]
  %v3008 = vld [vmem:[%s8 + $0x680] sm:$0xff]
  %v3009 = vld [vmem:[%s8 + $0x688] sm:$0xff]
  %v3010 = vld [vmem:[%s8 + $0x690] sm:$0xff]
  %v3011 = vld [vmem:[%s8 + $0x698] sm:$0xff]
  %v3012 = vld [vmem:[%s8 + $0x6a0] sm:$0xff]
  %v3013 = vld [vmem:[%s8 + $0x6a8] sm:$0xff]
  %v3014 = vld [vmem:[%s8 + $0x6b0] sm:$0xff]
  %v3015 = vld [vmem:[%s8 + $0x6b8] sm:$0xff]
  %v3016 = vld [vmem:[%s8 + $0x6c0] sm:$0xff]
  %v3017 = vld [vmem:[%s8 + $0x6c8] sm:$0xff]
  %v3018 = vld [vmem:[%s8 + $0x6d0] sm:$0xff]
  %v3019 = vld [vmem:[%s8 + $0x6d8] sm:$0xff]
  %v3020 = vld [vmem:[%s8 + $0x6e0] sm:$0xff]
  %v3021 = vld [vmem:[%s8 + $0x6e8] sm:$0xff]
  %v3022 = vld [vmem:[%s8 + $0x6f0] sm:$0xff]
  %v3023 = vld [vmem:[%s8 + $0x6f8] sm:$0xff]
  %v3024 = vld [vmem:[%s8 + $0x700] sm:$0xff]
  %v3025 = vld [vmem:[%s8 + $0x708] sm:$0xff]
  %v3026 = vld [vmem:[%s8 + $0x710] sm:$0xff]
  %v3027 = vld [vmem:[%s8 + $0x718] sm:$0xff]
  %v3028 = vld [vmem:[%s8 + $0x720] sm:$0xff]
  %v3029 = vld [vmem:[%s8 + $0x728] sm:$0xff]
  %v3030 = vld [vmem:[%s8 + $0x730] sm:$0xff]
  %v3031 = vld [vmem:[%s8 + $0x738] sm:$0xff]
  %v3032 = vld [vmem:[%s8 + $0x740] sm:$0xff]
  %v3033 = vld [vmem:[%s8 + $0x748] sm:$0xff]
  %v3034 = vld [vmem:[%s8 + $0x750] sm:$0xff]
  %v3035 = vld [vmem:[%s8 + $0x758] sm:$0xff]
  %v3036 = vld [vmem:[%s8 + $0x760] sm:$0xff]
  %v3037 = vld [vmem:[%s8 + $0x768] sm:$0xff]
  %v3038 = vld [vmem:[%s8 + $0x770] sm:$0xff]
  %v3039 = vld [vmem:[%s8 + $0x778] sm:$0xff]
  %v3040 = vld [vmem:[%s8 + $0x780] sm:$0xff]
  %v3041 = vld [vmem:[%s8 + $0x788] sm:$0xff]
  %v3042 = vld [vmem:[%s8 + $0x790] sm:$0xff]
  %v3043 = vld [vmem:[%s8 + $0x798] sm:$0xff]
  %v3044 = vld [vmem:[%s8 + $0x7a0] sm:$0xff]
  %v3045 = vld [vmem:[%s8 + $0x7a8] sm:$0xff]
  %v3046 = vld [vmem:[%s8 + $0x7b0] sm:$0xff]
  %v3047 = vld [vmem:[%s8 + $0x7b8] sm:$0xff]
  %v3048 = vld [vmem:[%s8 + $0x7c0] sm:$0xff]
  %v3049 = vld [vmem:[%s8 + $0x7c8] sm:$0xff]
  %v3050 = vld [vmem:[%s8 + $0x7d0] sm:$0xff]
  %v3051 = vld [vmem:[%s8 + $0x7d8] sm:$0xff]
  %v3052 = vld [vmem:[%s8 + $0x7e0] sm:$0xff]
  %v3053 = vld [vmem:[%s8 + $0x7e8] sm:$0xff]
  %v3054 = vld [vmem:[%s8 + $0x7f0] sm:$0xff]
  %v3055 = vld [vmem:[%s8 + $0x7f8] sm:$0xff]
  %v3056 = vld [vmem:[%s9] sm:$0xff]
  %v3058 = vperm.slane %v3056, 0
  %v3059 = vperm.slane %v3056, 1
  %v3060 = vperm.slane %v3056, 2
  %v3061 = vperm.slane %v3056, 3
  %v3062 = vperm.slane %v3056, 4
  %v3063 = vperm.slane %v3056, 5
  %v3064 = vperm.slane %v3056, 6
  %v3065 = vperm.slane %v3056, 7
  %v3330 = vunpack.c.l.b16 %v2800
  %v3331 = vunpack.c.h.b16 %v2800
  %v3332 = vunpack.c.l.b16 %v2801
  %v3333 = vunpack.c.h.b16 %v2801
  %v3334 = vunpack.c.l.b16 %v2802
  %v3335 = vunpack.c.h.b16 %v2802
  %v3336 = vunpack.c.l.b16 %v2803
  %v3337 = vunpack.c.h.b16 %v2803
  %v3338 = vunpack.c.l.b16 %v2804
  %v3339 = vunpack.c.h.b16 %v2804
  %v3340 = vunpack.c.l.b16 %v2805
  %v3341 = vunpack.c.h.b16 %v2805
  %v3342 = vunpack.c.l.b16 %v2806
  %v3343 = vunpack.c.h.b16 %v2806
  %v3344 = vunpack.c.l.b16 %v2807
  %v3345 = vunpack.c.h.b16 %v2807
  %v3346 = vunpack.c.l.b16 %v2808
  %v3347 = vunpack.c.h.b16 %v2808
  %v3348 = vunpack.c.l.b16 %v2809
  %v3349 = vunpack.c.h.b16 %v2809
  %v3350 = vunpack.c.l.b16 %v2810
  %v3351 = vunpack.c.h.b16 %v2810
  %v3352 = vunpack.c.l.b16 %v2811
  %v3353 = vunpack.c.h.b16 %v2811
  %v3354 = vunpack.c.l.b16 %v2812
  %v3355 = vunpack.c.h.b16 %v2812
  %v3356 = vunpack.c.l.b16 %v2813
  %v3357 = vunpack.c.h.b16 %v2813
  %v3358 = vunpack.c.l.b16 %v2814
  %v3359 = vunpack.c.h.b16 %v2814
  %v3360 = vunpack.c.l.b16 %v2815
  %v3361 = vunpack.c.h.b16 %v2815
  %v3362 = vunpack.c.l.b16 %v2816
  %v3363 = vunpack.c.h.b16 %v2816
  %v3364 = vunpack.c.l.b16 %v2817
  %v3365 = vunpack.c.h.b16 %v2817
  %v3366 = vunpack.c.l.b16 %v2818
  %v3367 = vunpack.c.h.b16 %v2818
  %v3368 = vunpack.c.l.b16 %v2819
  %v3369 = vunpack.c.h.b16 %v2819
  %v3370 = vunpack.c.l.b16 %v2820
  %v3371 = vunpack.c.h.b16 %v2820
  %v3372 = vunpack.c.l.b16 %v2821
  %v3373 = vunpack.c.h.b16 %v2821
  %v3374 = vunpack.c.l.b16 %v2822
  %v3375 = vunpack.c.h.b16 %v2822
  %v3376 = vunpack.c.l.b16 %v2823
  %v3377 = vunpack.c.h.b16 %v2823
  %v3378 = vunpack.c.l.b16 %v2824
  %v3379 = vunpack.c.h.b16 %v2824
  %v3380 = vunpack.c.l.b16 %v2825
  %v3381 = vunpack.c.h.b16 %v2825
  %v3382 = vunpack.c.l.b16 %v2826
  %v3383 = vunpack.c.h.b16 %v2826
  %v3384 = vunpack.c.l.b16 %v2827
  %v3385 = vunpack.c.h.b16 %v2827
  %v3386 = vunpack.c.l.b16 %v2828
  %v3387 = vunpack.c.h.b16 %v2828
  %v3388 = vunpack.c.l.b16 %v2829
  %v3389 = vunpack.c.h.b16 %v2829
  %v3390 = vunpack.c.l.b16 %v2830
  %v3391 = vunpack.c.h.b16 %v2830
  %v3392 = vunpack.c.l.b16 %v2831
  %v3393 = vunpack.c.h.b16 %v2831
  %v3394 = vunpack.c.l.b16 %v2832
  %v3395 = vunpack.c.h.b16 %v2832
  %v3396 = vunpack.c.l.b16 %v2833
  %v3397 = vunpack.c.h.b16 %v2833
  %v3398 = vunpack.c.l.b16 %v2834
  %v3399 = vunpack.c.h.b16 %v2834
  %v3400 = vunpack.c.l.b16 %v2835
  %v3401 = vunpack.c.h.b16 %v2835
  %v3402 = vunpack.c.l.b16 %v2836
  %v3403 = vunpack.c.h.b16 %v2836
  %v3404 = vunpack.c.l.b16 %v2837
  %v3405 = vunpack.c.h.b16 %v2837
  %v3406 = vunpack.c.l.b16 %v2838
  %v3407 = vunpack.c.h.b16 %v2838
  %v3408 = vunpack.c.l.b16 %v2839
  %v3409 = vunpack.c.h.b16 %v2839
  %v3410 = vunpack.c.l.b16 %v2840
  %v3411 = vunpack.c.h.b16 %v2840
  %v3412 = vunpack.c.l.b16 %v2841
  %v3413 = vunpack.c.h.b16 %v2841
  %v3414 = vunpack.c.l.b16 %v2842
  %v3415 = vunpack.c.h.b16 %v2842
  %v3416 = vunpack.c.l.b16 %v2843
  %v3417 = vunpack.c.h.b16 %v2843
  %v3418 = vunpack.c.l.b16 %v2844
  %v3419 = vunpack.c.h.b16 %v2844
  %v3420 = vunpack.c.l.b16 %v2845
  %v3421 = vunpack.c.h.b16 %v2845
  %v3422 = vunpack.c.l.b16 %v2846
  %v3423 = vunpack.c.h.b16 %v2846
  %v3424 = vunpack.c.l.b16 %v2847
  %v3425 = vunpack.c.h.b16 %v2847
  %v3426 = vunpack.c.l.b16 %v2848
  %v3427 = vunpack.c.h.b16 %v2848
  %v3428 = vunpack.c.l.b16 %v2849
  %v3429 = vunpack.c.h.b16 %v2849
  %v3430 = vunpack.c.l.b16 %v2850
  %v3431 = vunpack.c.h.b16 %v2850
  %v3432 = vunpack.c.l.b16 %v2851
  %v3433 = vunpack.c.h.b16 %v2851
  %v3434 = vunpack.c.l.b16 %v2852
  %v3435 = vunpack.c.h.b16 %v2852
  %v3436 = vunpack.c.l.b16 %v2853
  %v3437 = vunpack.c.h.b16 %v2853
  %v3438 = vunpack.c.l.b16 %v2854
  %v3439 = vunpack.c.h.b16 %v2854
  %v3440 = vunpack.c.l.b16 %v2855
  %v3441 = vunpack.c.h.b16 %v2855
  %v3442 = vunpack.c.l.b16 %v2856
  %v3443 = vunpack.c.h.b16 %v2856
  %v3444 = vunpack.c.l.b16 %v2857
  %v3445 = vunpack.c.h.b16 %v2857
  %v3446 = vunpack.c.l.b16 %v2858
  %v3447 = vunpack.c.h.b16 %v2858
  %v3448 = vunpack.c.l.b16 %v2859
  %v3449 = vunpack.c.h.b16 %v2859
  %v3450 = vunpack.c.l.b16 %v2860
  %v3451 = vunpack.c.h.b16 %v2860
  %v3452 = vunpack.c.l.b16 %v2861
  %v3453 = vunpack.c.h.b16 %v2861
  %v3454 = vunpack.c.l.b16 %v2862
  %v3455 = vunpack.c.h.b16 %v2862
  %v3456 = vunpack.c.l.b16 %v2863
  %v3457 = vunpack.c.h.b16 %v2863
  %v3458 = vunpack.c.l.b16 %v2864
  %v3459 = vunpack.c.h.b16 %v2864
  %v3460 = vunpack.c.l.b16 %v2865
  %v3461 = vunpack.c.h.b16 %v2865
  %v3462 = vunpack.c.l.b16 %v2866
  %v3463 = vunpack.c.h.b16 %v2866
  %v3464 = vunpack.c.l.b16 %v2867
  %v3465 = vunpack.c.h.b16 %v2867
  %v3466 = vunpack.c.l.b16 %v2868
  %v3467 = vunpack.c.h.b16 %v2868
  %v3468 = vunpack.c.l.b16 %v2869
  %v3469 = vunpack.c.h.b16 %v2869
  %v3470 = vunpack.c.l.b16 %v2870
  %v3471 = vunpack.c.h.b16 %v2870
  %v3472 = vunpack.c.l.b16 %v2871
  %v3473 = vunpack.c.h.b16 %v2871
  %v3474 = vunpack.c.l.b16 %v2872
  %v3475 = vunpack.c.h.b16 %v2872
  %v3476 = vunpack.c.l.b16 %v2873
  %v3477 = vunpack.c.h.b16 %v2873
  %v3478 = vunpack.c.l.b16 %v2874
  %v3479 = vunpack.c.h.b16 %v2874
  %v3480 = vunpack.c.l.b16 %v2875
  %v3481 = vunpack.c.h.b16 %v2875
  %v3482 = vunpack.c.l.b16 %v2876
  %v3483 = vunpack.c.h.b16 %v2876
  %v3484 = vunpack.c.l.b16 %v2877
  %v3485 = vunpack.c.h.b16 %v2877
  %v3486 = vunpack.c.l.b16 %v2878
  %v3487 = vunpack.c.h.b16 %v2878
  %v3488 = vunpack.c.l.b16 %v2879
  %v3489 = vunpack.c.h.b16 %v2879
  %v3490 = vunpack.c.l.b16 %v2880
  %v3491 = vunpack.c.h.b16 %v2880
  %v3492 = vunpack.c.l.b16 %v2881
  %v3493 = vunpack.c.h.b16 %v2881
  %v3494 = vunpack.c.l.b16 %v2882
  %v3495 = vunpack.c.h.b16 %v2882
  %v3496 = vunpack.c.l.b16 %v2883
  %v3497 = vunpack.c.h.b16 %v2883
  %v3498 = vunpack.c.l.b16 %v2884
  %v3499 = vunpack.c.h.b16 %v2884
  %v3500 = vunpack.c.l.b16 %v2885
  %v3501 = vunpack.c.h.b16 %v2885
  %v3502 = vunpack.c.l.b16 %v2886
  %v3503 = vunpack.c.h.b16 %v2886
  %v3504 = vunpack.c.l.b16 %v2887
  %v3505 = vunpack.c.h.b16 %v2887
  %v3506 = vunpack.c.l.b16 %v2888
  %v3507 = vunpack.c.h.b16 %v2888
  %v3508 = vunpack.c.l.b16 %v2889
  %v3509 = vunpack.c.h.b16 %v2889
  %v3510 = vunpack.c.l.b16 %v2890
  %v3511 = vunpack.c.h.b16 %v2890
  %v3512 = vunpack.c.l.b16 %v2891
  %v3513 = vunpack.c.h.b16 %v2891
  %v3514 = vunpack.c.l.b16 %v2892
  %v3515 = vunpack.c.h.b16 %v2892
  %v3516 = vunpack.c.l.b16 %v2893
  %v3517 = vunpack.c.h.b16 %v2893
  %v3518 = vunpack.c.l.b16 %v2894
  %v3519 = vunpack.c.h.b16 %v2894
  %v3520 = vunpack.c.l.b16 %v2895
  %v3521 = vunpack.c.h.b16 %v2895
  %v3522 = vunpack.c.l.b16 %v2896
  %v3523 = vunpack.c.h.b16 %v2896
  %v3524 = vunpack.c.l.b16 %v2897
  %v3525 = vunpack.c.h.b16 %v2897
  %v3526 = vunpack.c.l.b16 %v2898
  %v3527 = vunpack.c.h.b16 %v2898
  %v3528 = vunpack.c.l.b16 %v2899
  %v3529 = vunpack.c.h.b16 %v2899
  %v3530 = vunpack.c.l.b16 %v2900
  %v3531 = vunpack.c.h.b16 %v2900
  %v3532 = vunpack.c.l.b16 %v2901
  %v3533 = vunpack.c.h.b16 %v2901
  %v3534 = vunpack.c.l.b16 %v2902
  %v3535 = vunpack.c.h.b16 %v2902
  %v3536 = vunpack.c.l.b16 %v2903
  %v3537 = vunpack.c.h.b16 %v2903
  %v3538 = vunpack.c.l.b16 %v2904
  %v3539 = vunpack.c.h.b16 %v2904
  %v3540 = vunpack.c.l.b16 %v2905
  %v3541 = vunpack.c.h.b16 %v2905
  %v3542 = vunpack.c.l.b16 %v2906
  %v3543 = vunpack.c.h.b16 %v2906
  %v3544 = vunpack.c.l.b16 %v2907
  %v3545 = vunpack.c.h.b16 %v2907
  %v3546 = vunpack.c.l.b16 %v2908
  %v3547 = vunpack.c.h.b16 %v2908
  %v3548 = vunpack.c.l.b16 %v2909
  %v3549 = vunpack.c.h.b16 %v2909
  %v3550 = vunpack.c.l.b16 %v2910
  %v3551 = vunpack.c.h.b16 %v2910
  %v3552 = vunpack.c.l.b16 %v2911
  %v3553 = vunpack.c.h.b16 %v2911
  %v3554 = vunpack.c.l.b16 %v2912
  %v3555 = vunpack.c.h.b16 %v2912
  %v3556 = vunpack.c.l.b16 %v2913
  %v3557 = vunpack.c.h.b16 %v2913
  %v3558 = vunpack.c.l.b16 %v2914
  %v3559 = vunpack.c.h.b16 %v2914
  %v3560 = vunpack.c.l.b16 %v2915
  %v3561 = vunpack.c.h.b16 %v2915
  %v3562 = vunpack.c.l.b16 %v2916
  %v3563 = vunpack.c.h.b16 %v2916
  %v3564 = vunpack.c.l.b16 %v2917
  %v3565 = vunpack.c.h.b16 %v2917
  %v3566 = vunpack.c.l.b16 %v2918
  %v3567 = vunpack.c.h.b16 %v2918
  %v3568 = vunpack.c.l.b16 %v2919
  %v3569 = vunpack.c.h.b16 %v2919
  %v3570 = vunpack.c.l.b16 %v2920
  %v3571 = vunpack.c.h.b16 %v2920
  %v3572 = vunpack.c.l.b16 %v2921
  %v3573 = vunpack.c.h.b16 %v2921
  %v3574 = vunpack.c.l.b16 %v2922
  %v3575 = vunpack.c.h.b16 %v2922
  %v3576 = vunpack.c.l.b16 %v2923
  %v3577 = vunpack.c.h.b16 %v2923
  %v3578 = vunpack.c.l.b16 %v2924
  %v3579 = vunpack.c.h.b16 %v2924
  %v3580 = vunpack.c.l.b16 %v2925
  %v3581 = vunpack.c.h.b16 %v2925
  %v3582 = vunpack.c.l.b16 %v2926
  %v3583 = vunpack.c.h.b16 %v2926
  %v3584 = vunpack.c.l.b16 %v2927
  %v3585 = vunpack.c.h.b16 %v2927
  %v3586 = vunpack.c.l.b16 %v2928
  %v3587 = vunpack.c.h.b16 %v2928
  %v3588 = vunpack.c.l.b16 %v2929
  %v3589 = vunpack.c.h.b16 %v2929
  %v3590 = vunpack.c.l.b16 %v2930
  %v3591 = vunpack.c.h.b16 %v2930
  %v3592 = vunpack.c.l.b16 %v2931
  %v3593 = vunpack.c.h.b16 %v2931
  %v3594 = vunpack.c.l.b16 %v2932
  %v3595 = vunpack.c.h.b16 %v2932
  %v3596 = vunpack.c.l.b16 %v2933
  %v3597 = vunpack.c.h.b16 %v2933
  %v3598 = vunpack.c.l.b16 %v2934
  %v3599 = vunpack.c.h.b16 %v2934
  %v3600 = vunpack.c.l.b16 %v2935
  %v3601 = vunpack.c.h.b16 %v2935
  %v3602 = vunpack.c.l.b16 %v2936
  %v3603 = vunpack.c.h.b16 %v2936
  %v3604 = vunpack.c.l.b16 %v2937
  %v3605 = vunpack.c.h.b16 %v2937
  %v3606 = vunpack.c.l.b16 %v2938
  %v3607 = vunpack.c.h.b16 %v2938
  %v3608 = vunpack.c.l.b16 %v2939
  %v3609 = vunpack.c.h.b16 %v2939
  %v3610 = vunpack.c.l.b16 %v2940
  %v3611 = vunpack.c.h.b16 %v2940
  %v3612 = vunpack.c.l.b16 %v2941
  %v3613 = vunpack.c.h.b16 %v2941
  %v3614 = vunpack.c.l.b16 %v2942
  %v3615 = vunpack.c.h.b16 %v2942
  %v3616 = vunpack.c.l.b16 %v2943
  %v3617 = vunpack.c.h.b16 %v2943
  %v3618 = vunpack.c.l.b16 %v2944
  %v3619 = vunpack.c.h.b16 %v2944
  %v3620 = vunpack.c.l.b16 %v2945
  %v3621 = vunpack.c.h.b16 %v2945
  %v3622 = vunpack.c.l.b16 %v2946
  %v3623 = vunpack.c.h.b16 %v2946
  %v3624 = vunpack.c.l.b16 %v2947
  %v3625 = vunpack.c.h.b16 %v2947
  %v3626 = vunpack.c.l.b16 %v2948
  %v3627 = vunpack.c.h.b16 %v2948
  %v3628 = vunpack.c.l.b16 %v2949
  %v3629 = vunpack.c.h.b16 %v2949
  %v3630 = vunpack.c.l.b16 %v2950
  %v3631 = vunpack.c.h.b16 %v2950
  %v3632 = vunpack.c.l.b16 %v2951
  %v3633 = vunpack.c.h.b16 %v2951
  %v3634 = vunpack.c.l.b16 %v2952
  %v3635 = vunpack.c.h.b16 %v2952
  %v3636 = vunpack.c.l.b16 %v2953
  %v3637 = vunpack.c.h.b16 %v2953
  %v3638 = vunpack.c.l.b16 %v2954
  %v3639 = vunpack.c.h.b16 %v2954
  %v3640 = vunpack.c.l.b16 %v2955
  %v3641 = vunpack.c.h.b16 %v2955
  %v3642 = vunpack.c.l.b16 %v2956
  %v3643 = vunpack.c.h.b16 %v2956
  %v3644 = vunpack.c.l.b16 %v2957
  %v3645 = vunpack.c.h.b16 %v2957
  %v3646 = vunpack.c.l.b16 %v2958
  %v3647 = vunpack.c.h.b16 %v2958
  %v3648 = vunpack.c.l.b16 %v2959
  %v3649 = vunpack.c.h.b16 %v2959
  %v3650 = vunpack.c.l.b16 %v2960
  %v3651 = vunpack.c.h.b16 %v2960
  %v3652 = vunpack.c.l.b16 %v2961
  %v3653 = vunpack.c.h.b16 %v2961
  %v3654 = vunpack.c.l.b16 %v2962
  %v3655 = vunpack.c.h.b16 %v2962
  %v3656 = vunpack.c.l.b16 %v2963
  %v3657 = vunpack.c.h.b16 %v2963
  %v3658 = vunpack.c.l.b16 %v2964
  %v3659 = vunpack.c.h.b16 %v2964
  %v3660 = vunpack.c.l.b16 %v2965
  %v3661 = vunpack.c.h.b16 %v2965
  %v3662 = vunpack.c.l.b16 %v2966
  %v3663 = vunpack.c.h.b16 %v2966
  %v3664 = vunpack.c.l.b16 %v2967
  %v3665 = vunpack.c.h.b16 %v2967
  %v3666 = vunpack.c.l.b16 %v2968
  %v3667 = vunpack.c.h.b16 %v2968
  %v3668 = vunpack.c.l.b16 %v2969
  %v3669 = vunpack.c.h.b16 %v2969
  %v3670 = vunpack.c.l.b16 %v2970
  %v3671 = vunpack.c.h.b16 %v2970
  %v3672 = vunpack.c.l.b16 %v2971
  %v3673 = vunpack.c.h.b16 %v2971
  %v3674 = vunpack.c.l.b16 %v2972
  %v3675 = vunpack.c.h.b16 %v2972
  %v3676 = vunpack.c.l.b16 %v2973
  %v3677 = vunpack.c.h.b16 %v2973
  %v3678 = vunpack.c.l.b16 %v2974
  %v3679 = vunpack.c.h.b16 %v2974
  %v3680 = vunpack.c.l.b16 %v2975
  %v3681 = vunpack.c.h.b16 %v2975
  %v3682 = vunpack.c.l.b16 %v2976
  %v3683 = vunpack.c.h.b16 %v2976
  %v3684 = vunpack.c.l.b16 %v2977
  %v3685 = vunpack.c.h.b16 %v2977
  %v3686 = vunpack.c.l.b16 %v2978
  %v3687 = vunpack.c.h.b16 %v2978
  %v3688 = vunpack.c.l.b16 %v2979
  %v3689 = vunpack.c.h.b16 %v2979
  %v3690 = vunpack.c.l.b16 %v2980
  %v3691 = vunpack.c.h.b16 %v2980
  %v3692 = vunpack.c.l.b16 %v2981
  %v3693 = vunpack.c.h.b16 %v2981
  %v3694 = vunpack.c.l.b16 %v2982
  %v3695 = vunpack.c.h.b16 %v2982
  %v3696 = vunpack.c.l.b16 %v2983
  %v3697 = vunpack.c.h.b16 %v2983
  %v3698 = vunpack.c.l.b16 %v2984
  %v3699 = vunpack.c.h.b16 %v2984
  %v3700 = vunpack.c.l.b16 %v2985
  %v3701 = vunpack.c.h.b16 %v2985
  %v3702 = vunpack.c.l.b16 %v2986
  %v3703 = vunpack.c.h.b16 %v2986
  %v3704 = vunpack.c.l.b16 %v2987
  %v3705 = vunpack.c.h.b16 %v2987
  %v3706 = vunpack.c.l.b16 %v2988
  %v3707 = vunpack.c.h.b16 %v2988
  %v3708 = vunpack.c.l.b16 %v2989
  %v3709 = vunpack.c.h.b16 %v2989
  %v3710 = vunpack.c.l.b16 %v2990
  %v3711 = vunpack.c.h.b16 %v2990
  %v3712 = vunpack.c.l.b16 %v2991
  %v3713 = vunpack.c.h.b16 %v2991
  %v3714 = vunpack.c.l.b16 %v2992
  %v3715 = vunpack.c.h.b16 %v2992
  %v3716 = vunpack.c.l.b16 %v2993
  %v3717 = vunpack.c.h.b16 %v2993
  %v3718 = vunpack.c.l.b16 %v2994
  %v3719 = vunpack.c.h.b16 %v2994
  %v3720 = vunpack.c.l.b16 %v2995
  %v3721 = vunpack.c.h.b16 %v2995
  %v3722 = vunpack.c.l.b16 %v2996
  %v3723 = vunpack.c.h.b16 %v2996
  %v3724 = vunpack.c.l.b16 %v2997
  %v3725 = vunpack.c.h.b16 %v2997
  %v3726 = vunpack.c.l.b16 %v2998
  %v3727 = vunpack.c.h.b16 %v2998
  %v3728 = vunpack.c.l.b16 %v2999
  %v3729 = vunpack.c.h.b16 %v2999
  %v3730 = vunpack.c.l.b16 %v3000
  %v3731 = vunpack.c.h.b16 %v3000
  %v3732 = vunpack.c.l.b16 %v3001
  %v3733 = vunpack.c.h.b16 %v3001
  %v3734 = vunpack.c.l.b16 %v3002
  %v3735 = vunpack.c.h.b16 %v3002
  %v3736 = vunpack.c.l.b16 %v3003
  %v3737 = vunpack.c.h.b16 %v3003
  %v3738 = vunpack.c.l.b16 %v3004
  %v3739 = vunpack.c.h.b16 %v3004
  %v3740 = vunpack.c.l.b16 %v3005
  %v3741 = vunpack.c.h.b16 %v3005
  %v3742 = vunpack.c.l.b16 %v3006
  %v3743 = vunpack.c.h.b16 %v3006
  %v3744 = vunpack.c.l.b16 %v3007
  %v3745 = vunpack.c.h.b16 %v3007
  %v3746 = vunpack.c.l.b16 %v3008
  %v3747 = vunpack.c.h.b16 %v3008
  %v3748 = vunpack.c.l.b16 %v3009
  %v3749 = vunpack.c.h.b16 %v3009
  %v3750 = vunpack.c.l.b16 %v3010
  %v3751 = vunpack.c.h.b16 %v3010
  %v3752 = vunpack.c.l.b16 %v3011
  %v3753 = vunpack.c.h.b16 %v3011
  %v3754 = vunpack.c.l.b16 %v3012
  %v3755 = vunpack.c.h.b16 %v3012
  %v3756 = vunpack.c.l.b16 %v3013
  %v3757 = vunpack.c.h.b16 %v3013
  %v3758 = vunpack.c.l.b16 %v3014
  %v3759 = vunpack.c.h.b16 %v3014
  %v3760 = vunpack.c.l.b16 %v3015
  %v3761 = vunpack.c.h.b16 %v3015
  %v3762 = vunpack.c.l.b16 %v3016
  %v3763 = vunpack.c.h.b16 %v3016
  %v3764 = vunpack.c.l.b16 %v3017
  %v3765 = vunpack.c.h.b16 %v3017
  %v3766 = vunpack.c.l.b16 %v3018
  %v3767 = vunpack.c.h.b16 %v3018
  %v3768 = vunpack.c.l.b16 %v3019
  %v3769 = vunpack.c.h.b16 %v3019
  %v3770 = vunpack.c.l.b16 %v3020
  %v3771 = vunpack.c.h.b16 %v3020
  %v3772 = vunpack.c.l.b16 %v3021
  %v3773 = vunpack.c.h.b16 %v3021
  %v3774 = vunpack.c.l.b16 %v3022
  %v3775 = vunpack.c.h.b16 %v3022
  %v3776 = vunpack.c.l.b16 %v3023
  %v3777 = vunpack.c.h.b16 %v3023
  %v3778 = vunpack.c.l.b16 %v3024
  %v3779 = vunpack.c.h.b16 %v3024
  %v3780 = vunpack.c.l.b16 %v3025
  %v3781 = vunpack.c.h.b16 %v3025
  %v3782 = vunpack.c.l.b16 %v3026
  %v3783 = vunpack.c.h.b16 %v3026
  %v3784 = vunpack.c.l.b16 %v3027
  %v3785 = vunpack.c.h.b16 %v3027
  %v3786 = vunpack.c.l.b16 %v3028
  %v3787 = vunpack.c.h.b16 %v3028
  %v3788 = vunpack.c.l.b16 %v3029
  %v3789 = vunpack.c.h.b16 %v3029
  %v3790 = vunpack.c.l.b16 %v3030
  %v3791 = vunpack.c.h.b16 %v3030
  %v3792 = vunpack.c.l.b16 %v3031
  %v3793 = vunpack.c.h.b16 %v3031
  %v3794 = vunpack.c.l.b16 %v3032
  %v3795 = vunpack.c.h.b16 %v3032
  %v3796 = vunpack.c.l.b16 %v3033
  %v3797 = vunpack.c.h.b16 %v3033
  %v3798 = vunpack.c.l.b16 %v3034
  %v3799 = vunpack.c.h.b16 %v3034
  %v3800 = vunpack.c.l.b16 %v3035
  %v3801 = vunpack.c.h.b16 %v3035
  %v3802 = vunpack.c.l.b16 %v3036
  %v3803 = vunpack.c.h.b16 %v3036
  %v3804 = vunpack.c.l.b16 %v3037
  %v3805 = vunpack.c.h.b16 %v3037
  %v3806 = vunpack.c.l.b16 %v3038
  %v3807 = vunpack.c.h.b16 %v3038
  %v3808 = vunpack.c.l.b16 %v3039
  %v3809 = vunpack.c.h.b16 %v3039
  %v3810 = vunpack.c.l.b16 %v3040
  %v3811 = vunpack.c.h.b16 %v3040
  %v3812 = vunpack.c.l.b16 %v3041
  %v3813 = vunpack.c.h.b16 %v3041
  %v3814 = vunpack.c.l.b16 %v3042
  %v3815 = vunpack.c.h.b16 %v3042
  %v3816 = vunpack.c.l.b16 %v3043
  %v3817 = vunpack.c.h.b16 %v3043
  %v3818 = vunpack.c.l.b16 %v3044
  %v3819 = vunpack.c.h.b16 %v3044
  %v3820 = vunpack.c.l.b16 %v3045
  %v3821 = vunpack.c.h.b16 %v3045
  %v3822 = vunpack.c.l.b16 %v3046
  %v3823 = vunpack.c.h.b16 %v3046
  %v3824 = vunpack.c.l.b16 %v3047
  %v3825 = vunpack.c.h.b16 %v3047
  %v3826 = vunpack.c.l.b16 %v3048
  %v3827 = vunpack.c.h.b16 %v3048
  %v3828 = vunpack.c.l.b16 %v3049
  %v3829 = vunpack.c.h.b16 %v3049
  %v3830 = vunpack.c.l.b16 %v3050
  %v3831 = vunpack.c.h.b16 %v3050
  %v3832 = vunpack.c.l.b16 %v3051
  %v3833 = vunpack.c.h.b16 %v3051
  %v3834 = vunpack.c.l.b16 %v3052
  %v3835 = vunpack.c.h.b16 %v3052
  %v3836 = vunpack.c.l.b16 %v3053
  %v3837 = vunpack.c.h.b16 %v3053
  %v3838 = vunpack.c.l.b16 %v3054
  %v3839 = vunpack.c.h.b16 %v3054
  %v3840 = vunpack.c.l.b16 %v3055
  %v3841 = vunpack.c.h.b16 %v3055
  %v3842 = vpack.c.b16 %v3338, %v3330
  %v3843 = vpack.c.b16 %v3339, %v3331
  %v3844 = vpack.c.b16 %v3340, %v3332
  %v3845 = vpack.c.b16 %v3341, %v3333
  %v3846 = vpack.c.b16 %v3342, %v3334
  %v3847 = vpack.c.b16 %v3343, %v3335
  %v3848 = vpack.c.b16 %v3344, %v3336
  %v3849 = vpack.c.b16 %v3345, %v3337
  %v3850 = vpack.c.b16 %v3354, %v3346
  %v3851 = vpack.c.b16 %v3355, %v3347
  %v3852 = vpack.c.b16 %v3356, %v3348
  %v3853 = vpack.c.b16 %v3357, %v3349
  %v3854 = vpack.c.b16 %v3358, %v3350
  %v3855 = vpack.c.b16 %v3359, %v3351
  %v3856 = vpack.c.b16 %v3360, %v3352
  %v3857 = vpack.c.b16 %v3361, %v3353
  %v3858 = vpack.c.b16 %v3370, %v3362
  %v3859 = vpack.c.b16 %v3371, %v3363
  %v3860 = vpack.c.b16 %v3372, %v3364
  %v3861 = vpack.c.b16 %v3373, %v3365
  %v3862 = vpack.c.b16 %v3374, %v3366
  %v3863 = vpack.c.b16 %v3375, %v3367
  %v3864 = vpack.c.b16 %v3376, %v3368
  %v3865 = vpack.c.b16 %v3377, %v3369
  %v3866 = vpack.c.b16 %v3386, %v3378
  %v3867 = vpack.c.b16 %v3387, %v3379
  %v3868 = vpack.c.b16 %v3388, %v3380
  %v3869 = vpack.c.b16 %v3389, %v3381
  %v3870 = vpack.c.b16 %v3390, %v3382
  %v3871 = vpack.c.b16 %v3391, %v3383
  %v3872 = vpack.c.b16 %v3392, %v3384
  %v3873 = vpack.c.b16 %v3393, %v3385
  %v3874 = vpack.c.b16 %v3402, %v3394
  %v3875 = vpack.c.b16 %v3403, %v3395
  %v3876 = vpack.c.b16 %v3404, %v3396
  %v3877 = vpack.c.b16 %v3405, %v3397
  %v3878 = vpack.c.b16 %v3406, %v3398
  %v3879 = vpack.c.b16 %v3407, %v3399
  %v3880 = vpack.c.b16 %v3408, %v3400
  %v3881 = vpack.c.b16 %v3409, %v3401
  %v3882 = vpack.c.b16 %v3418, %v3410
  %v3883 = vpack.c.b16 %v3419, %v3411
  %v3884 = vpack.c.b16 %v3420, %v3412
  %v3885 = vpack.c.b16 %v3421, %v3413
  %v3886 = vpack.c.b16 %v3422, %v3414
  %v3887 = vpack.c.b16 %v3423, %v3415
  %v3888 = vpack.c.b16 %v3424, %v3416
  %v3889 = vpack.c.b16 %v3425, %v3417
  %v3890 = vpack.c.b16 %v3434, %v3426
  %v3891 = vpack.c.b16 %v3435, %v3427
  %v3892 = vpack.c.b16 %v3436, %v3428
  %v3893 = vpack.c.b16 %v3437, %v3429
  %v3894 = vpack.c.b16 %v3438, %v3430
  %v3895 = vpack.c.b16 %v3439, %v3431
  %v3896 = vpack.c.b16 %v3440, %v3432
  %v3897 = vpack.c.b16 %v3441, %v3433
  %v3898 = vpack.c.b16 %v3450, %v3442
  %v3899 = vpack.c.b16 %v3451, %v3443
  %v3900 = vpack.c.b16 %v3452, %v3444
  %v3901 = vpack.c.b16 %v3453, %v3445
  %v3902 = vpack.c.b16 %v3454, %v3446
  %v3903 = vpack.c.b16 %v3455, %v3447
  %v3904 = vpack.c.b16 %v3456, %v3448
  %v3905 = vpack.c.b16 %v3457, %v3449
  %v3906 = vpack.c.b16 %v3466, %v3458
  %v3907 = vpack.c.b16 %v3467, %v3459
  %v3908 = vpack.c.b16 %v3468, %v3460
  %v3909 = vpack.c.b16 %v3469, %v3461
  %v3910 = vpack.c.b16 %v3470, %v3462
  %v3911 = vpack.c.b16 %v3471, %v3463
  %v3912 = vpack.c.b16 %v3472, %v3464
  %v3913 = vpack.c.b16 %v3473, %v3465
  %v3914 = vpack.c.b16 %v3482, %v3474
  %v3915 = vpack.c.b16 %v3483, %v3475
  %v3916 = vpack.c.b16 %v3484, %v3476
  %v3917 = vpack.c.b16 %v3485, %v3477
  %v3918 = vpack.c.b16 %v3486, %v3478
  %v3919 = vpack.c.b16 %v3487, %v3479
  %v3920 = vpack.c.b16 %v3488, %v3480
  %v3921 = vpack.c.b16 %v3489, %v3481
  %v3922 = vpack.c.b16 %v3498, %v3490
  %v3923 = vpack.c.b16 %v3499, %v3491
  %v3924 = vpack.c.b16 %v3500, %v3492
  %v3925 = vpack.c.b16 %v3501, %v3493
  %v3926 = vpack.c.b16 %v3502, %v3494
  %v3927 = vpack.c.b16 %v3503, %v3495
  %v3928 = vpack.c.b16 %v3504, %v3496
  %v3929 = vpack.c.b16 %v3505, %v3497
  %v3930 = vpack.c.b16 %v3514, %v3506
  %v3931 = vpack.c.b16 %v3515, %v3507
  %v3932 = vpack.c.b16 %v3516, %v3508
  %v3933 = vpack.c.b16 %v3517, %v3509
  %v3934 = vpack.c.b16 %v3518, %v3510
  %v3935 = vpack.c.b16 %v3519, %v3511
  %v3936 = vpack.c.b16 %v3520, %v3512
  %v3937 = vpack.c.b16 %v3521, %v3513
  %v3938 = vpack.c.b16 %v3530, %v3522
  %v3939 = vpack.c.b16 %v3531, %v3523
  %v3940 = vpack.c.b16 %v3532, %v3524
  %v3941 = vpack.c.b16 %v3533, %v3525
  %v3942 = vpack.c.b16 %v3534, %v3526
  %v3943 = vpack.c.b16 %v3535, %v3527
  %v3944 = vpack.c.b16 %v3536, %v3528
  %v3945 = vpack.c.b16 %v3537, %v3529
  %v3946 = vpack.c.b16 %v3546, %v3538
  %v3947 = vpack.c.b16 %v3547, %v3539
  %v3948 = vpack.c.b16 %v3548, %v3540
  %v3949 = vpack.c.b16 %v3549, %v3541
  %v3950 = vpack.c.b16 %v3550, %v3542
  %v3951 = vpack.c.b16 %v3551, %v3543
  %v3952 = vpack.c.b16 %v3552, %v3544
  %v3953 = vpack.c.b16 %v3553, %v3545
  %v3954 = vpack.c.b16 %v3562, %v3554
  %v3955 = vpack.c.b16 %v3563, %v3555
  %v3956 = vpack.c.b16 %v3564, %v3556
  %v3957 = vpack.c.b16 %v3565, %v3557
  %v3958 = vpack.c.b16 %v3566, %v3558
  %v3959 = vpack.c.b16 %v3567, %v3559
  %v3960 = vpack.c.b16 %v3568, %v3560
  %v3961 = vpack.c.b16 %v3569, %v3561
  %v3962 = vpack.c.b16 %v3578, %v3570
  %v3963 = vpack.c.b16 %v3579, %v3571
  %v3964 = vpack.c.b16 %v3580, %v3572
  %v3965 = vpack.c.b16 %v3581, %v3573
  %v3966 = vpack.c.b16 %v3582, %v3574
  %v3967 = vpack.c.b16 %v3583, %v3575
  %v3968 = vpack.c.b16 %v3584, %v3576
  %v3969 = vpack.c.b16 %v3585, %v3577
  %v3970 = vpack.c.b16 %v3594, %v3586
  %v3971 = vpack.c.b16 %v3595, %v3587
  %v3972 = vpack.c.b16 %v3596, %v3588
  %v3973 = vpack.c.b16 %v3597, %v3589
  %v3974 = vpack.c.b16 %v3598, %v3590
  %v3975 = vpack.c.b16 %v3599, %v3591
  %v3976 = vpack.c.b16 %v3600, %v3592
  %v3977 = vpack.c.b16 %v3601, %v3593
  %v3978 = vpack.c.b16 %v3610, %v3602
  %v3979 = vpack.c.b16 %v3611, %v3603
  %v3980 = vpack.c.b16 %v3612, %v3604
  %v3981 = vpack.c.b16 %v3613, %v3605
  %v3982 = vpack.c.b16 %v3614, %v3606
  %v3983 = vpack.c.b16 %v3615, %v3607
  %v3984 = vpack.c.b16 %v3616, %v3608
  %v3985 = vpack.c.b16 %v3617, %v3609
  %v3986 = vpack.c.b16 %v3626, %v3618
  %v3987 = vpack.c.b16 %v3627, %v3619
  %v3988 = vpack.c.b16 %v3628, %v3620
  %v3989 = vpack.c.b16 %v3629, %v3621
  %v3990 = vpack.c.b16 %v3630, %v3622
  %v3991 = vpack.c.b16 %v3631, %v3623
  %v3992 = vpack.c.b16 %v3632, %v3624
  %v3993 = vpack.c.b16 %v3633, %v3625
  %v3994 = vpack.c.b16 %v3642, %v3634
  %v3995 = vpack.c.b16 %v3643, %v3635
  %v3996 = vpack.c.b16 %v3644, %v3636
  %v3997 = vpack.c.b16 %v3645, %v3637
  %v3998 = vpack.c.b16 %v3646, %v3638
  %v3999 = vpack.c.b16 %v3647, %v3639
  %v4000 = vpack.c.b16 %v3648, %v3640
  %v4001 = vpack.c.b16 %v3649, %v3641
  %v4002 = vpack.c.b16 %v3658, %v3650
  %v4003 = vpack.c.b16 %v3659, %v3651
  %v4004 = vpack.c.b16 %v3660, %v3652
  %v4005 = vpack.c.b16 %v3661, %v3653
  %v4006 = vpack.c.b16 %v3662, %v3654
  %v4007 = vpack.c.b16 %v3663, %v3655
  %v4008 = vpack.c.b16 %v3664, %v3656
  %v4009 = vpack.c.b16 %v3665, %v3657
  %v4010 = vpack.c.b16 %v3674, %v3666
  %v4011 = vpack.c.b16 %v3675, %v3667
  %v4012 = vpack.c.b16 %v3676, %v3668
  %v4013 = vpack.c.b16 %v3677, %v3669
  %v4014 = vpack.c.b16 %v3678, %v3670
  %v4015 = vpack.c.b16 %v3679, %v3671
  %v4016 = vpack.c.b16 %v3680, %v3672
  %v4017 = vpack.c.b16 %v3681, %v3673
  %v4018 = vpack.c.b16 %v3690, %v3682
  %v4019 = vpack.c.b16 %v3691, %v3683
  %v4020 = vpack.c.b16 %v3692, %v3684
  %v4021 = vpack.c.b16 %v3693, %v3685
  %v4022 = vpack.c.b16 %v3694, %v3686
  %v4023 = vpack.c.b16 %v3695, %v3687
  %v4024 = vpack.c.b16 %v3696, %v3688
  %v4025 = vpack.c.b16 %v3697, %v3689
  %v4026 = vpack.c.b16 %v3706, %v3698
  %v4027 = vpack.c.b16 %v3707, %v3699
  %v4028 = vpack.c.b16 %v3708, %v3700
  %v4029 = vpack.c.b16 %v3709, %v3701
  %v4030 = vpack.c.b16 %v3710, %v3702
  %v4031 = vpack.c.b16 %v3711, %v3703
  %v4032 = vpack.c.b16 %v3712, %v3704
  %v4033 = vpack.c.b16 %v3713, %v3705
  %v4034 = vpack.c.b16 %v3722, %v3714
  %v4035 = vpack.c.b16 %v3723, %v3715
  %v4036 = vpack.c.b16 %v3724, %v3716
  %v4037 = vpack.c.b16 %v3725, %v3717
  %v4038 = vpack.c.b16 %v3726, %v3718
  %v4039 = vpack.c.b16 %v3727, %v3719
  %v4040 = vpack.c.b16 %v3728, %v3720
  %v4041 = vpack.c.b16 %v3729, %v3721
  %v4042 = vpack.c.b16 %v3738, %v3730
  %v4043 = vpack.c.b16 %v3739, %v3731
  %v4044 = vpack.c.b16 %v3740, %v3732
  %v4045 = vpack.c.b16 %v3741, %v3733
  %v4046 = vpack.c.b16 %v3742, %v3734
  %v4047 = vpack.c.b16 %v3743, %v3735
  %v4048 = vpack.c.b16 %v3744, %v3736
  %v4049 = vpack.c.b16 %v3745, %v3737
  %v4050 = vpack.c.b16 %v3754, %v3746
  %v4051 = vpack.c.b16 %v3755, %v3747
  %v4052 = vpack.c.b16 %v3756, %v3748
  %v4053 = vpack.c.b16 %v3757, %v3749
  %v4054 = vpack.c.b16 %v3758, %v3750
  %v4055 = vpack.c.b16 %v3759, %v3751
  %v4056 = vpack.c.b16 %v3760, %v3752
  %v4057 = vpack.c.b16 %v3761, %v3753
  %v4058 = vpack.c.b16 %v3770, %v3762
  %v4059 = vpack.c.b16 %v3771, %v3763
  %v4060 = vpack.c.b16 %v3772, %v3764
  %v4061 = vpack.c.b16 %v3773, %v3765
  %v4062 = vpack.c.b16 %v3774, %v3766
  %v4063 = vpack.c.b16 %v3775, %v3767
  %v4064 = vpack.c.b16 %v3776, %v3768
  %v4065 = vpack.c.b16 %v3777, %v3769
  %v4066 = vpack.c.b16 %v3786, %v3778
  %v4067 = vpack.c.b16 %v3787, %v3779
  %v4068 = vpack.c.b16 %v3788, %v3780
  %v4069 = vpack.c.b16 %v3789, %v3781
  %v4070 = vpack.c.b16 %v3790, %v3782
  %v4071 = vpack.c.b16 %v3791, %v3783
  %v4072 = vpack.c.b16 %v3792, %v3784
  %v4073 = vpack.c.b16 %v3793, %v3785
  %v4074 = vpack.c.b16 %v3802, %v3794
  %v4075 = vpack.c.b16 %v3803, %v3795
  %v4076 = vpack.c.b16 %v3804, %v3796
  %v4077 = vpack.c.b16 %v3805, %v3797
  %v4078 = vpack.c.b16 %v3806, %v3798
  %v4079 = vpack.c.b16 %v3807, %v3799
  %v4080 = vpack.c.b16 %v3808, %v3800
  %v4081 = vpack.c.b16 %v3809, %v3801
  %v4082 = vpack.c.b16 %v3818, %v3810
  %v4083 = vpack.c.b16 %v3819, %v3811
  %v4084 = vpack.c.b16 %v3820, %v3812
  %v4085 = vpack.c.b16 %v3821, %v3813
  %v4086 = vpack.c.b16 %v3822, %v3814
  %v4087 = vpack.c.b16 %v3823, %v3815
  %v4088 = vpack.c.b16 %v3824, %v3816
  %v4089 = vpack.c.b16 %v3825, %v3817
  %v4090 = vpack.c.b16 %v3834, %v3826
  %v4091 = vpack.c.b16 %v3835, %v3827
  %v4092 = vpack.c.b16 %v3836, %v3828
  %v4093 = vpack.c.b16 %v3837, %v3829
  %v4094 = vpack.c.b16 %v3838, %v3830
  %v4095 = vpack.c.b16 %v3839, %v3831
  %v4096 = vpack.c.b16 %v3840, %v3832
  %v4097 = vpack.c.b16 %v3841, %v3833
  %4354 = vmatpush.bf16.msra.mxu0 %v3898
  %4355 = vmatpush.bf16.msra.mxu0 %v3890
  %4356 = vmatpush.bf16.msra.mxu0 %v3882
  %4357 = vmatpush.bf16.msra.mxu0 %v3874
  %4358 = vmatpush.bf16.msra.mxu0 %v3866
  %4359 = vmatpush.bf16.msra.mxu0 %v3858
  %4360 = vmatpush.bf16.msra.mxu0 %v3850
  %4361 = vmatpush.bf16.msra.mxu0 %v3842
  %4362 = vmatmul.bf16.gmra.mxu0 %v2796
  %v4363 = vpop.f32.mrf.mxu0
  %v4364 = vadd.f32 %v3058, %v4363
  %v4365 = vpop.f32.mrf.mxu0
  %4366 = vdwg.mxu0
  %4367 = vmatpush.bf16.msra.mxu0 %v3962
  %4368 = vmatpush.bf16.msra.mxu0 %v3954
  %4369 = vmatpush.bf16.msra.mxu0 %v3946
  %4370 = vmatpush.bf16.msra.mxu0 %v3938
  %4371 = vmatpush.bf16.msra.mxu0 %v3930
  %4372 = vmatpush.bf16.msra.mxu0 %v3922
  %4373 = vmatpush.bf16.msra.mxu0 %v3914
  %4374 = vmatpush.bf16.msra.mxu0 %v3906
  %4375 = vmatmul.bf16.gmra.mxu0 %v2797
  %v4376 = vpop.f32.mrf.mxu0
  %v4377 = vadd.f32 %v4364, %v4376
  %v4378 = vpop.f32.mrf.mxu0
  %4379 = vdwg.mxu0
  %4380 = vmatpush.bf16.msra.mxu0 %v4026
  %4381 = vmatpush.bf16.msra.mxu0 %v4018
  %4382 = vmatpush.bf16.msra.mxu0 %v4010
  %4383 = vmatpush.bf16.msra.mxu0 %v4002
  %4384 = vmatpush.bf16.msra.mxu0 %v3994
  %4385 = vmatpush.bf16.msra.mxu0 %v3986
  %4386 = vmatpush.bf16.msra.mxu0 %v3978
  %4387 = vmatpush.bf16.msra.mxu0 %v3970
  %4388 = vmatmul.bf16.gmra.mxu0 %v2798
  %v4389 = vpop.f32.mrf.mxu0
  %v4390 = vadd.f32 %v4377, %v4389
  %v4391 = vpop.f32.mrf.mxu0
  %4392 = vdwg.mxu0
  %4393 = vmatpush.bf16.msra.mxu0 %v4090
  %4394 = vmatpush.bf16.msra.mxu0 %v4082
  %4395 = vmatpush.bf16.msra.mxu0 %v4074
  %4396 = vmatpush.bf16.msra.mxu0 %v4066
  %4397 = vmatpush.bf16.msra.mxu0 %v4058
  %4398 = vmatpush.bf16.msra.mxu0 %v4050
  %4399 = vmatpush.bf16.msra.mxu0 %v4042
  %4400 = vmatpush.bf16.msra.mxu0 %v4034
  %4401 = vmatmul.bf16.gmra.mxu0 %v2799
  %v4402 = vpop.f32.mrf.mxu0
  %v4403 = vadd.f32 %v4390, %v4402
  %v4404 = vpop.f32.mrf.mxu0
  %4405 = vdwg.mxu0
  %4406 = vmatpush.bf16.msra.mxu0 %v3899
  %4407 = vmatpush.bf16.msra.mxu0 %v3891
  %4408 = vmatpush.bf16.msra.mxu0 %v3883
  %4409 = vmatpush.bf16.msra.mxu0 %v3875
  %4410 = vmatpush.bf16.msra.mxu0 %v3867
  %4411 = vmatpush.bf16.msra.mxu0 %v3859
  %4412 = vmatpush.bf16.msra.mxu0 %v3851
  %4413 = vmatpush.bf16.msra.mxu0 %v3843
  %4414 = vmatmul.bf16.gmra.mxu0 %v2796
  %v4415 = vpop.f32.mrf.mxu0
  %v4416 = vadd.f32 %v3059, %v4415
  %v4417 = vpop.f32.mrf.mxu0
  %4418 = vdwg.mxu0
  %4419 = vmatpush.bf16.msra.mxu0 %v3963
  %4420 = vmatpush.bf16.msra.mxu0 %v3955
  %4421 = vmatpush.bf16.msra.mxu0 %v3947
  %4422 = vmatpush.bf16.msra.mxu0 %v3939
  %4423 = vmatpush.bf16.msra.mxu0 %v3931
  %4424 = vmatpush.bf16.msra.mxu0 %v3923
  %4425 = vmatpush.bf16.msra.mxu0 %v3915
  %4426 = vmatpush.bf16.msra.mxu0 %v3907
  %4427 = vmatmul.bf16.gmra.mxu0 %v2797
  %v4428 = vpop.f32.mrf.mxu0
  %v4429 = vadd.f32 %v4416, %v4428
  %v4430 = vpop.f32.mrf.mxu0
  %4431 = vdwg.mxu0
  %4432 = vmatpush.bf16.msra.mxu0 %v4027
  %4433 = vmatpush.bf16.msra.mxu0 %v4019
  %4434 = vmatpush.bf16.msra.mxu0 %v4011
  %4435 = vmatpush.bf16.msra.mxu0 %v4003
  %4436 = vmatpush.bf16.msra.mxu0 %v3995
  %4437 = vmatpush.bf16.msra.mxu0 %v3987
  %4438 = vmatpush.bf16.msra.mxu0 %v3979
  %4439 = vmatpush.bf16.msra.mxu0 %v3971
  %4440 = vmatmul.bf16.gmra.mxu0 %v2798
  %v4441 = vpop.f32.mrf.mxu0
  %v4442 = vadd.f32 %v4429, %v4441
  %v4443 = vpop.f32.mrf.mxu0
  %4444 = vdwg.mxu0
  %4445 = vmatpush.bf16.msra.mxu0 %v4091
  %4446 = vmatpush.bf16.msra.mxu0 %v4083
  %4447 = vmatpush.bf16.msra.mxu0 %v4075
  %4448 = vmatpush.bf16.msra.mxu0 %v4067
  %4449 = vmatpush.bf16.msra.mxu0 %v4059
  %4450 = vmatpush.bf16.msra.mxu0 %v4051
  %4451 = vmatpush.bf16.msra.mxu0 %v4043
  %4452 = vmatpush.bf16.msra.mxu0 %v4035
  %4453 = vmatmul.bf16.gmra.mxu0 %v2799
  %v4454 = vpop.f32.mrf.mxu0
  %v4455 = vadd.f32 %v4442, %v4454
  %v4456 = vpop.f32.mrf.mxu0
  %4457 = vdwg.mxu0
  %4458 = vmatpush.bf16.msra.mxu0 %v3900
  %4459 = vmatpush.bf16.msra.mxu0 %v3892
  %4460 = vmatpush.bf16.msra.mxu0 %v3884
  %4461 = vmatpush.bf16.msra.mxu0 %v3876
  %4462 = vmatpush.bf16.msra.mxu0 %v3868
  %4463 = vmatpush.bf16.msra.mxu0 %v3860
  %4464 = vmatpush.bf16.msra.mxu0 %v3852
  %4465 = vmatpush.bf16.msra.mxu0 %v3844
  %4466 = vmatmul.bf16.gmra.mxu0 %v2796
  %v4467 = vpop.f32.mrf.mxu0
  %v4468 = vadd.f32 %v3060, %v4467
  %v4469 = vpop.f32.mrf.mxu0
  %4470 = vdwg.mxu0
  %4471 = vmatpush.bf16.msra.mxu0 %v3964
  %4472 = vmatpush.bf16.msra.mxu0 %v3956
  %4473 = vmatpush.bf16.msra.mxu0 %v3948
  %4474 = vmatpush.bf16.msra.mxu0 %v3940
  %4475 = vmatpush.bf16.msra.mxu0 %v3932
  %4476 = vmatpush.bf16.msra.mxu0 %v3924
  %4477 = vmatpush.bf16.msra.mxu0 %v3916
  %4478 = vmatpush.bf16.msra.mxu0 %v3908
  %4479 = vmatmul.bf16.gmra.mxu0 %v2797
  %v4480 = vpop.f32.mrf.mxu0
  %v4481 = vadd.f32 %v4468, %v4480
  %v4482 = vpop.f32.mrf.mxu0
  %4483 = vdwg.mxu0
  %4484 = vmatpush.bf16.msra.mxu0 %v4028
  %4485 = vmatpush.bf16.msra.mxu0 %v4020
  %4486 = vmatpush.bf16.msra.mxu0 %v4012
  %4487 = vmatpush.bf16.msra.mxu0 %v4004
  %4488 = vmatpush.bf16.msra.mxu0 %v3996
  %4489 = vmatpush.bf16.msra.mxu0 %v3988
  %4490 = vmatpush.bf16.msra.mxu0 %v3980
  %4491 = vmatpush.bf16.msra.mxu0 %v3972
  %4492 = vmatmul.bf16.gmra.mxu0 %v2798
  %v4493 = vpop.f32.mrf.mxu0
  %v4494 = vadd.f32 %v4481, %v4493
  %v4495 = vpop.f32.mrf.mxu0
  %4496 = vdwg.mxu0
  %4497 = vmatpush.bf16.msra.mxu0 %v4092
  %4498 = vmatpush.bf16.msra.mxu0 %v4084
  %4499 = vmatpush.bf16.msra.mxu0 %v4076
  %4500 = vmatpush.bf16.msra.mxu0 %v4068
  %4501 = vmatpush.bf16.msra.mxu0 %v4060
  %4502 = vmatpush.bf16.msra.mxu0 %v4052
  %4503 = vmatpush.bf16.msra.mxu0 %v4044
  %4504 = vmatpush.bf16.msra.mxu0 %v4036
  %4505 = vmatmul.bf16.gmra.mxu0 %v2799
  %v4506 = vpop.f32.mrf.mxu0
  %v4507 = vadd.f32 %v4494, %v4506
  %v4508 = vpop.f32.mrf.mxu0
  %4509 = vdwg.mxu0
  %4510 = vmatpush.bf16.msra.mxu0 %v3901
  %4511 = vmatpush.bf16.msra.mxu0 %v3893
  %4512 = vmatpush.bf16.msra.mxu0 %v3885
  %4513 = vmatpush.bf16.msra.mxu0 %v3877
  %4514 = vmatpush.bf16.msra.mxu0 %v3869
  %4515 = vmatpush.bf16.msra.mxu0 %v3861
  %4516 = vmatpush.bf16.msra.mxu0 %v3853
  %4517 = vmatpush.bf16.msra.mxu0 %v3845
  %4518 = vmatmul.bf16.gmra.mxu0 %v2796
  %v4519 = vpop.f32.mrf.mxu0
  %v4520 = vadd.f32 %v3061, %v4519
  %v4521 = vpop.f32.mrf.mxu0
  %4522 = vdwg.mxu0
  %4523 = vmatpush.bf16.msra.mxu0 %v3965
  %4524 = vmatpush.bf16.msra.mxu0 %v3957
  %4525 = vmatpush.bf16.msra.mxu0 %v3949
  %4526 = vmatpush.bf16.msra.mxu0 %v3941
  %4527 = vmatpush.bf16.msra.mxu0 %v3933
  %4528 = vmatpush.bf16.msra.mxu0 %v3925
  %4529 = vmatpush.bf16.msra.mxu0 %v3917
  %4530 = vmatpush.bf16.msra.mxu0 %v3909
  %4531 = vmatmul.bf16.gmra.mxu0 %v2797
  %v4532 = vpop.f32.mrf.mxu0
  %v4533 = vadd.f32 %v4520, %v4532
  %v4534 = vpop.f32.mrf.mxu0
  %4535 = vdwg.mxu0
  %4536 = vmatpush.bf16.msra.mxu0 %v4029
  %4537 = vmatpush.bf16.msra.mxu0 %v4021
  %4538 = vmatpush.bf16.msra.mxu0 %v4013
  %4539 = vmatpush.bf16.msra.mxu0 %v4005
  %4540 = vmatpush.bf16.msra.mxu0 %v3997
  %4541 = vmatpush.bf16.msra.mxu0 %v3989
  %4542 = vmatpush.bf16.msra.mxu0 %v3981
  %4543 = vmatpush.bf16.msra.mxu0 %v3973
  %4544 = vmatmul.bf16.gmra.mxu0 %v2798
  %v4545 = vpop.f32.mrf.mxu0
  %v4546 = vadd.f32 %v4533, %v4545
  %v4547 = vpop.f32.mrf.mxu0
  %4548 = vdwg.mxu0
  %4549 = vmatpush.bf16.msra.mxu0 %v4093
  %4550 = vmatpush.bf16.msra.mxu0 %v4085
  %4551 = vmatpush.bf16.msra.mxu0 %v4077
  %4552 = vmatpush.bf16.msra.mxu0 %v4069
  %4553 = vmatpush.bf16.msra.mxu0 %v4061
  %4554 = vmatpush.bf16.msra.mxu0 %v4053
  %4555 = vmatpush.bf16.msra.mxu0 %v4045
  %4556 = vmatpush.bf16.msra.mxu0 %v4037
  %4557 = vmatmul.bf16.gmra.mxu0 %v2799
  %v4558 = vpop.f32.mrf.mxu0
  %v4559 = vadd.f32 %v4546, %v4558
  %v4560 = vpop.f32.mrf.mxu0
  %4561 = vdwg.mxu0
  %4562 = vmatpush.bf16.msra.mxu0 %v3902
  %4563 = vmatpush.bf16.msra.mxu0 %v3894
  %4564 = vmatpush.bf16.msra.mxu0 %v3886
  %4565 = vmatpush.bf16.msra.mxu0 %v3878
  %4566 = vmatpush.bf16.msra.mxu0 %v3870
  %4567 = vmatpush.bf16.msra.mxu0 %v3862
  %4568 = vmatpush.bf16.msra.mxu0 %v3854
  %4569 = vmatpush.bf16.msra.mxu0 %v3846
  %4570 = vmatmul.bf16.gmra.mxu0 %v2796
  %v4571 = vpop.f32.mrf.mxu0
  %v4572 = vadd.f32 %v3062, %v4571
  %v4573 = vpop.f32.mrf.mxu0
  %4574 = vdwg.mxu0
  %4575 = vmatpush.bf16.msra.mxu0 %v3966
  %4576 = vmatpush.bf16.msra.mxu0 %v3958
  %4577 = vmatpush.bf16.msra.mxu0 %v3950
  %4578 = vmatpush.bf16.msra.mxu0 %v3942
  %4579 = vmatpush.bf16.msra.mxu0 %v3934
  %4580 = vmatpush.bf16.msra.mxu0 %v3926
  %4581 = vmatpush.bf16.msra.mxu0 %v3918
  %4582 = vmatpush.bf16.msra.mxu0 %v3910
  %4583 = vmatmul.bf16.gmra.mxu0 %v2797
  %v4584 = vpop.f32.mrf.mxu0
  %v4585 = vadd.f32 %v4572, %v4584
  %v4586 = vpop.f32.mrf.mxu0
  %4587 = vdwg.mxu0
  %4588 = vmatpush.bf16.msra.mxu0 %v4030
  %4589 = vmatpush.bf16.msra.mxu0 %v4022
  %4590 = vmatpush.bf16.msra.mxu0 %v4014
  %4591 = vmatpush.bf16.msra.mxu0 %v4006
  %4592 = vmatpush.bf16.msra.mxu0 %v3998
  %4593 = vmatpush.bf16.msra.mxu0 %v3990
  %4594 = vmatpush.bf16.msra.mxu0 %v3982
  %4595 = vmatpush.bf16.msra.mxu0 %v3974
  %4596 = vmatmul.bf16.gmra.mxu0 %v2798
  %v4597 = vpop.f32.mrf.mxu0
  %v4598 = vadd.f32 %v4585, %v4597
  %v4599 = vpop.f32.mrf.mxu0
  %4600 = vdwg.mxu0
  %4601 = vmatpush.bf16.msra.mxu0 %v4094
  %4602 = vmatpush.bf16.msra.mxu0 %v4086
  %4603 = vmatpush.bf16.msra.mxu0 %v4078
  %4604 = vmatpush.bf16.msra.mxu0 %v4070
  %4605 = vmatpush.bf16.msra.mxu0 %v4062
  %4606 = vmatpush.bf16.msra.mxu0 %v4054
  %4607 = vmatpush.bf16.msra.mxu0 %v4046
  %4608 = vmatpush.bf16.msra.mxu0 %v4038
  %4609 = vmatmul.bf16.gmra.mxu0 %v2799
  %v4610 = vpop.f32.mrf.mxu0
  %v4611 = vadd.f32 %v4598, %v4610
  %v4612 = vpop.f32.mrf.mxu0
  %4613 = vdwg.mxu0
  %4614 = vmatpush.bf16.msra.mxu0 %v3903
  %4615 = vmatpush.bf16.msra.mxu0 %v3895
  %4616 = vmatpush.bf16.msra.mxu0 %v3887
  %4617 = vmatpush.bf16.msra.mxu0 %v3879
  %4618 = vmatpush.bf16.msra.mxu0 %v3871
  %4619 = vmatpush.bf16.msra.mxu0 %v3863
  %4620 = vmatpush.bf16.msra.mxu0 %v3855
  %4621 = vmatpush.bf16.msra.mxu0 %v3847
  %4622 = vmatmul.bf16.gmra.mxu0 %v2796
  %v4623 = vpop.f32.mrf.mxu0
  %v4624 = vadd.f32 %v3063, %v4623
  %v4625 = vpop.f32.mrf.mxu0
  %4626 = vdwg.mxu0
  %4627 = vmatpush.bf16.msra.mxu0 %v3967
  %4628 = vmatpush.bf16.msra.mxu0 %v3959
  %4629 = vmatpush.bf16.msra.mxu0 %v3951
  %4630 = vmatpush.bf16.msra.mxu0 %v3943
  %4631 = vmatpush.bf16.msra.mxu0 %v3935
  %4632 = vmatpush.bf16.msra.mxu0 %v3927
  %4633 = vmatpush.bf16.msra.mxu0 %v3919
  %4634 = vmatpush.bf16.msra.mxu0 %v3911
  %4635 = vmatmul.bf16.gmra.mxu0 %v2797
  %v4636 = vpop.f32.mrf.mxu0
  %v4637 = vadd.f32 %v4624, %v4636
  %v4638 = vpop.f32.mrf.mxu0
  %4639 = vdwg.mxu0
  %4640 = vmatpush.bf16.msra.mxu0 %v4031
  %4641 = vmatpush.bf16.msra.mxu0 %v4023
  %4642 = vmatpush.bf16.msra.mxu0 %v4015
  %4643 = vmatpush.bf16.msra.mxu0 %v4007
  %4644 = vmatpush.bf16.msra.mxu0 %v3999
  %4645 = vmatpush.bf16.msra.mxu0 %v3991
  %4646 = vmatpush.bf16.msra.mxu0 %v3983
  %4647 = vmatpush.bf16.msra.mxu0 %v3975
  %4648 = vmatmul.bf16.gmra.mxu0 %v2798
  %v4649 = vpop.f32.mrf.mxu0
  %v4650 = vadd.f32 %v4637, %v4649
  %v4651 = vpop.f32.mrf.mxu0
  %4652 = vdwg.mxu0
  %4653 = vmatpush.bf16.msra.mxu0 %v4095
  %4654 = vmatpush.bf16.msra.mxu0 %v4087
  %4655 = vmatpush.bf16.msra.mxu0 %v4079
  %4656 = vmatpush.bf16.msra.mxu0 %v4071
  %4657 = vmatpush.bf16.msra.mxu0 %v4063
  %4658 = vmatpush.bf16.msra.mxu0 %v4055
  %4659 = vmatpush.bf16.msra.mxu0 %v4047
  %4660 = vmatpush.bf16.msra.mxu0 %v4039
  %4661 = vmatmul.bf16.gmra.mxu0 %v2799
  %v4662 = vpop.f32.mrf.mxu0
  %v4663 = vadd.f32 %v4650, %v4662
  %v4664 = vpop.f32.mrf.mxu0
  %4665 = vdwg.mxu0
  %4666 = vmatpush.bf16.msra.mxu0 %v3904
  %4667 = vmatpush.bf16.msra.mxu0 %v3896
  %4668 = vmatpush.bf16.msra.mxu0 %v3888
  %4669 = vmatpush.bf16.msra.mxu0 %v3880
  %4670 = vmatpush.bf16.msra.mxu0 %v3872
  %4671 = vmatpush.bf16.msra.mxu0 %v3864
  %4672 = vmatpush.bf16.msra.mxu0 %v3856
  %4673 = vmatpush.bf16.msra.mxu0 %v3848
  %4674 = vmatmul.bf16.gmra.mxu0 %v2796
  %v4675 = vpop.f32.mrf.mxu0
  %v4676 = vadd.f32 %v3064, %v4675
  %v4677 = vpop.f32.mrf.mxu0
  %4678 = vdwg.mxu0
  %4679 = vmatpush.bf16.msra.mxu0 %v3968
  %4680 = vmatpush.bf16.msra.mxu0 %v3960
  %4681 = vmatpush.bf16.msra.mxu0 %v3952
  %4682 = vmatpush.bf16.msra.mxu0 %v3944
  %4683 = vmatpush.bf16.msra.mxu0 %v3936
  %4684 = vmatpush.bf16.msra.mxu0 %v3928
  %4685 = vmatpush.bf16.msra.mxu0 %v3920
  %4686 = vmatpush.bf16.msra.mxu0 %v3912
  %4687 = vmatmul.bf16.gmra.mxu0 %v2797
  %v4688 = vpop.f32.mrf.mxu0
  %v4689 = vadd.f32 %v4676, %v4688
  %v4690 = vpop.f32.mrf.mxu0
  %4691 = vdwg.mxu0
  %4692 = vmatpush.bf16.msra.mxu0 %v4032
  %4693 = vmatpush.bf16.msra.mxu0 %v4024
  %4694 = vmatpush.bf16.msra.mxu0 %v4016
  %4695 = vmatpush.bf16.msra.mxu0 %v4008
  %4696 = vmatpush.bf16.msra.mxu0 %v4000
  %4697 = vmatpush.bf16.msra.mxu0 %v3992
  %4698 = vmatpush.bf16.msra.mxu0 %v3984
  %4699 = vmatpush.bf16.msra.mxu0 %v3976
  %4700 = vmatmul.bf16.gmra.mxu0 %v2798
  %v4701 = vpop.f32.mrf.mxu0
  %v4702 = vadd.f32 %v4689, %v4701
  %v4703 = vpop.f32.mrf.mxu0
  %4704 = vdwg.mxu0
  %4705 = vmatpush.bf16.msra.mxu0 %v4096
  %4706 = vmatpush.bf16.msra.mxu0 %v4088
  %4707 = vmatpush.bf16.msra.mxu0 %v4080
  %4708 = vmatpush.bf16.msra.mxu0 %v4072
  %4709 = vmatpush.bf16.msra.mxu0 %v4064
  %4710 = vmatpush.bf16.msra.mxu0 %v4056
  %4711 = vmatpush.bf16.msra.mxu0 %v4048
  %4712 = vmatpush.bf16.msra.mxu0 %v4040
  %4713 = vmatmul.bf16.gmra.mxu0 %v2799
  %v4714 = vpop.f32.mrf.mxu0
  %v4715 = vadd.f32 %v4702, %v4714
  %v4716 = vpop.f32.mrf.mxu0
  %4717 = vdwg.mxu0
  %4718 = vmatpush.bf16.msra.mxu0 %v3905
  %4719 = vmatpush.bf16.msra.mxu0 %v3897
  %4720 = vmatpush.bf16.msra.mxu0 %v3889
  %4721 = vmatpush.bf16.msra.mxu0 %v3881
  %4722 = vmatpush.bf16.msra.mxu0 %v3873
  %4723 = vmatpush.bf16.msra.mxu0 %v3865
  %4724 = vmatpush.bf16.msra.mxu0 %v3857
  %4725 = vmatpush.bf16.msra.mxu0 %v3849
  %4726 = vmatmul.bf16.gmra.mxu0 %v2796
  %v4727 = vpop.f32.mrf.mxu0
  %v4728 = vadd.f32 %v3065, %v4727
  %v4729 = vpop.f32.mrf.mxu0
  %4730 = vdwg.mxu0
  %4731 = vmatpush.bf16.msra.mxu0 %v3969
  %4732 = vmatpush.bf16.msra.mxu0 %v3961
  %4733 = vmatpush.bf16.msra.mxu0 %v3953
  %4734 = vmatpush.bf16.msra.mxu0 %v3945
  %4735 = vmatpush.bf16.msra.mxu0 %v3937
  %4736 = vmatpush.bf16.msra.mxu0 %v3929
  %4737 = vmatpush.bf16.msra.mxu0 %v3921
  %4738 = vmatpush.bf16.msra.mxu0 %v3913
  %4739 = vmatmul.bf16.gmra.mxu0 %v2797
  %v4740 = vpop.f32.mrf.mxu0
  %v4741 = vadd.f32 %v4728, %v4740
  %v4742 = vpop.f32.mrf.mxu0
  %4743 = vdwg.mxu0
  %4744 = vmatpush.bf16.msra.mxu0 %v4033
  %4745 = vmatpush.bf16.msra.mxu0 %v4025
  %4746 = vmatpush.bf16.msra.mxu0 %v4017
  %4747 = vmatpush.bf16.msra.mxu0 %v4009
  %4748 = vmatpush.bf16.msra.mxu0 %v4001
  %4749 = vmatpush.bf16.msra.mxu0 %v3993
  %4750 = vmatpush.bf16.msra.mxu0 %v3985
  %4751 = vmatpush.bf16.msra.mxu0 %v3977
  %4752 = vmatmul.bf16.gmra.mxu0 %v2798
  %v4753 = vpop.f32.mrf.mxu0
  %v4754 = vadd.f32 %v4741, %v4753
  %v4755 = vpop.f32.mrf.mxu0
  %4756 = vdwg.mxu0
  %4757 = vmatpush.bf16.msra.mxu0 %v4097
  %4758 = vmatpush.bf16.msra.mxu0 %v4089
  %4759 = vmatpush.bf16.msra.mxu0 %v4081
  %4760 = vmatpush.bf16.msra.mxu0 %v4073
  %4761 = vmatpush.bf16.msra.mxu0 %v4065
  %4762 = vmatpush.bf16.msra.mxu0 %v4057
  %4763 = vmatpush.bf16.msra.mxu0 %v4049
  %4764 = vmatpush.bf16.msra.mxu0 %v4041
  %4765 = vmatmul.bf16.gmra.mxu0 %v2799
  %v4766 = vpop.f32.mrf.mxu0
  %v4767 = vadd.f32 %v4754, %v4766
  %v4768 = vpop.f32.mrf.mxu0
  %4769 = vdwg.mxu0
  %v4770 = vsub.f32 0.0, %v4403
  %v4771 = vsub.f32 0.0, %v4455
  %v4772 = vsub.f32 0.0, %v4507
  %v4773 = vsub.f32 0.0, %v4559
  %v4774 = vsub.f32 0.0, %v4611
  %v4775 = vsub.f32 0.0, %v4663
  %v4776 = vsub.f32 0.0, %v4715
  %v4777 = vsub.f32 0.0, %v4767
  %v4778 = vmul.f32 %v4770, 1.442695
  %v4779 = vpow.pop %v4778
  %v4780 = vmul.f32 %v4771, 1.442695
  %v4781 = vpow.pop %v4780
  %v4782 = vmul.f32 %v4772, 1.442695
  %v4783 = vpow.pop %v4782
  %v4784 = vmul.f32 %v4773, 1.442695
  %v4785 = vpow.pop %v4784
  %v4786 = vmul.f32 %v4774, 1.442695
  %v4787 = vpow.pop %v4786
  %v4788 = vmul.f32 %v4775, 1.442695
  %v4789 = vpow.pop %v4788
  %v4790 = vmul.f32 %v4776, 1.442695
  %v4791 = vpow.pop %v4790
  %v4792 = vmul.f32 %v4777, 1.442695
  %v4793 = vpow.pop %v4792
  %v4794 = vadd.f32 %v4779, 1.0
  %v4795 = vadd.f32 %v4781, 1.0
  %v4796 = vadd.f32 %v4783, 1.0
  %v4797 = vadd.f32 %v4785, 1.0
  %v4798 = vadd.f32 %v4787, 1.0
  %v4799 = vadd.f32 %v4789, 1.0
  %v4800 = vadd.f32 %v4791, 1.0
  %v4801 = vadd.f32 %v4793, 1.0
  %v4802 = vrcp.pop %v4794
  %v4803 = vrcp.pop %v4795
  %v4804 = vrcp.pop %v4796
  %v4805 = vrcp.pop %v4797
  %v4806 = vrcp.pop %v4798
  %v4807 = vrcp.pop %v4799
  %v4808 = vrcp.pop %v4800
  %v4809 = vrcp.pop %v4801
  %4810 = vst [vmem:[%s10] sm:$0xff] %v4802
  %4811 = vst [vmem:[%s10 + $0x8] sm:$0xff] %v4803
  %4812 = vst [vmem:[%s10 + $0x10] sm:$0xff] %v4804
  %4813 = vst [vmem:[%s10 + $0x18] sm:$0xff] %v4805
  %4814 = vst [vmem:[%s10 + $0x20] sm:$0xff] %v4806
  %4815 = vst [vmem:[%s10 + $0x28] sm:$0xff] %v4807
  %4816 = vst [vmem:[%s10 + $0x30] sm:$0xff] %v4808
  %4817 = vst [vmem:[%s10 + $0x38] sm:$0xff] %v4809
  // Predicated region
  $region42: #{vae_forward.1} parent=0 // pred_check
    _
  $region43: #{vae_forward.1} parent=0 // pred_check_branch
    %4819 = sbr.rel (0) target = $region45
  $region44: #{vae_forward.1} parent=0 // pred_region
    _
  $region45: #{vae_forward.1} parent=0 // pred_fallthru
    _
  // Predicated region
  $region46: #{vae_forward.1} parent=0 // pred_check
    _
  $region47: #{vae_forward.1} parent=0 // pred_check_branch
    %4821 = sbr.rel (0) target = $region49
  $region48: #{vae_forward.1} parent=0 // pred_region
    _
  $region49: #{vae_forward.1} parent=0 // pred_fallthru
    _

</llo_original>
